<compile_context>
chip_gen: v5e
topology: v5e:2x2
jax: 0.10.0
libtpu: 0.0.40
codegen_flags: <defaults>
</compile_context>

<pallas_src>
import functools
import math

import jax
import jax.numpy as jnp
import numpy as np
from jax.experimental import pallas as pl
from jax.experimental.pallas import tpu as pltpu

F32 = jnp.float32
BF16 = jnp.bfloat16


# ----------------------------------------------------------------------------
# Fused kernel: intra attn -> importance/aggregate -> inter attn -> expand ->
#               spatial proj -> temporal attn -> final proj   (BB batches/step)
# ----------------------------------------------------------------------------
def _fused_kernel(heads, cluster_size,
                  x_ref, hist_ref,
                  intra_w_ref, intra_b_ref,
                  inter_w_ref, inter_b_ref,
                  tatt_w_ref, tatt_qb_ref, tatt_kvb_ref, tatt_ob_ref,
                  imp_w1_ref, imp_b1_ref, imp_w2_ref, imp_b2_ref,
                  clemb_ref,
                  sp_w1_ref, sp_vec_ref, sp_w2_ref,
                  out_w_ref, out_b_ref,
                  out_ref, intra_wout_ref, inter_wout_ref, temp_wout_ref):
    bb, n, e = x_ref.shape
    hl = hist_ref.shape[2]
    cs = cluster_size
    c = n // cs
    dh = e // heads
    bn = bb * n

    def mm(a, w):
        # bf16 MXU operands, f32 accumulation (weights already stored bf16)
        return jnp.dot(a.astype(BF16), w, preferred_element_type=F32)

    def softmax_lastdim(s):
        # scores stay f32; denominator reciprocal goes to the (otherwise idle) EUP
        s = s - jnp.max(s, axis=-1, keepdims=True)
        p = jnp.exp(s)
        return p * pl.reciprocal(jnp.sum(p, axis=-1, keepdims=True), approx=True)

    def mha_batched(seq2, w_ref, b_ref, batch, length):
        """Self-attention within `batch` independent groups of `length` rows.
        seq2: (batch*length, E).  Returns (out (batch*length, E) f32,
        head-averaged probabilities (batch, length, length) f32)."""
        q = mm(seq2, w_ref[0]) + b_ref[0:1, :]       # 1/sqrt(dh) pre-folded into row 0
        k = mm(seq2, w_ref[1]) + b_ref[1:2, :]
        v = mm(seq2, w_ref[2]) + b_ref[2:3, :]
        q3 = q.reshape(batch, length, e)
        k3 = k.reshape(batch, length, e)
        v3 = v.reshape(batch, length, e)
        o_heads = []
        psum = jnp.zeros((batch, length, length), F32)
        for h in range(heads):                       # tiny unrolled head loop
            lo = h * dh
            s = jnp.einsum('bqd,bkd->bqk',
                           q3[..., lo:lo + dh].astype(BF16),
                           k3[..., lo:lo + dh].astype(BF16),
                           preferred_element_type=F32)
            p = softmax_lastdim(s)
            psum = psum + p
            o_heads.append(jnp.einsum('bqk,bkd->bqd',
                                      p.astype(BF16),
                                      v3[..., lo:lo + dh].astype(BF16),
                                      preferred_element_type=F32))
        o = jnp.concatenate(o_heads, axis=-1).reshape(batch * length, e)
        out = mm(o, w_ref[3]) + b_ref[3:4, :]        # single Wo matmul (K = E)
        return out, psum * (1.0 / heads)

    x2 = x_ref[...].reshape(bn, e)                   # projections over all BB*N rows

    # ---- intra-cluster attention, batched over (batch, cluster) --------------
    intra_out, intra_p = mha_batched(x2, intra_w_ref, intra_b_ref, bb * c, cs)
    intra_wout_ref[0] = jnp.sum(intra_p, axis=0)     # wrapper divides by B*C

    # ---- importance net + weighted-mean aggregation (segment sums) -----------
    h1 = jnp.maximum(mm(intra_out, imp_w1_ref[...]) + imp_b1_ref[...], 0.0)
    logit = jnp.sum(h1 * imp_w2_ref[...], axis=-1, keepdims=True) + imp_b2_ref[...]
    # == F.softmax(sigmoid(logit)) within each cluster (see header)
    e_imp = jnp.exp(jax.nn.sigmoid(logit))                               # (BN, 1)
    num = jnp.sum((intra_out * e_imp).reshape(bb * c, cs, e), axis=1)    # (BB*C, E)
    den = jnp.sum(e_imp.reshape(bb * c, cs, 1), axis=1)                  # (BB*C, 1)
    cluster_feat = num * pl.reciprocal(den, approx=True)

    # ---- inter-cluster attention over cluster tokens (+ pre-tiled embedding) -
    inter_in = (cluster_feat.reshape(bb, c, e) + clemb_ref[...]).reshape(bb * c, e)
    inter_out, inter_p = mha_batched(inter_in, inter_w_ref, inter_b_ref, bb, c)
    inter_wout_ref[...] = inter_p

    # ---- expand cluster outputs back to agents (broadcast, no repeat/matmul) -
    expanded = jnp.broadcast_to(inter_out.reshape(bb * c, 1, e),
                                (bb * c, cs, e)).reshape(bn, e)

    # ---- spatial projection: Linear(2E->E) split weights, ReLU, LN, Linear ---
    hsp = jnp.maximum(mm(intra_out, sp_w1_ref[0:e, :])
                      + mm(expanded, sp_w1_ref[e:2 * e, :])
                      + sp_vec_ref[0:1, :], 0.0)
    mu = jnp.mean(hsp, axis=-1, keepdims=True)
    var = jnp.mean((hsp - mu) ** 2, axis=-1, keepdims=True)
    hn = (hsp - mu) * jax.lax.rsqrt(var + 1e-5) * sp_vec_ref[1:2, :] + sp_vec_ref[2:3, :]
    spatial_out = mm(hn, sp_w2_ref[...]) + sp_vec_ref[3:4, :]

    # ---- temporal attention: each agent attends only its own H history slots -
    kv2 = hist_ref[...].reshape(bn * hl, e)
    kt = mm(kv2, tatt_w_ref[1]).reshape(bn, hl, e) + tatt_kvb_ref[0]   # tenc folded
    vt = mm(kv2, tatt_w_ref[2]).reshape(bn, hl, e) + tatt_kvb_ref[1]
    qt = mm(x2, tatt_w_ref[0]) + tatt_qb_ref[...]                      # scale folded
    o_heads = []
    tpsum = jnp.zeros((bn, hl), F32)
    for h in range(heads):
        lo = h * dh
        # M=1 query per agent -> keep the tiny dots on the VPU/XLU (MXU would idle)
        s = jnp.sum(kt[..., lo:lo + dh] * qt[:, None, lo:lo + dh], axis=-1)   # (BN,H)
        p = softmax_lastdim(s)
        tpsum = tpsum + p
        o_heads.append(jnp.sum(p[:, :, None] * vt[..., lo:lo + dh], axis=1))  # (BN,dh)
    t_out = mm(jnp.concatenate(o_heads, axis=-1), tatt_w_ref[3]) + tatt_ob_ref[...]
    temp_wout_ref[...] = (tpsum * (1.0 / heads)).reshape(bb, n, hl)

    # ---- final projection on [spatial, temporal]: split-weight dots ----------
    out2 = (mm(spatial_out, out_w_ref[0:e, :])
            + mm(t_out, out_w_ref[e:2 * e, :])
            + out_b_ref[...])
    out_ref[...] = out2.reshape(bb, n, e)


# ----------------------------------------------------------------------------
# Capability probe: single-buffering (pl.Buffered(1)) of grid-invariant inputs
# halves their VMEM footprint (important under v7x's 64 MiB at production E).
# Falls back to default double-buffered specs if this build rejects it.
# ----------------------------------------------------------------------------
@functools.lru_cache(maxsize=None)
def _single_buffering_supported() -> bool:
    try:
        def _k(a_ref, b_ref, o_ref):
            o_ref[...] = a_ref[...] + b_ref[...]
        z = np.zeros((8, 128), np.float32)
        f = pl.pallas_call(
            _k,
            out_shape=jax.ShapeDtypeStruct((8, 128), jnp.float32),
            grid=(1,),
            in_specs=[pl.BlockSpec((8, 128), lambda i: (0, 0)),
                      pl.BlockSpec((8, 128), lambda i: (0, 0),
                                   pipeline_mode=pl.Buffered(1))],
            out_specs=pl.BlockSpec((8, 128), lambda i: (0, 0)))
        jax.jit(f).lower(z, z).compile()
        return True
    except Exception:
        return False


# ----------------------------------------------------------------------------
# Parameter init (deterministic, synthetic), weights pre-laid-out:
#   stacked [Wq*scale, Wk, Wv, Wo] (bf16) / [bq*scale, bk, bv, bo] (f32) per MHA,
#   temporal encoding folded into per-slot K/V biases, cluster embedding
#   pre-tiled x4, LN params stacked, matmul weights stored bf16.
# ----------------------------------------------------------------------------
def init_params(key, e, num_heads, num_agents, cluster_size, history_len):
    heads = num_heads // 2
    dh = e // heads
    scale = 1.0 / math.sqrt(dh)
    num_clusters = (num_agents + cluster_size - 1) // cluster_size
    ks = jax.random.split(key, 16)

    def mha_raw(k):
        kk = jax.random.split(k, 8)
        g = lambda ki, shp: jax.random.normal(ki, shp, jnp.float32) * 0.1
        return (g(kk[0], (e, e)), g(kk[1], (e,)),
                g(kk[2], (e, e)), g(kk[3], (e,)),
                g(kk[4], (e, e)), g(kk[5], (e,)),
                g(kk[6], (e, e)), g(kk[7], (e,)))

    def mha_pack(wq, bq, wk, bk, wv, bv, wo, bo):
        return (jnp.stack([wq * scale, wk, wv, wo]).astype(BF16),   # (4,E,E) bf16
                jnp.stack([bq * scale, bk, bv, bo]))                # (4,E)   f32

    p = {}
    p["intra_w"], p["intra_b"] = mha_pack(*mha_raw(ks[0]))
    p["inter_w"], p["inter_b"] = mha_pack(*mha_raw(ks[1]))

    twq, tbq, twk, tbk, twv, tbv, two, tbo = mha_raw(ks[2])
    tenc = jax.random.normal(ks[12], (history_len, e), jnp.float32)
    p["tatt_w"] = jnp.stack([twq * scale, twk, twv, two]).astype(BF16)
    p["tatt_qb"] = (tbq * scale).reshape(1, e)
    # fold temporal positional encoding into per-history-slot K/V biases (f32 fold)
    p["tatt_kvb"] = jnp.stack([tenc @ twk + tbk, tenc @ twv + tbv])  # (2,H,E) f32
    p["tatt_ob"] = tbo.reshape(1, e)

    cl_emb = jax.random.normal(ks[3], (num_clusters, e // 4), jnp.float32) * 0.1
    p["cl_emb"] = jnp.tile(cl_emb, (1, 4))                           # == .repeat(1,1,4)
    p["imp_w1"] = (jax.random.normal(ks[4], (e, e // 2), jnp.float32) * 0.1).astype(BF16)
    p["imp_b1"] = (jax.random.normal(ks[5], (e // 2,), jnp.float32) * 0.1).reshape(1, -1)
    p["imp_w2"] = (jax.random.normal(ks[6], (e // 2, 1), jnp.float32) * 0.1).reshape(1, -1)
    p["imp_b2"] = (jax.random.normal(ks[7], (1,), jnp.float32) * 0.1).reshape(1, 1)
    p["sp_w1"] = (jax.random.normal(ks[8], (2 * e, e), jnp.float32) * 0.1).astype(BF16)
    b1 = jax.random.normal(ks[9], (e,), jnp.float32) * 0.1
    b2 = jax.random.normal(ks[11], (e,), jnp.float32) * 0.1
    p["sp_vec"] = jnp.stack([b1, jnp.ones((e,), jnp.float32),
                             jnp.zeros((e,), jnp.float32), b2])      # [b1,gamma,beta,b2]
    p["sp_w2"] = (jax.random.normal(ks[10], (e, e), jnp.float32) * 0.1).astype(BF16)
    p["out_w"] = (jax.random.normal(ks[13], (2 * e, e), jnp.float32) * 0.1).astype(BF16)
    p["out_b"] = (jax.random.normal(ks[14], (e,), jnp.float32) * 0.1).reshape(1, -1)
    return p


# ----------------------------------------------------------------------------
# Forward pass (mirrors TemporalHierarchicalAttention.forward with
# positions=None, cluster_assignments=None, hierarchy_level=None; inference)
# ----------------------------------------------------------------------------
def temporal_hierarchical_attention_forward(params, x, history, cluster_size,
                                            num_heads, block_batch=None):
    b, n, e = x.shape
    assert n % cluster_size == 0     # TODO(synk): ragged final cluster not handled
    c = n // cluster_size
    h_len = history.shape[1]
    heads = num_heads // 2
    assert e % heads == 0

    # Whole batch per grid step by default (amortizes per-step overhead; on v7x
    # with large B, pick block_batch = B // 2 so each TensorCore gets a step).
    bb = b if block_batch is None else block_batch
    assert b % bb == 0
    steps = b // bb

    # The reference does a raw `history.view(B*N, H, E)` on a [B, H, N, E]-
    # contiguous tensor; this raw reshape reproduces exactly that memory
    # reinterpretation (no transpose), matching the PyTorch semantics.
    hist4 = history.reshape(b, n, h_len, e)

    single_buf = _single_buffering_supported()

    def const_spec(*shape):
        zero = (0,) * len(shape)
        if single_buf:
            return pl.BlockSpec(shape, lambda bi: zero, pipeline_mode=pl.Buffered(1))
        return pl.BlockSpec(shape, lambda bi: zero)

    kernel = functools.partial(_fused_kernel, heads, cluster_size)

    out, intra_part, inter_w, temp_w = pl.pallas_call(
        kernel,
        out_shape=(jax.ShapeDtypeStruct((b, n, e), jnp.float32),
                   jax.ShapeDtypeStruct((steps, cluster_size, cluster_size), jnp.float32),
                   jax.ShapeDtypeStruct((b, c, c), jnp.float32),
                   jax.ShapeDtypeStruct((b, n, h_len), jnp.float32)),
        grid=(steps,),
        in_specs=[
            pl.BlockSpec((bb, n, e), lambda bi: (bi, 0, 0)),
            pl.BlockSpec((bb, n, h_len, e), lambda bi: (bi, 0, 0, 0)),
            const_spec(4, e, e), const_spec(4, e),            # intra MHA
            const_spec(4, e, e), const_spec(4, e),            # inter MHA
            const_spec(4, e, e), const_spec(1, e),            # temporal MHA W, q bias
            const_spec(2, h_len, e), const_spec(1, e),        # temporal K/V bias, out bias
            const_spec(e, e // 2), const_spec(1, e // 2),
            const_spec(1, e // 2), const_spec(1, 1),          # importance net
            const_spec(c, e),                                 # tiled cluster embedding
            const_spec(2 * e, e), const_spec(4, e), const_spec(e, e),  # spatial proj
            const_spec(2 * e, e), const_spec(1, e),           # final linear
        ],
        out_specs=(pl.BlockSpec((bb, n, e), lambda bi: (bi, 0, 0)),
                   pl.BlockSpec((1, cluster_size, cluster_size), lambda bi: (bi, 0, 0)),
                   pl.BlockSpec((bb, c, c), lambda bi: (bi, 0, 0)),
                   pl.BlockSpec((bb, n, h_len), lambda bi: (bi, 0, 0))),
        compiler_params=pltpu.CompilerParams(dimension_semantics=("parallel",)),
    )(x, hist4,
      params["intra_w"], params["intra_b"],
      params["inter_w"], params["inter_b"],
      params["tatt_w"], params["tatt_qb"],
      params["tatt_kvb"][:, :h_len, :], params["tatt_ob"],
      params["imp_w1"], params["imp_b1"], params["imp_w2"], params["imp_b2"],
      params["cl_emb"],
      params["sp_w1"], params["sp_vec"], params["sp_w2"],
      params["out_w"], params["out_b"])

    # == torch.cat(all B*C per-cluster weight maps, dim=0).mean(dim=0)
    intra_weights = jnp.sum(intra_part, axis=0) * (1.0 / (b * c))
    weights = {"intra_cluster": intra_weights,
               "inter_cluster": inter_w,
               "temporal": temp_w.reshape(b * n, 1, h_len)}
    return out, weights


if __name__ == "__main__":
    B, N, E = 2, 8, 32
    NUM_HEADS = 4
    CLUSTER_SIZE = 4
    HISTORY_LEN = 8

    key = jax.random.PRNGKey(0)
    k_x, k_h, k_p = jax.random.split(key, 3)
    x = jax.random.normal(k_x, (B, N, E), jnp.float32)
    history = jax.random.normal(k_h, (B, HISTORY_LEN, N, E), jnp.float32)
    params = init_params(k_p, E, NUM_HEADS, N, CLUSTER_SIZE, HISTORY_LEN)

    _single_buffering_supported()     # warm the capability probe outside jit

    fwd = jax.jit(temporal_hierarchical_attention_forward,
                  static_argnames=("cluster_size", "num_heads", "block_batch"))
    output, weights = fwd(params, x, history,
                          cluster_size=CLUSTER_SIZE, num_heads=NUM_HEADS)
    jax.block_until_ready(output)

    assert output.shape == (B, N, E)
    assert weights["intra_cluster"].shape == (CLUSTER_SIZE, CLUSTER_SIZE)
    assert weights["inter_cluster"].shape == (B, N // CLUSTER_SIZE, N // CLUSTER_SIZE)
    assert weights["temporal"].shape == (B * N, 1, HISTORY_LEN)
    print("KERNEL_OK")
</pallas_src>

<mosaic_0001>
module attributes {stable_mosaic.version = 11 : i64} {
  func.func @_fused_kernel(%arg0: i32, %arg1: memref<2x8x32xf32, #tpu.memory_space<vmem>>, %arg2: memref<2x8x8x32xf32, #tpu.memory_space<vmem>>, %arg3: memref<4x32x32xbf16, #tpu.memory_space<vmem>>, %arg4: memref<4x32xf32, #tpu.memory_space<vmem>>, %arg5: memref<4x32x32xbf16, #tpu.memory_space<vmem>>, %arg6: memref<4x32xf32, #tpu.memory_space<vmem>>, %arg7: memref<4x32x32xbf16, #tpu.memory_space<vmem>>, %arg8: memref<1x32xf32, #tpu.memory_space<vmem>>, %arg9: memref<2x8x32xf32, #tpu.memory_space<vmem>>, %arg10: memref<1x32xf32, #tpu.memory_space<vmem>>, %arg11: memref<32x16xbf16, #tpu.memory_space<vmem>>, %arg12: memref<1x16xf32, #tpu.memory_space<vmem>>, %arg13: memref<1x16xf32, #tpu.memory_space<vmem>>, %arg14: memref<1x1xf32, #tpu.memory_space<vmem>>, %arg15: memref<2x32xf32, #tpu.memory_space<vmem>>, %arg16: memref<64x32xbf16, #tpu.memory_space<vmem>>, %arg17: memref<4x32xf32, #tpu.memory_space<vmem>>, %arg18: memref<32x32xbf16, #tpu.memory_space<vmem>>, %arg19: memref<64x32xbf16, #tpu.memory_space<vmem>>, %arg20: memref<1x32xf32, #tpu.memory_space<vmem>>, %arg21: memref<2x8x32xf32, #tpu.memory_space<vmem>>, %arg22: memref<1x4x4xf32, #tpu.memory_space<vmem>>, %arg23: memref<2x2x2xf32, #tpu.memory_space<vmem>>, %arg24: memref<2x8x8xf32, #tpu.memory_space<vmem>>) attributes {dimension_semantics = [#tpu.dimension_semantics<parallel>], iteration_bounds = array<i64: 1>, scalar_prefetch = 0 : i64, scratch_operands = 0 : i64, tpu.core_type = #tpu.core_type<tc>, window_params = [{transform_indices = @transform_0, window_bounds = array<i64: 2, 8, 32>}, {transform_indices = @transform_1, window_bounds = array<i64: 2, 8, 8, 32>}, {pipeline_mode = #tpu.pipeline_mode<synchronous>, transform_indices = @transform_2, window_bounds = array<i64: 4, 32, 32>}, {pipeline_mode = #tpu.pipeline_mode<synchronous>, transform_indices = @transform_3, window_bounds = array<i64: 4, 32>}, {pipeline_mode = #tpu.pipeline_mode<synchronous>, transform_indices = @transform_4, window_bounds = array<i64: 4, 32, 32>}, {pipeline_mode = #tpu.pipeline_mode<synchronous>, transform_indices = @transform_5, window_bounds = array<i64: 4, 32>}, {pipeline_mode = #tpu.pipeline_mode<synchronous>, transform_indices = @transform_6, window_bounds = array<i64: 4, 32, 32>}, {pipeline_mode = #tpu.pipeline_mode<synchronous>, transform_indices = @transform_7, window_bounds = array<i64: 1, 32>}, {pipeline_mode = #tpu.pipeline_mode<synchronous>, transform_indices = @transform_8, window_bounds = array<i64: 2, 8, 32>}, {pipeline_mode = #tpu.pipeline_mode<synchronous>, transform_indices = @transform_9, window_bounds = array<i64: 1, 32>}, {pipeline_mode = #tpu.pipeline_mode<synchronous>, transform_indices = @transform_10, window_bounds = array<i64: 32, 16>}, {pipeline_mode = #tpu.pipeline_mode<synchronous>, transform_indices = @transform_11, window_bounds = array<i64: 1, 16>}, {pipeline_mode = #tpu.pipeline_mode<synchronous>, transform_indices = @transform_12, window_bounds = array<i64: 1, 16>}, {pipeline_mode = #tpu.pipeline_mode<synchronous>, transform_indices = @transform_13, window_bounds = array<i64: 1, 1>}, {pipeline_mode = #tpu.pipeline_mode<synchronous>, transform_indices = @transform_14, window_bounds = array<i64: 2, 32>}, {pipeline_mode = #tpu.pipeline_mode<synchronous>, transform_indices = @transform_15, window_bounds = array<i64: 64, 32>}, {pipeline_mode = #tpu.pipeline_mode<synchronous>, transform_indices = @transform_16, window_bounds = array<i64: 4, 32>}, {pipeline_mode = #tpu.pipeline_mode<synchronous>, transform_indices = @transform_17, window_bounds = array<i64: 32, 32>}, {pipeline_mode = #tpu.pipeline_mode<synchronous>, transform_indices = @transform_18, window_bounds = array<i64: 64, 32>}, {pipeline_mode = #tpu.pipeline_mode<synchronous>, transform_indices = @transform_19, window_bounds = array<i64: 1, 32>}, {transform_indices = @transform_20, window_bounds = array<i64: 2, 8, 32>}, {transform_indices = @transform_21, window_bounds = array<i64: 1, 4, 4>}, {transform_indices = @transform_22, window_bounds = array<i64: 2, 2, 2>}, {transform_indices = @transform_23, window_bounds = array<i64: 2, 8, 8>}]} {
    %c0 = arith.constant 0 : index
    %c0_0 = arith.constant 0 : index
    %c0_1 = arith.constant 0 : index
    %0 = vector.load %arg1[%c0, %c0_0, %c0_1] : memref<2x8x32xf32, #tpu.memory_space<vmem>>, vector<2x8x32xf32>
    %1 = vector.shape_cast %0 : vector<2x8x32xf32> to vector<16x32xf32>
    %c0_2 = arith.constant 0 : index
    %c0_3 = arith.constant 0 : index
    %c0_4 = arith.constant 0 : index
    %2 = vector.load %arg3[%c0_2, %c0_3, %c0_4] : memref<4x32x32xbf16, #tpu.memory_space<vmem>>, vector<1x32x32xbf16>
    %3 = vector.shape_cast %2 : vector<1x32x32xbf16> to vector<32x32xbf16>
    %4 = arith.truncf %1 : vector<16x32xf32> to vector<16x32xbf16>
    %cst = arith.constant dense<0.000000e+00> : vector<16x32xf32>
    %5 = tpu.matmul %4, %3, %cst {dimension_numbers = #tpu.dot_dimension_numbers<[1], [0], [0], [1], [0, 0, 1, 1], [], []>} : vector<16x32xbf16>, vector<32x32xbf16>, vector<16x32xf32> -> vector<16x32xf32>
    %c0_5 = arith.constant 0 : index
    %c0_6 = arith.constant 0 : index
    %6 = vector.load %arg4[%c0_5, %c0_6] : memref<4x32xf32, #tpu.memory_space<vmem>>, vector<1x32xf32>
    %7 = vector.broadcast %6 : vector<1x32xf32> to vector<16x32xf32>
    %8 = arith.addf %5, %7 : vector<16x32xf32>
    %c1 = arith.constant 1 : index
    %c0_7 = arith.constant 0 : index
    %c0_8 = arith.constant 0 : index
    %9 = vector.load %arg3[%c1, %c0_7, %c0_8] : memref<4x32x32xbf16, #tpu.memory_space<vmem>>, vector<1x32x32xbf16>
    %10 = vector.shape_cast %9 : vector<1x32x32xbf16> to vector<32x32xbf16>
    %11 = arith.truncf %1 : vector<16x32xf32> to vector<16x32xbf16>
    %cst_9 = arith.constant dense<0.000000e+00> : vector<16x32xf32>
    %12 = tpu.matmul %11, %10, %cst_9 {dimension_numbers = #tpu.dot_dimension_numbers<[1], [0], [0], [1], [0, 0, 1, 1], [], []>} : vector<16x32xbf16>, vector<32x32xbf16>, vector<16x32xf32> -> vector<16x32xf32>
    %c1_10 = arith.constant 1 : index
    %c0_11 = arith.constant 0 : index
    %13 = vector.load %arg4[%c1_10, %c0_11] : memref<4x32xf32, #tpu.memory_space<vmem>>, vector<1x32xf32>
    %14 = vector.broadcast %13 : vector<1x32xf32> to vector<16x32xf32>
    %15 = arith.addf %12, %14 : vector<16x32xf32>
    %c2 = arith.constant 2 : index
    %c0_12 = arith.constant 0 : index
    %c0_13 = arith.constant 0 : index
    %16 = vector.load %arg3[%c2, %c0_12, %c0_13] : memref<4x32x32xbf16, #tpu.memory_space<vmem>>, vector<1x32x32xbf16>
    %17 = vector.shape_cast %16 : vector<1x32x32xbf16> to vector<32x32xbf16>
    %18 = arith.truncf %1 : vector<16x32xf32> to vector<16x32xbf16>
    %cst_14 = arith.constant dense<0.000000e+00> : vector<16x32xf32>
    %19 = tpu.matmul %18, %17, %cst_14 {dimension_numbers = #tpu.dot_dimension_numbers<[1], [0], [0], [1], [0, 0, 1, 1], [], []>} : vector<16x32xbf16>, vector<32x32xbf16>, vector<16x32xf32> -> vector<16x32xf32>
    %c2_15 = arith.constant 2 : index
    %c0_16 = arith.constant 0 : index
    %20 = vector.load %arg4[%c2_15, %c0_16] : memref<4x32xf32, #tpu.memory_space<vmem>>, vector<1x32xf32>
    %21 = vector.broadcast %20 : vector<1x32xf32> to vector<16x32xf32>
    %22 = arith.addf %19, %21 : vector<16x32xf32>
    %23 = vector.shape_cast %8 : vector<16x32xf32> to vector<4x4x32xf32>
    %24 = vector.shape_cast %15 : vector<16x32xf32> to vector<4x4x32xf32>
    %25 = vector.shape_cast %22 : vector<16x32xf32> to vector<4x4x32xf32>
    %cst_17 = arith.constant 0.000000e+00 : f32
    %26 = vector.broadcast %cst_17 : f32 to vector<4x4x4xf32>
    %27 = vector.extract_strided_slice %23 {offsets = [0, 0, 0], sizes = [4, 4, 16], strides = [1, 1, 1]} : vector<4x4x32xf32> to vector<4x4x16xf32>
    %28 = arith.truncf %27 : vector<4x4x16xf32> to vector<4x4x16xbf16>
    %29 = vector.extract_strided_slice %24 {offsets = [0, 0, 0], sizes = [4, 4, 16], strides = [1, 1, 1]} : vector<4x4x32xf32> to vector<4x4x16xf32>
    %30 = arith.truncf %29 : vector<4x4x16xf32> to vector<4x4x16xbf16>
    "tpu.trace_start"() <{level = 10 : i32, message = "bqd,bkd->bqk"}> : () -> ()
    %cst_18 = arith.constant dense<0.000000e+00> : vector<4x4x4xf32>
    %31 = tpu.matmul %28, %30, %cst_18 {dimension_numbers = #tpu.dot_dimension_numbers<[2], [2], [1], [1], [0, 0, 0, 1, 1, 1], [0], [0]>} : vector<4x4x16xbf16>, vector<4x4x16xbf16>, vector<4x4x4xf32> -> vector<4x4x4xf32>
    "tpu.trace_stop"() : () -> ()
    %cst_19 = arith.constant dense<0xFF800000> : vector<4x4xf32>
    %32 = vector.multi_reduction <maximumf>, %31, %cst_19 [2] : vector<4x4x4xf32> to vector<4x4xf32>
    %33 = vector.shape_cast %32 : vector<4x4xf32> to vector<4x4x1xf32>
    %34 = vector.broadcast %33 : vector<4x4x1xf32> to vector<4x4x4xf32>
    %35 = arith.subf %31, %34 : vector<4x4x4xf32>
    %36 = math.exp %35 : vector<4x4x4xf32>
    %cst_20 = arith.constant dense<0.000000e+00> : vector<4x4xf32>
    %37 = vector.multi_reduction <add>, %36, %cst_20 [2] : vector<4x4x4xf32> to vector<4x4xf32>
    %38 = vector.shape_cast %37 : vector<4x4xf32> to vector<4x4x1xf32>
    %39 = tpu.reciprocal %38 {approx = true} : vector<4x4x1xf32> -> vector<4x4x1xf32>
    %40 = vector.broadcast %39 : vector<4x4x1xf32> to vector<4x4x4xf32>
    %41 = arith.mulf %36, %40 : vector<4x4x4xf32>
    %42 = arith.addf %26, %41 : vector<4x4x4xf32>
    %43 = arith.truncf %41 : vector<4x4x4xf32> to vector<4x4x4xbf16>
    %44 = vector.extract_strided_slice %25 {offsets = [0, 0, 0], sizes = [4, 4, 16], strides = [1, 1, 1]} : vector<4x4x32xf32> to vector<4x4x16xf32>
    %45 = arith.truncf %44 : vector<4x4x16xf32> to vector<4x4x16xbf16>
    "tpu.trace_start"() <{level = 10 : i32, message = "bqk,bkd->bqd"}> : () -> ()
    %cst_21 = arith.constant dense<0.000000e+00> : vector<4x4x16xf32>
    %46 = tpu.matmul %43, %45, %cst_21 {dimension_numbers = #tpu.dot_dimension_numbers<[2], [1], [1], [2], [0, 0, 0, 1, 1, 2], [0], [0]>} : vector<4x4x4xbf16>, vector<4x4x16xbf16>, vector<4x4x16xf32> -> vector<4x4x16xf32>
    "tpu.trace_stop"() : () -> ()
    %47 = vector.extract_strided_slice %23 {offsets = [0, 0, 16], sizes = [4, 4, 16], strides = [1, 1, 1]} : vector<4x4x32xf32> to vector<4x4x16xf32>
    %48 = arith.truncf %47 : vector<4x4x16xf32> to vector<4x4x16xbf16>
    %49 = vector.extract_strided_slice %24 {offsets = [0, 0, 16], sizes = [4, 4, 16], strides = [1, 1, 1]} : vector<4x4x32xf32> to vector<4x4x16xf32>
    %50 = arith.truncf %49 : vector<4x4x16xf32> to vector<4x4x16xbf16>
    "tpu.trace_start"() <{level = 10 : i32, message = "bqd,bkd->bqk"}> : () -> ()
    %cst_22 = arith.constant dense<0.000000e+00> : vector<4x4x4xf32>
    %51 = tpu.matmul %48, %50, %cst_22 {dimension_numbers = #tpu.dot_dimension_numbers<[2], [2], [1], [1], [0, 0, 0, 1, 1, 1], [0], [0]>} : vector<4x4x16xbf16>, vector<4x4x16xbf16>, vector<4x4x4xf32> -> vector<4x4x4xf32>
    "tpu.trace_stop"() : () -> ()
    %cst_23 = arith.constant dense<0xFF800000> : vector<4x4xf32>
    %52 = vector.multi_reduction <maximumf>, %51, %cst_23 [2] : vector<4x4x4xf32> to vector<4x4xf32>
    %53 = vector.shape_cast %52 : vector<4x4xf32> to vector<4x4x1xf32>
    %54 = vector.broadcast %53 : vector<4x4x1xf32> to vector<4x4x4xf32>
    %55 = arith.subf %51, %54 : vector<4x4x4xf32>
    %56 = math.exp %55 : vector<4x4x4xf32>
    %cst_24 = arith.constant dense<0.000000e+00> : vector<4x4xf32>
    %57 = vector.multi_reduction <add>, %56, %cst_24 [2] : vector<4x4x4xf32> to vector<4x4xf32>
    %58 = vector.shape_cast %57 : vector<4x4xf32> to vector<4x4x1xf32>
    %59 = tpu.reciprocal %58 {approx = true} : vector<4x4x1xf32> -> vector<4x4x1xf32>
    %60 = vector.broadcast %59 : vector<4x4x1xf32> to vector<4x4x4xf32>
    %61 = arith.mulf %56, %60 : vector<4x4x4xf32>
    %62 = arith.addf %42, %61 : vector<4x4x4xf32>
    %63 = arith.truncf %61 : vector<4x4x4xf32> to vector<4x4x4xbf16>
    %64 = vector.extract_strided_slice %25 {offsets = [0, 0, 16], sizes = [4, 4, 16], strides = [1, 1, 1]} : vector<4x4x32xf32> to vector<4x4x16xf32>
    %65 = arith.truncf %64 : vector<4x4x16xf32> to vector<4x4x16xbf16>
    "tpu.trace_start"() <{level = 10 : i32, message = "bqk,bkd->bqd"}> : () -> ()
    %cst_25 = arith.constant dense<0.000000e+00> : vector<4x4x16xf32>
    %66 = tpu.matmul %63, %65, %cst_25 {dimension_numbers = #tpu.dot_dimension_numbers<[2], [1], [1], [2], [0, 0, 0, 1, 1, 2], [0], [0]>} : vector<4x4x4xbf16>, vector<4x4x16xbf16>, vector<4x4x16xf32> -> vector<4x4x16xf32>
    "tpu.trace_stop"() : () -> ()
    %67 = tpu.concatenate %46, %66 in 2 : vector<4x4x16xf32>, vector<4x4x16xf32> -> vector<4x4x32xf32>
    %68 = vector.shape_cast %67 : vector<4x4x32xf32> to vector<16x32xf32>
    %c3 = arith.constant 3 : index
    %c0_26 = arith.constant 0 : index
    %c0_27 = arith.constant 0 : index
    %69 = vector.load %arg3[%c3, %c0_26, %c0_27] : memref<4x32x32xbf16, #tpu.memory_space<vmem>>, vector<1x32x32xbf16>
    %70 = vector.shape_cast %69 : vector<1x32x32xbf16> to vector<32x32xbf16>
    %71 = arith.truncf %68 : vector<16x32xf32> to vector<16x32xbf16>
    %cst_28 = arith.constant dense<0.000000e+00> : vector<16x32xf32>
    %72 = tpu.matmul %71, %70, %cst_28 {dimension_numbers = #tpu.dot_dimension_numbers<[1], [0], [0], [1], [0, 0, 1, 1], [], []>} : vector<16x32xbf16>, vector<32x32xbf16>, vector<16x32xf32> -> vector<16x32xf32>
    %c3_29 = arith.constant 3 : index
    %c0_30 = arith.constant 0 : index
    %73 = vector.load %arg4[%c3_29, %c0_30] : memref<4x32xf32, #tpu.memory_space<vmem>>, vector<1x32xf32>
    %74 = vector.broadcast %73 : vector<1x32xf32> to vector<16x32xf32>
    %75 = arith.addf %72, %74 : vector<16x32xf32>
    %cst_31 = arith.constant 5.000000e-01 : f32
    %76 = vector.broadcast %cst_31 : f32 to vector<4x4x4xf32>
    %77 = arith.mulf %62, %76 : vector<4x4x4xf32>
    %cst_32 = arith.constant dense<0.000000e+00> : vector<4x4xf32>
    %78 = vector.multi_reduction <add>, %77, %cst_32 [0] : vector<4x4x4xf32> to vector<4x4xf32>
    %c0_33 = arith.constant 0 : index
    %c0_34 = arith.constant 0 : index
    %c0_35 = arith.constant 0 : index
    %79 = vector.load %arg22[%c0_33, %c0_34, %c0_35] : memref<1x4x4xf32, #tpu.memory_space<vmem>>, vector<1x4x4xf32>
    %80 = vector.shape_cast %79 : vector<1x4x4xf32> to vector<4x4xf32>
    %81 = vector.shape_cast %78 : vector<4x4xf32> to vector<1x4x4xf32>
    tpu.vector_store %arg22[%c0_33, %c0_34, %c0_35], %81 {strides = array<i32>} : memref<1x4x4xf32, #tpu.memory_space<vmem>>, vector<1x4x4xf32>,
    %c0_36 = arith.constant 0 : index
    %c0_37 = arith.constant 0 : index
    %82 = vector.load %arg11[%c0_36, %c0_37] : memref<32x16xbf16, #tpu.memory_space<vmem>>, vector<32x16xbf16>
    %83 = arith.truncf %75 : vector<16x32xf32> to vector<16x32xbf16>
    %cst_38 = arith.constant dense<0.000000e+00> : vector<16x16xf32>
    %84 = tpu.matmul %83, %82, %cst_38 {dimension_numbers = #tpu.dot_dimension_numbers<[1], [0], [0], [1], [0, 0, 1, 1], [], []>} : vector<16x32xbf16>, vector<32x16xbf16>, vector<16x16xf32> -> vector<16x16xf32>
    %c0_39 = arith.constant 0 : index
    %c0_40 = arith.constant 0 : index
    %85 = vector.load %arg12[%c0_39, %c0_40] : memref<1x16xf32, #tpu.memory_space<vmem>>, vector<1x16xf32>
    %86 = vector.broadcast %85 : vector<1x16xf32> to vector<16x16xf32>
    %87 = arith.addf %84, %86 : vector<16x16xf32>
    %cst_41 = arith.constant 0.000000e+00 : f32
    %88 = vector.broadcast %cst_41 : f32 to vector<16x16xf32>
    %89 = arith.maximumf %87, %88 : vector<16x16xf32>
    %c0_42 = arith.constant 0 : index
    %c0_43 = arith.constant 0 : index
    %90 = vector.load %arg13[%c0_42, %c0_43] : memref<1x16xf32, #tpu.memory_space<vmem>>, vector<1x16xf32>
    %91 = vector.broadcast %90 : vector<1x16xf32> to vector<16x16xf32>
    %92 = arith.mulf %89, %91 : vector<16x16xf32>
    %cst_44 = arith.constant dense<0.000000e+00> : vector<16xf32>
    %93 = vector.multi_reduction <add>, %92, %cst_44 [1] : vector<16x16xf32> to vector<16xf32>
    %94 = vector.shape_cast %93 : vector<16xf32> to vector<16x1xf32>
    %c0_45 = arith.constant 0 : index
    %c0_46 = arith.constant 0 : index
    %95 = vector.load %arg14[%c0_45, %c0_46] : memref<1x1xf32, #tpu.memory_space<vmem>>, vector<1x1xf32>
    %96 = vector.broadcast %95 : vector<1x1xf32> to vector<16x1xf32>
    %97 = arith.addf %94, %96 : vector<16x1xf32>
    %98 = arith.negf %97 : vector<16x1xf32>
    %99 = math.exp %98 : vector<16x1xf32>
    %cst_47 = arith.constant 1.000000e+00 : f32
    %100 = vector.broadcast %cst_47 : f32 to vector<16x1xf32>
    %101 = arith.addf %100, %99 : vector<16x1xf32>
    %102 = arith.divf %100, %101 : vector<16x1xf32>
    %103 = math.exp %102 : vector<16x1xf32>
    %104 = vector.broadcast %103 : vector<16x1xf32> to vector<16x32xf32>
    %105 = arith.mulf %75, %104 : vector<16x32xf32>
    %106 = vector.shape_cast %105 : vector<16x32xf32> to vector<4x4x32xf32>
    %cst_48 = arith.constant dense<0.000000e+00> : vector<4x32xf32>
    %107 = vector.multi_reduction <add>, %106, %cst_48 [1] : vector<4x4x32xf32> to vector<4x32xf32>
    %108 = vector.shape_cast %103 : vector<16x1xf32> to vector<4x4x1xf32>
    %cst_49 = arith.constant dense<0.000000e+00> : vector<4x1xf32>
    %109 = vector.multi_reduction <add>, %108, %cst_49 [1] : vector<4x4x1xf32> to vector<4x1xf32>
    %110 = tpu.reciprocal %109 {approx = true} : vector<4x1xf32> -> vector<4x1xf32>
    %111 = vector.broadcast %110 : vector<4x1xf32> to vector<4x32xf32>
    %112 = arith.mulf %107, %111 : vector<4x32xf32>
    %113 = vector.shape_cast %112 : vector<4x32xf32> to vector<2x2x32xf32>
    %c0_50 = arith.constant 0 : index
    %c0_51 = arith.constant 0 : index
    %114 = vector.load %arg15[%c0_50, %c0_51] : memref<2x32xf32, #tpu.memory_space<vmem>>, vector<2x32xf32>
    %115 = vector.shape_cast %114 : vector<2x32xf32> to vector<1x2x32xf32>
    %116 = vector.broadcast %115 : vector<1x2x32xf32> to vector<2x2x32xf32>
    %117 = arith.addf %113, %116 : vector<2x2x32xf32>
    %118 = vector.shape_cast %117 : vector<2x2x32xf32> to vector<4x32xf32>
    %c0_52 = arith.constant 0 : index
    %c0_53 = arith.constant 0 : index
    %c0_54 = arith.constant 0 : index
    %119 = vector.load %arg5[%c0_52, %c0_53, %c0_54] : memref<4x32x32xbf16, #tpu.memory_space<vmem>>, vector<1x32x32xbf16>
    %120 = vector.shape_cast %119 : vector<1x32x32xbf16> to vector<32x32xbf16>
    %121 = arith.truncf %118 : vector<4x32xf32> to vector<4x32xbf16>
    %cst_55 = arith.constant dense<0.000000e+00> : vector<4x32xf32>
    %122 = tpu.matmul %121, %120, %cst_55 {dimension_numbers = #tpu.dot_dimension_numbers<[1], [0], [0], [1], [0, 0, 1, 1], [], []>} : vector<4x32xbf16>, vector<32x32xbf16>, vector<4x32xf32> -> vector<4x32xf32>
    %c0_56 = arith.constant 0 : index
    %c0_57 = arith.constant 0 : index
    %123 = vector.load %arg6[%c0_56, %c0_57] : memref<4x32xf32, #tpu.memory_space<vmem>>, vector<1x32xf32>
    %124 = vector.broadcast %123 : vector<1x32xf32> to vector<4x32xf32>
    %125 = arith.addf %122, %124 : vector<4x32xf32>
    %c1_58 = arith.constant 1 : index
    %c0_59 = arith.constant 0 : index
    %c0_60 = arith.constant 0 : index
    %126 = vector.load %arg5[%c1_58, %c0_59, %c0_60] : memref<4x32x32xbf16, #tpu.memory_space<vmem>>, vector<1x32x32xbf16>
    %127 = vector.shape_cast %126 : vector<1x32x32xbf16> to vector<32x32xbf16>
    %128 = arith.truncf %118 : vector<4x32xf32> to vector<4x32xbf16>
    %cst_61 = arith.constant dense<0.000000e+00> : vector<4x32xf32>
    %129 = tpu.matmul %128, %127, %cst_61 {dimension_numbers = #tpu.dot_dimension_numbers<[1], [0], [0], [1], [0, 0, 1, 1], [], []>} : vector<4x32xbf16>, vector<32x32xbf16>, vector<4x32xf32> -> vector<4x32xf32>
    %c1_62 = arith.constant 1 : index
    %c0_63 = arith.constant 0 : index
    %130 = vector.load %arg6[%c1_62, %c0_63] : memref<4x32xf32, #tpu.memory_space<vmem>>, vector<1x32xf32>
    %131 = vector.broadcast %130 : vector<1x32xf32> to vector<4x32xf32>
    %132 = arith.addf %129, %131 : vector<4x32xf32>
    %c2_64 = arith.constant 2 : index
    %c0_65 = arith.constant 0 : index
    %c0_66 = arith.constant 0 : index
    %133 = vector.load %arg5[%c2_64, %c0_65, %c0_66] : memref<4x32x32xbf16, #tpu.memory_space<vmem>>, vector<1x32x32xbf16>
    %134 = vector.shape_cast %133 : vector<1x32x32xbf16> to vector<32x32xbf16>
    %135 = arith.truncf %118 : vector<4x32xf32> to vector<4x32xbf16>
    %cst_67 = arith.constant dense<0.000000e+00> : vector<4x32xf32>
    %136 = tpu.matmul %135, %134, %cst_67 {dimension_numbers = #tpu.dot_dimension_numbers<[1], [0], [0], [1], [0, 0, 1, 1], [], []>} : vector<4x32xbf16>, vector<32x32xbf16>, vector<4x32xf32> -> vector<4x32xf32>
    %c2_68 = arith.constant 2 : index
    %c0_69 = arith.constant 0 : index
    %137 = vector.load %arg6[%c2_68, %c0_69] : memref<4x32xf32, #tpu.memory_space<vmem>>, vector<1x32xf32>
    %138 = vector.broadcast %137 : vector<1x32xf32> to vector<4x32xf32>
    %139 = arith.addf %136, %138 : vector<4x32xf32>
    %140 = vector.shape_cast %125 : vector<4x32xf32> to vector<2x2x32xf32>
    %141 = vector.shape_cast %132 : vector<4x32xf32> to vector<2x2x32xf32>
    %142 = vector.shape_cast %139 : vector<4x32xf32> to vector<2x2x32xf32>
    %cst_70 = arith.constant 0.000000e+00 : f32
    %143 = vector.broadcast %cst_70 : f32 to vector<2x2x2xf32>
    %144 = vector.extract_strided_slice %140 {offsets = [0, 0, 0], sizes = [2, 2, 16], strides = [1, 1, 1]} : vector<2x2x32xf32> to vector<2x2x16xf32>
    %145 = arith.truncf %144 : vector<2x2x16xf32> to vector<2x2x16xbf16>
    %146 = vector.extract_strided_slice %141 {offsets = [0, 0, 0], sizes = [2, 2, 16], strides = [1, 1, 1]} : vector<2x2x32xf32> to vector<2x2x16xf32>
    %147 = arith.truncf %146 : vector<2x2x16xf32> to vector<2x2x16xbf16>
    "tpu.trace_start"() <{level = 10 : i32, message = "bqd,bkd->bqk"}> : () -> ()
    %cst_71 = arith.constant dense<0.000000e+00> : vector<2x2x2xf32>
    %148 = tpu.matmul %145, %147, %cst_71 {dimension_numbers = #tpu.dot_dimension_numbers<[2], [2], [1], [1], [0, 0, 0, 1, 1, 1], [0], [0]>} : vector<2x2x16xbf16>, vector<2x2x16xbf16>, vector<2x2x2xf32> -> vector<2x2x2xf32>
    "tpu.trace_stop"() : () -> ()
    %cst_72 = arith.constant dense<0xFF800000> : vector<2x2xf32>
    %149 = vector.multi_reduction <maximumf>, %148, %cst_72 [2] : vector<2x2x2xf32> to vector<2x2xf32>
    %150 = vector.shape_cast %149 : vector<2x2xf32> to vector<2x2x1xf32>
    %151 = vector.broadcast %150 : vector<2x2x1xf32> to vector<2x2x2xf32>
    %152 = arith.subf %148, %151 : vector<2x2x2xf32>
    %153 = math.exp %152 : vector<2x2x2xf32>
    %cst_73 = arith.constant dense<0.000000e+00> : vector<2x2xf32>
    %154 = vector.multi_reduction <add>, %153, %cst_73 [2] : vector<2x2x2xf32> to vector<2x2xf32>
    %155 = vector.shape_cast %154 : vector<2x2xf32> to vector<2x2x1xf32>
    %156 = tpu.reciprocal %155 {approx = true} : vector<2x2x1xf32> -> vector<2x2x1xf32>
    %157 = vector.broadcast %156 : vector<2x2x1xf32> to vector<2x2x2xf32>
    %158 = arith.mulf %153, %157 : vector<2x2x2xf32>
    %159 = arith.addf %143, %158 : vector<2x2x2xf32>
    %160 = arith.truncf %158 : vector<2x2x2xf32> to vector<2x2x2xbf16>
    %161 = vector.extract_strided_slice %142 {offsets = [0, 0, 0], sizes = [2, 2, 16], strides = [1, 1, 1]} : vector<2x2x32xf32> to vector<2x2x16xf32>
    %162 = arith.truncf %161 : vector<2x2x16xf32> to vector<2x2x16xbf16>
    "tpu.trace_start"() <{level = 10 : i32, message = "bqk,bkd->bqd"}> : () -> ()
    %cst_74 = arith.constant dense<0.000000e+00> : vector<2x2x16xf32>
    %163 = tpu.matmul %160, %162, %cst_74 {dimension_numbers = #tpu.dot_dimension_numbers<[2], [1], [1], [2], [0, 0, 0, 1, 1, 2], [0], [0]>} : vector<2x2x2xbf16>, vector<2x2x16xbf16>, vector<2x2x16xf32> -> vector<2x2x16xf32>
    "tpu.trace_stop"() : () -> ()
    %164 = vector.extract_strided_slice %140 {offsets = [0, 0, 16], sizes = [2, 2, 16], strides = [1, 1, 1]} : vector<2x2x32xf32> to vector<2x2x16xf32>
    %165 = arith.truncf %164 : vector<2x2x16xf32> to vector<2x2x16xbf16>
    %166 = vector.extract_strided_slice %141 {offsets = [0, 0, 16], sizes = [2, 2, 16], strides = [1, 1, 1]} : vector<2x2x32xf32> to vector<2x2x16xf32>
    %167 = arith.truncf %166 : vector<2x2x16xf32> to vector<2x2x16xbf16>
    "tpu.trace_start"() <{level = 10 : i32, message = "bqd,bkd->bqk"}> : () -> ()
    %cst_75 = arith.constant dense<0.000000e+00> : vector<2x2x2xf32>
    %168 = tpu.matmul %165, %167, %cst_75 {dimension_numbers = #tpu.dot_dimension_numbers<[2], [2], [1], [1], [0, 0, 0, 1, 1, 1], [0], [0]>} : vector<2x2x16xbf16>, vector<2x2x16xbf16>, vector<2x2x2xf32> -> vector<2x2x2xf32>
    "tpu.trace_stop"() : () -> ()
    %cst_76 = arith.constant dense<0xFF800000> : vector<2x2xf32>
    %169 = vector.multi_reduction <maximumf>, %168, %cst_76 [2] : vector<2x2x2xf32> to vector<2x2xf32>
    %170 = vector.shape_cast %169 : vector<2x2xf32> to vector<2x2x1xf32>
    %171 = vector.broadcast %170 : vector<2x2x1xf32> to vector<2x2x2xf32>
    %172 = arith.subf %168, %171 : vector<2x2x2xf32>
    %173 = math.exp %172 : vector<2x2x2xf32>
    %cst_77 = arith.constant dense<0.000000e+00> : vector<2x2xf32>
    %174 = vector.multi_reduction <add>, %173, %cst_77 [2] : vector<2x2x2xf32> to vector<2x2xf32>
    %175 = vector.shape_cast %174 : vector<2x2xf32> to vector<2x2x1xf32>
    %176 = tpu.reciprocal %175 {approx = true} : vector<2x2x1xf32> -> vector<2x2x1xf32>
    %177 = vector.broadcast %176 : vector<2x2x1xf32> to vector<2x2x2xf32>
    %178 = arith.mulf %173, %177 : vector<2x2x2xf32>
    %179 = arith.addf %159, %178 : vector<2x2x2xf32>
    %180 = arith.truncf %178 : vector<2x2x2xf32> to vector<2x2x2xbf16>
    %181 = vector.extract_strided_slice %142 {offsets = [0, 0, 16], sizes = [2, 2, 16], strides = [1, 1, 1]} : vector<2x2x32xf32> to vector<2x2x16xf32>
    %182 = arith.truncf %181 : vector<2x2x16xf32> to vector<2x2x16xbf16>
    "tpu.trace_start"() <{level = 10 : i32, message = "bqk,bkd->bqd"}> : () -> ()
    %cst_78 = arith.constant dense<0.000000e+00> : vector<2x2x16xf32>
    %183 = tpu.matmul %180, %182, %cst_78 {dimension_numbers = #tpu.dot_dimension_numbers<[2], [1], [1], [2], [0, 0, 0, 1, 1, 2], [0], [0]>} : vector<2x2x2xbf16>, vector<2x2x16xbf16>, vector<2x2x16xf32> -> vector<2x2x16xf32>
    "tpu.trace_stop"() : () -> ()
    %184 = tpu.concatenate %163, %183 in 2 : vector<2x2x16xf32>, vector<2x2x16xf32> -> vector<2x2x32xf32>
    %185 = vector.shape_cast %184 : vector<2x2x32xf32> to vector<4x32xf32>
    %c3_79 = arith.constant 3 : index
    %c0_80 = arith.constant 0 : index
    %c0_81 = arith.constant 0 : index
    %186 = vector.load %arg5[%c3_79, %c0_80, %c0_81] : memref<4x32x32xbf16, #tpu.memory_space<vmem>>, vector<1x32x32xbf16>
    %187 = vector.shape_cast %186 : vector<1x32x32xbf16> to vector<32x32xbf16>
    %188 = arith.truncf %185 : vector<4x32xf32> to vector<4x32xbf16>
    %cst_82 = arith.constant dense<0.000000e+00> : vector<4x32xf32>
    %189 = tpu.matmul %188, %187, %cst_82 {dimension_numbers = #tpu.dot_dimension_numbers<[1], [0], [0], [1], [0, 0, 1, 1], [], []>} : vector<4x32xbf16>, vector<32x32xbf16>, vector<4x32xf32> -> vector<4x32xf32>
    %c3_83 = arith.constant 3 : index
    %c0_84 = arith.constant 0 : index
    %190 = vector.load %arg6[%c3_83, %c0_84] : memref<4x32xf32, #tpu.memory_space<vmem>>, vector<1x32xf32>
    %191 = vector.broadcast %190 : vector<1x32xf32> to vector<4x32xf32>
    %192 = arith.addf %189, %191 : vector<4x32xf32>
    %cst_85 = arith.constant 5.000000e-01 : f32
    %193 = vector.broadcast %cst_85 : f32 to vector<2x2x2xf32>
    %194 = arith.mulf %179, %193 : vector<2x2x2xf32>
    %c0_86 = arith.constant 0 : index
    %c0_87 = arith.constant 0 : index
    %c0_88 = arith.constant 0 : index
    %195 = vector.load %arg23[%c0_86, %c0_87, %c0_88] : memref<2x2x2xf32, #tpu.memory_space<vmem>>, vector<2x2x2xf32>
    tpu.vector_store %arg23[%c0_86, %c0_87, %c0_88], %194 {strides = array<i32>} : memref<2x2x2xf32, #tpu.memory_space<vmem>>, vector<2x2x2xf32>,
    %196 = vector.shape_cast %192 : vector<4x32xf32> to vector<4x1x32xf32>
    %197 = vector.shape_cast %196 : vector<4x1x32xf32> to vector<4x1x32xf32>
    %198 = vector.broadcast %197 : vector<4x1x32xf32> to vector<4x4x32xf32>
    %199 = vector.shape_cast %198 : vector<4x4x32xf32> to vector<16x32xf32>
    %c0_89 = arith.constant 0 : index
    %c0_90 = arith.constant 0 : index
    %200 = vector.load %arg16[%c0_89, %c0_90] : memref<64x32xbf16, #tpu.memory_space<vmem>>, vector<32x32xbf16>
    %201 = arith.truncf %75 : vector<16x32xf32> to vector<16x32xbf16>
    %cst_91 = arith.constant dense<0.000000e+00> : vector<16x32xf32>
    %202 = tpu.matmul %201, %200, %cst_91 {dimension_numbers = #tpu.dot_dimension_numbers<[1], [0], [0], [1], [0, 0, 1, 1], [], []>} : vector<16x32xbf16>, vector<32x32xbf16>, vector<16x32xf32> -> vector<16x32xf32>
    %c32 = arith.constant 32 : index
    %c0_92 = arith.constant 0 : index
    %203 = vector.load %arg16[%c32, %c0_92] : memref<64x32xbf16, #tpu.memory_space<vmem>>, vector<32x32xbf16>
    %204 = arith.truncf %199 : vector<16x32xf32> to vector<16x32xbf16>
    %cst_93 = arith.constant dense<0.000000e+00> : vector<16x32xf32>
    %205 = tpu.matmul %204, %203, %cst_93 {dimension_numbers = #tpu.dot_dimension_numbers<[1], [0], [0], [1], [0, 0, 1, 1], [], []>} : vector<16x32xbf16>, vector<32x32xbf16>, vector<16x32xf32> -> vector<16x32xf32>
    %206 = arith.addf %202, %205 : vector<16x32xf32>
    %c0_94 = arith.constant 0 : index
    %c0_95 = arith.constant 0 : index
    %207 = vector.load %arg17[%c0_94, %c0_95] : memref<4x32xf32, #tpu.memory_space<vmem>>, vector<1x32xf32>
    %208 = vector.broadcast %207 : vector<1x32xf32> to vector<16x32xf32>
    %209 = arith.addf %206, %208 : vector<16x32xf32>
    %cst_96 = arith.constant 0.000000e+00 : f32
    %210 = vector.broadcast %cst_96 : f32 to vector<16x32xf32>
    %211 = arith.maximumf %209, %210 : vector<16x32xf32>
    %cst_97 = arith.constant dense<0.000000e+00> : vector<16xf32>
    %212 = vector.multi_reduction <add>, %211, %cst_97 [1] : vector<16x32xf32> to vector<16xf32>
    %213 = vector.shape_cast %212 : vector<16xf32> to vector<16x1xf32>
    %cst_98 = arith.constant 3.200000e+01 : f32
    %214 = vector.broadcast %cst_98 : f32 to vector<16x1xf32>
    %215 = arith.divf %213, %214 : vector<16x1xf32>
    %216 = vector.broadcast %215 : vector<16x1xf32> to vector<16x32xf32>
    %217 = arith.subf %211, %216 : vector<16x32xf32>
    %218 = arith.mulf %217, %217 : vector<16x32xf32>
    %cst_99 = arith.constant dense<0.000000e+00> : vector<16xf32>
    %219 = vector.multi_reduction <add>, %218, %cst_99 [1] : vector<16x32xf32> to vector<16xf32>
    %220 = vector.shape_cast %219 : vector<16xf32> to vector<16x1xf32>
    %cst_100 = arith.constant 3.200000e+01 : f32
    %221 = vector.broadcast %cst_100 : f32 to vector<16x1xf32>
    %222 = arith.divf %220, %221 : vector<16x1xf32>
    %223 = vector.broadcast %215 : vector<16x1xf32> to vector<16x32xf32>
    %224 = arith.subf %211, %223 : vector<16x32xf32>
    %cst_101 = arith.constant 9.99999974E-6 : f32
    %225 = vector.broadcast %cst_101 : f32 to vector<16x1xf32>
    %226 = arith.addf %222, %225 : vector<16x1xf32>
    %227 = math.rsqrt %226 : vector<16x1xf32>
    %228 = vector.broadcast %227 : vector<16x1xf32> to vector<16x32xf32>
    %229 = arith.mulf %224, %228 : vector<16x32xf32>
    %c1_102 = arith.constant 1 : index
    %c0_103 = arith.constant 0 : index
    %230 = vector.load %arg17[%c1_102, %c0_103] : memref<4x32xf32, #tpu.memory_space<vmem>>, vector<1x32xf32>
    %231 = vector.broadcast %230 : vector<1x32xf32> to vector<16x32xf32>
    %232 = arith.mulf %229, %231 : vector<16x32xf32>
    %c2_104 = arith.constant 2 : index
    %c0_105 = arith.constant 0 : index
    %233 = vector.load %arg17[%c2_104, %c0_105] : memref<4x32xf32, #tpu.memory_space<vmem>>, vector<1x32xf32>
    %234 = vector.broadcast %233 : vector<1x32xf32> to vector<16x32xf32>
    %235 = arith.addf %232, %234 : vector<16x32xf32>
    %c0_106 = arith.constant 0 : index
    %c0_107 = arith.constant 0 : index
    %236 = vector.load %arg18[%c0_106, %c0_107] : memref<32x32xbf16, #tpu.memory_space<vmem>>, vector<32x32xbf16>
    %237 = arith.truncf %235 : vector<16x32xf32> to vector<16x32xbf16>
    %cst_108 = arith.constant dense<0.000000e+00> : vector<16x32xf32>
    %238 = tpu.matmul %237, %236, %cst_108 {dimension_numbers = #tpu.dot_dimension_numbers<[1], [0], [0], [1], [0, 0, 1, 1], [], []>} : vector<16x32xbf16>, vector<32x32xbf16>, vector<16x32xf32> -> vector<16x32xf32>
    %c3_109 = arith.constant 3 : index
    %c0_110 = arith.constant 0 : index
    %239 = vector.load %arg17[%c3_109, %c0_110] : memref<4x32xf32, #tpu.memory_space<vmem>>, vector<1x32xf32>
    %240 = vector.broadcast %239 : vector<1x32xf32> to vector<16x32xf32>
    %241 = arith.addf %238, %240 : vector<16x32xf32>
    %c0_111 = arith.constant 0 : index
    %c0_112 = arith.constant 0 : index
    %c0_113 = arith.constant 0 : index
    %c0_114 = arith.constant 0 : index
    %242 = vector.load %arg2[%c0_111, %c0_112, %c0_113, %c0_114] : memref<2x8x8x32xf32, #tpu.memory_space<vmem>>, vector<2x8x8x32xf32>
    %243 = vector.shape_cast %242 : vector<2x8x8x32xf32> to vector<128x32xf32>
    %c1_115 = arith.constant 1 : index
    %c0_116 = arith.constant 0 : index
    %c0_117 = arith.constant 0 : index
    %244 = vector.load %arg7[%c1_115, %c0_116, %c0_117] : memref<4x32x32xbf16, #tpu.memory_space<vmem>>, vector<1x32x32xbf16>
    %245 = vector.shape_cast %244 : vector<1x32x32xbf16> to vector<32x32xbf16>
    %246 = arith.truncf %243 : vector<128x32xf32> to vector<128x32xbf16>
    %cst_118 = arith.constant dense<0.000000e+00> : vector<128x32xf32>
    %247 = tpu.matmul %246, %245, %cst_118 {dimension_numbers = #tpu.dot_dimension_numbers<[1], [0], [0], [1], [0, 0, 1, 1], [], []>} : vector<128x32xbf16>, vector<32x32xbf16>, vector<128x32xf32> -> vector<128x32xf32>
    %248 = vector.shape_cast %247 : vector<128x32xf32> to vector<16x8x32xf32>
    %c0_119 = arith.constant 0 : index
    %c0_120 = arith.constant 0 : index
    %c0_121 = arith.constant 0 : index
    %249 = vector.load %arg9[%c0_119, %c0_120, %c0_121] : memref<2x8x32xf32, #tpu.memory_space<vmem>>, vector<1x8x32xf32>
    %250 = vector.shape_cast %249 : vector<1x8x32xf32> to vector<8x32xf32>
    %251 = vector.shape_cast %250 : vector<8x32xf32> to vector<1x8x32xf32>
    %252 = vector.broadcast %251 : vector<1x8x32xf32> to vector<16x8x32xf32>
    %253 = arith.addf %248, %252 : vector<16x8x32xf32>
    %c2_122 = arith.constant 2 : index
    %c0_123 = arith.constant 0 : index
    %c0_124 = arith.constant 0 : index
    %254 = vector.load %arg7[%c2_122, %c0_123, %c0_124] : memref<4x32x32xbf16, #tpu.memory_space<vmem>>, vector<1x32x32xbf16>
    %255 = vector.shape_cast %254 : vector<1x32x32xbf16> to vector<32x32xbf16>
    %256 = arith.truncf %243 : vector<128x32xf32> to vector<128x32xbf16>
    %cst_125 = arith.constant dense<0.000000e+00> : vector<128x32xf32>
    %257 = tpu.matmul %256, %255, %cst_125 {dimension_numbers = #tpu.dot_dimension_numbers<[1], [0], [0], [1], [0, 0, 1, 1], [], []>} : vector<128x32xbf16>, vector<32x32xbf16>, vector<128x32xf32> -> vector<128x32xf32>
    %258 = vector.shape_cast %257 : vector<128x32xf32> to vector<16x8x32xf32>
    %c1_126 = arith.constant 1 : index
    %c0_127 = arith.constant 0 : index
    %c0_128 = arith.constant 0 : index
    %259 = vector.load %arg9[%c1_126, %c0_127, %c0_128] : memref<2x8x32xf32, #tpu.memory_space<vmem>>, vector<1x8x32xf32>
    %260 = vector.shape_cast %259 : vector<1x8x32xf32> to vector<8x32xf32>
    %261 = vector.shape_cast %260 : vector<8x32xf32> to vector<1x8x32xf32>
    %262 = vector.broadcast %261 : vector<1x8x32xf32> to vector<16x8x32xf32>
    %263 = arith.addf %258, %262 : vector<16x8x32xf32>
    %c0_129 = arith.constant 0 : index
    %c0_130 = arith.constant 0 : index
    %c0_131 = arith.constant 0 : index
    %264 = vector.load %arg7[%c0_129, %c0_130, %c0_131] : memref<4x32x32xbf16, #tpu.memory_space<vmem>>, vector<1x32x32xbf16>
    %265 = vector.shape_cast %264 : vector<1x32x32xbf16> to vector<32x32xbf16>
    %266 = arith.truncf %1 : vector<16x32xf32> to vector<16x32xbf16>
    %cst_132 = arith.constant dense<0.000000e+00> : vector<16x32xf32>
    %267 = tpu.matmul %266, %265, %cst_132 {dimension_numbers = #tpu.dot_dimension_numbers<[1], [0], [0], [1], [0, 0, 1, 1], [], []>} : vector<16x32xbf16>, vector<32x32xbf16>, vector<16x32xf32> -> vector<16x32xf32>
    %c0_133 = arith.constant 0 : index
    %c0_134 = arith.constant 0 : index
    %268 = vector.load %arg8[%c0_133, %c0_134] : memref<1x32xf32, #tpu.memory_space<vmem>>, vector<1x32xf32>
    %269 = vector.broadcast %268 : vector<1x32xf32> to vector<16x32xf32>
    %270 = arith.addf %267, %269 : vector<16x32xf32>
    %cst_135 = arith.constant 0.000000e+00 : f32
    %271 = vector.broadcast %cst_135 : f32 to vector<16x8xf32>
    %272 = vector.extract_strided_slice %253 {offsets = [0, 0, 0], sizes = [16, 8, 16], strides = [1, 1, 1]} : vector<16x8x32xf32> to vector<16x8x16xf32>
    %273 = vector.extract_strided_slice %270 {offsets = [0, 0], sizes = [16, 16], strides = [1, 1]} : vector<16x32xf32> to vector<16x16xf32>
    %274 = vector.shape_cast %273 : vector<16x16xf32> to vector<16x1x16xf32>
    %275 = vector.broadcast %274 : vector<16x1x16xf32> to vector<16x8x16xf32>
    %276 = arith.mulf %272, %275 : vector<16x8x16xf32>
    %cst_136 = arith.constant dense<0.000000e+00> : vector<16x8xf32>
    %277 = vector.multi_reduction <add>, %276, %cst_136 [2] : vector<16x8x16xf32> to vector<16x8xf32>
    %cst_137 = arith.constant dense<0xFF800000> : vector<16xf32>
    %278 = vector.multi_reduction <maximumf>, %277, %cst_137 [1] : vector<16x8xf32> to vector<16xf32>
    %279 = vector.shape_cast %278 : vector<16xf32> to vector<16x1xf32>
    %280 = vector.broadcast %279 : vector<16x1xf32> to vector<16x8xf32>
    %281 = arith.subf %277, %280 : vector<16x8xf32>
    %282 = math.exp %281 : vector<16x8xf32>
    %cst_138 = arith.constant dense<0.000000e+00> : vector<16xf32>
    %283 = vector.multi_reduction <add>, %282, %cst_138 [1] : vector<16x8xf32> to vector<16xf32>
    %284 = vector.shape_cast %283 : vector<16xf32> to vector<16x1xf32>
    %285 = tpu.reciprocal %284 {approx = true} : vector<16x1xf32> -> vector<16x1xf32>
    %286 = vector.broadcast %285 : vector<16x1xf32> to vector<16x8xf32>
    %287 = arith.mulf %282, %286 : vector<16x8xf32>
    %288 = arith.addf %271, %287 : vector<16x8xf32>
    %289 = vector.shape_cast %287 : vector<16x8xf32> to vector<16x8x1xf32>
    %290 = vector.extract_strided_slice %263 {offsets = [0, 0, 0], sizes = [16, 8, 16], strides = [1, 1, 1]} : vector<16x8x32xf32> to vector<16x8x16xf32>
    %291 = vector.broadcast %289 : vector<16x8x1xf32> to vector<16x8x16xf32>
    %292 = arith.mulf %291, %290 : vector<16x8x16xf32>
    %cst_139 = arith.constant dense<0.000000e+00> : vector<16x16xf32>
    %293 = vector.multi_reduction <add>, %292, %cst_139 [1] : vector<16x8x16xf32> to vector<16x16xf32>
    %294 = vector.extract_strided_slice %253 {offsets = [0, 0, 16], sizes = [16, 8, 16], strides = [1, 1, 1]} : vector<16x8x32xf32> to vector<16x8x16xf32>
    %295 = vector.extract_strided_slice %270 {offsets = [0, 16], sizes = [16, 16], strides = [1, 1]} : vector<16x32xf32> to vector<16x16xf32>
    %296 = vector.shape_cast %295 : vector<16x16xf32> to vector<16x1x16xf32>
    %297 = vector.broadcast %296 : vector<16x1x16xf32> to vector<16x8x16xf32>
    %298 = arith.mulf %294, %297 : vector<16x8x16xf32>
    %cst_140 = arith.constant dense<0.000000e+00> : vector<16x8xf32>
    %299 = vector.multi_reduction <add>, %298, %cst_140 [2] : vector<16x8x16xf32> to vector<16x8xf32>
    %cst_141 = arith.constant dense<0xFF800000> : vector<16xf32>
    %300 = vector.multi_reduction <maximumf>, %299, %cst_141 [1] : vector<16x8xf32> to vector<16xf32>
    %301 = vector.shape_cast %300 : vector<16xf32> to vector<16x1xf32>
    %302 = vector.broadcast %301 : vector<16x1xf32> to vector<16x8xf32>
    %303 = arith.subf %299, %302 : vector<16x8xf32>
    %304 = math.exp %303 : vector<16x8xf32>
    %cst_142 = arith.constant dense<0.000000e+00> : vector<16xf32>
    %305 = vector.multi_reduction <add>, %304, %cst_142 [1] : vector<16x8xf32> to vector<16xf32>
    %306 = vector.shape_cast %305 : vector<16xf32> to vector<16x1xf32>
    %307 = tpu.reciprocal %306 {approx = true} : vector<16x1xf32> -> vector<16x1xf32>
    %308 = vector.broadcast %307 : vector<16x1xf32> to vector<16x8xf32>
    %309 = arith.mulf %304, %308 : vector<16x8xf32>
    %310 = arith.addf %288, %309 : vector<16x8xf32>
    %311 = vector.shape_cast %309 : vector<16x8xf32> to vector<16x8x1xf32>
    %312 = vector.extract_strided_slice %263 {offsets = [0, 0, 16], sizes = [16, 8, 16], strides = [1, 1, 1]} : vector<16x8x32xf32> to vector<16x8x16xf32>
    %313 = vector.broadcast %311 : vector<16x8x1xf32> to vector<16x8x16xf32>
    %314 = arith.mulf %313, %312 : vector<16x8x16xf32>
    %cst_143 = arith.constant dense<0.000000e+00> : vector<16x16xf32>
    %315 = vector.multi_reduction <add>, %314, %cst_143 [1] : vector<16x8x16xf32> to vector<16x16xf32>
    %316 = tpu.concatenate %293, %315 in 1 : vector<16x16xf32>, vector<16x16xf32> -> vector<16x32xf32>
    %c3_144 = arith.constant 3 : index
    %c0_145 = arith.constant 0 : index
    %c0_146 = arith.constant 0 : index
    %317 = vector.load %arg7[%c3_144, %c0_145, %c0_146] : memref<4x32x32xbf16, #tpu.memory_space<vmem>>, vector<1x32x32xbf16>
    %318 = vector.shape_cast %317 : vector<1x32x32xbf16> to vector<32x32xbf16>
    %319 = arith.truncf %316 : vector<16x32xf32> to vector<16x32xbf16>
    %cst_147 = arith.constant dense<0.000000e+00> : vector<16x32xf32>
    %320 = tpu.matmul %319, %318, %cst_147 {dimension_numbers = #tpu.dot_dimension_numbers<[1], [0], [0], [1], [0, 0, 1, 1], [], []>} : vector<16x32xbf16>, vector<32x32xbf16>, vector<16x32xf32> -> vector<16x32xf32>
    %c0_148 = arith.constant 0 : index
    %c0_149 = arith.constant 0 : index
    %321 = vector.load %arg10[%c0_148, %c0_149] : memref<1x32xf32, #tpu.memory_space<vmem>>, vector<1x32xf32>
    %322 = vector.broadcast %321 : vector<1x32xf32> to vector<16x32xf32>
    %323 = arith.addf %320, %322 : vector<16x32xf32>
    %cst_150 = arith.constant 5.000000e-01 : f32
    %324 = vector.broadcast %cst_150 : f32 to vector<16x8xf32>
    %325 = arith.mulf %310, %324 : vector<16x8xf32>
    %326 = vector.shape_cast %325 : vector<16x8xf32> to vector<2x8x8xf32>
    %c0_151 = arith.constant 0 : index
    %c0_152 = arith.constant 0 : index
    %c0_153 = arith.constant 0 : index
    %327 = vector.load %arg24[%c0_151, %c0_152, %c0_153] : memref<2x8x8xf32, #tpu.memory_space<vmem>>, vector<2x8x8xf32>
    tpu.vector_store %arg24[%c0_151, %c0_152, %c0_153], %326 {strides = array<i32>} : memref<2x8x8xf32, #tpu.memory_space<vmem>>, vector<2x8x8xf32>,
    %c0_154 = arith.constant 0 : index
    %c0_155 = arith.constant 0 : index
    %328 = vector.load %arg19[%c0_154, %c0_155] : memref<64x32xbf16, #tpu.memory_space<vmem>>, vector<32x32xbf16>
    %329 = arith.truncf %241 : vector<16x32xf32> to vector<16x32xbf16>
    %cst_156 = arith.constant dense<0.000000e+00> : vector<16x32xf32>
    %330 = tpu.matmul %329, %328, %cst_156 {dimension_numbers = #tpu.dot_dimension_numbers<[1], [0], [0], [1], [0, 0, 1, 1], [], []>} : vector<16x32xbf16>, vector<32x32xbf16>, vector<16x32xf32> -> vector<16x32xf32>
    %c32_157 = arith.constant 32 : index
    %c0_158 = arith.constant 0 : index
    %331 = vector.load %arg19[%c32_157, %c0_158] : memref<64x32xbf16, #tpu.memory_space<vmem>>, vector<32x32xbf16>
    %332 = arith.truncf %323 : vector<16x32xf32> to vector<16x32xbf16>
    %cst_159 = arith.constant dense<0.000000e+00> : vector<16x32xf32>
    %333 = tpu.matmul %332, %331, %cst_159 {dimension_numbers = #tpu.dot_dimension_numbers<[1], [0], [0], [1], [0, 0, 1, 1], [], []>} : vector<16x32xbf16>, vector<32x32xbf16>, vector<16x32xf32> -> vector<16x32xf32>
    %334 = arith.addf %330, %333 : vector<16x32xf32>
    %c0_160 = arith.constant 0 : index
    %c0_161 = arith.constant 0 : index
    %335 = vector.load %arg20[%c0_160, %c0_161] : memref<1x32xf32, #tpu.memory_space<vmem>>, vector<1x32xf32>
    %336 = vector.broadcast %335 : vector<1x32xf32> to vector<16x32xf32>
    %337 = arith.addf %334, %336 : vector<16x32xf32>
    %338 = vector.shape_cast %337 : vector<16x32xf32> to vector<2x8x32xf32>
    %c0_162 = arith.constant 0 : index
    %c0_163 = arith.constant 0 : index
    %c0_164 = arith.constant 0 : index
    %339 = vector.load %arg21[%c0_162, %c0_163, %c0_164] : memref<2x8x32xf32, #tpu.memory_space<vmem>>, vector<2x8x32xf32>
    tpu.vector_store %arg21[%c0_162, %c0_163, %c0_164], %338 {strides = array<i32>} : memref<2x8x32xf32, #tpu.memory_space<vmem>>, vector<2x8x32xf32>,
    return
  }
  func.func @transform_0(%arg0: i32) -> (i32, i32, i32) {
    %c0_i32 = arith.constant 0 : i32
    %c0_i32_0 = arith.constant 0 : i32
    %c0_i32_1 = arith.constant 0 : i32
    return %arg0, %c0_i32, %c0_i32_0 : i32, i32, i32
  }
  func.func @transform_1(%arg0: i32) -> (i32, i32, i32, i32) {
    %c0_i32 = arith.constant 0 : i32
    %c0_i32_0 = arith.constant 0 : i32
    %c0_i32_1 = arith.constant 0 : i32
    %c0_i32_2 = arith.constant 0 : i32
    return %arg0, %c0_i32, %c0_i32_0, %c0_i32_1 : i32, i32, i32, i32
  }
  func.func @transform_2(%arg0: i32) -> (i32, i32, i32) {
    %c0_i32 = arith.constant 0 : i32
    %c0_i32_0 = arith.constant 0 : i32
    %c0_i32_1 = arith.constant 0 : i32
    %c0_i32_2 = arith.constant 0 : i32
    return %c0_i32, %c0_i32_0, %c0_i32_1 : i32, i32, i32
  }
  func.func @transform_3(%arg0: i32) -> (i32, i32) {
    %c0_i32 = arith.constant 0 : i32
    %c0_i32_0 = arith.constant 0 : i32
    %c0_i32_1 = arith.constant 0 : i32
    return %c0_i32, %c0_i32_0 : i32, i32
  }
  func.func @transform_4(%arg0: i32) -> (i32, i32, i32) {
    %c0_i32 = arith.constant 0 : i32
    %c0_i32_0 = arith.constant 0 : i32
    %c0_i32_1 = arith.constant 0 : i32
    %c0_i32_2 = arith.constant 0 : i32
    return %c0_i32, %c0_i32_0, %c0_i32_1 : i32, i32, i32
  }
  func.func @transform_5(%arg0: i32) -> (i32, i32) {
    %c0_i32 = arith.constant 0 : i32
    %c0_i32_0 = arith.constant 0 : i32
    %c0_i32_1 = arith.constant 0 : i32
    return %c0_i32, %c0_i32_0 : i32, i32
  }
  func.func @transform_6(%arg0: i32) -> (i32, i32, i32) {
    %c0_i32 = arith.constant 0 : i32
    %c0_i32_0 = arith.constant 0 : i32
    %c0_i32_1 = arith.constant 0 : i32
    %c0_i32_2 = arith.constant 0 : i32
    return %c0_i32, %c0_i32_0, %c0_i32_1 : i32, i32, i32
  }
  func.func @transform_7(%arg0: i32) -> (i32, i32) {
    %c0_i32 = arith.constant 0 : i32
    %c0_i32_0 = arith.constant 0 : i32
    %c0_i32_1 = arith.constant 0 : i32
    return %c0_i32, %c0_i32_0 : i32, i32
  }
  func.func @transform_8(%arg0: i32) -> (i32, i32, i32) {
    %c0_i32 = arith.constant 0 : i32
    %c0_i32_0 = arith.constant 0 : i32
    %c0_i32_1 = arith.constant 0 : i32
    %c0_i32_2 = arith.constant 0 : i32
    return %c0_i32, %c0_i32_0, %c0_i32_1 : i32, i32, i32
  }
  func.func @transform_9(%arg0: i32) -> (i32, i32) {
    %c0_i32 = arith.constant 0 : i32
    %c0_i32_0 = arith.constant 0 : i32
    %c0_i32_1 = arith.constant 0 : i32
    return %c0_i32, %c0_i32_0 : i32, i32
  }
  func.func @transform_10(%arg0: i32) -> (i32, i32) {
    %c0_i32 = arith.constant 0 : i32
    %c0_i32_0 = arith.constant 0 : i32
    %c0_i32_1 = arith.constant 0 : i32
    return %c0_i32, %c0_i32_0 : i32, i32
  }
  func.func @transform_11(%arg0: i32) -> (i32, i32) {
    %c0_i32 = arith.constant 0 : i32
    %c0_i32_0 = arith.constant 0 : i32
    %c0_i32_1 = arith.constant 0 : i32
    return %c0_i32, %c0_i32_0 : i32, i32
  }
  func.func @transform_12(%arg0: i32) -> (i32, i32) {
    %c0_i32 = arith.constant 0 : i32
    %c0_i32_0 = arith.constant 0 : i32
    %c0_i32_1 = arith.constant 0 : i32
    return %c0_i32, %c0_i32_0 : i32, i32
  }
  func.func @transform_13(%arg0: i32) -> (i32, i32) {
    %c0_i32 = arith.constant 0 : i32
    %c0_i32_0 = arith.constant 0 : i32
    %c0_i32_1 = arith.constant 0 : i32
    return %c0_i32, %c0_i32_0 : i32, i32
  }
  func.func @transform_14(%arg0: i32) -> (i32, i32) {
    %c0_i32 = arith.constant 0 : i32
    %c0_i32_0 = arith.constant 0 : i32
    %c0_i32_1 = arith.constant 0 : i32
    return %c0_i32, %c0_i32_0 : i32, i32
  }
  func.func @transform_15(%arg0: i32) -> (i32, i32) {
    %c0_i32 = arith.constant 0 : i32
    %c0_i32_0 = arith.constant 0 : i32
    %c0_i32_1 = arith.constant 0 : i32
    return %c0_i32, %c0_i32_0 : i32, i32
  }
  func.func @transform_16(%arg0: i32) -> (i32, i32) {
    %c0_i32 = arith.constant 0 : i32
    %c0_i32_0 = arith.constant 0 : i32
    %c0_i32_1 = arith.constant 0 : i32
    return %c0_i32, %c0_i32_0 : i32, i32
  }
  func.func @transform_17(%arg0: i32) -> (i32, i32) {
    %c0_i32 = arith.constant 0 : i32
    %c0_i32_0 = arith.constant 0 : i32
    %c0_i32_1 = arith.constant 0 : i32
    return %c0_i32, %c0_i32_0 : i32, i32
  }
  func.func @transform_18(%arg0: i32) -> (i32, i32) {
    %c0_i32 = arith.constant 0 : i32
    %c0_i32_0 = arith.constant 0 : i32
    %c0_i32_1 = arith.constant 0 : i32
    return %c0_i32, %c0_i32_0 : i32, i32
  }
  func.func @transform_19(%arg0: i32) -> (i32, i32) {
    %c0_i32 = arith.constant 0 : i32
    %c0_i32_0 = arith.constant 0 : i32
    %c0_i32_1 = arith.constant 0 : i32
    return %c0_i32, %c0_i32_0 : i32, i32
  }
  func.func @transform_20(%arg0: i32) -> (i32, i32, i32) {
    %c0_i32 = arith.constant 0 : i32
    %c0_i32_0 = arith.constant 0 : i32
    %c0_i32_1 = arith.constant 0 : i32
    return %arg0, %c0_i32, %c0_i32_0 : i32, i32, i32
  }
  func.func @transform_21(%arg0: i32) -> (i32, i32, i32) {
    %c0_i32 = arith.constant 0 : i32
    %c0_i32_0 = arith.constant 0 : i32
    %c0_i32_1 = arith.constant 0 : i32
    return %arg0, %c0_i32, %c0_i32_0 : i32, i32, i32
  }
  func.func @transform_22(%arg0: i32) -> (i32, i32, i32) {
    %c0_i32 = arith.constant 0 : i32
    %c0_i32_0 = arith.constant 0 : i32
    %c0_i32_1 = arith.constant 0 : i32
    return %arg0, %c0_i32, %c0_i32_0 : i32, i32, i32
  }
  func.func @transform_23(%arg0: i32) -> (i32, i32, i32) {
    %c0_i32 = arith.constant 0 : i32
    %c0_i32_0 = arith.constant 0 : i32
    %c0_i32_1 = arith.constant 0 : i32
    return %arg0, %c0_i32, %c0_i32_0 : i32, i32, i32
  }
}

</mosaic_0001>

<llo_original>
// kernel: temporal_hierarchical_attention_forward.1
$region0: #{temporal_hierarchical_attention_forward.1}
  #allocation0 [shape = 'u32[]', space=smem, size = 0x4, offset = 0x4, fixed_abs, tag = 'smem constant byte address 0x4 - core index']
  #allocation1 [shape = 'u32[72,128]{1,0:T(1,128)}', space=vmem, size = 0x9000, scoped, tag = 'internal scratch']
  #allocation2 [shape = 'f32[1,1]{1,0:T(1,128)S(1)}', space=vmem, size = 0x200, scoped, tag = 'scoped memory for temporal_hierarchical_attention_forward.1']
  %s0 = inlined_call_operand.vmem [shape: f32[2,8,32], index: 0, kind: input, shape index: {}]
  %s1 = inlined_call_operand.hbm [shape: f32[2,8,8,32], index: 1, kind: input, shape index: {}]
  %s2 = inlined_call_operand.vmem [shape: bf16[4,32,32], index: 2, kind: input, shape index: {}]
  %s3 = inlined_call_operand.hbm [shape: f32[4,32], index: 3, kind: input, shape index: {}]
  %s4 = inlined_call_operand.hbm [shape: bf16[4,32,32], index: 4, kind: input, shape index: {}]
  %s5 = inlined_call_operand.hbm [shape: f32[4,32], index: 5, kind: input, shape index: {}]
  %s6 = inlined_call_operand.hbm [shape: bf16[4,32,32], index: 6, kind: input, shape index: {}]
  %s7 = inlined_call_operand.vmem [shape: f32[1,32], index: 7, kind: input, shape index: {}]
  %s8 = inlined_call_operand.vmem [shape: f32[2,8,32], index: 8, kind: input, shape index: {}]
  %s9 = inlined_call_operand.vmem [shape: f32[1,32], index: 9, kind: input, shape index: {}]
  %s10 = inlined_call_operand.vmem [shape: bf16[32,16], index: 10, kind: input, shape index: {}]
  %s11 = inlined_call_operand.hbm [shape: f32[1,16], index: 11, kind: input, shape index: {}]
  %s12 = inlined_call_operand.hbm [shape: f32[1,16], index: 12, kind: input, shape index: {}]
  %s13 = inlined_call_operand.<no memory space> [shape: f32[1,1], index: 13, kind: input, shape index: {}]
  %s14 = inlined_call_operand.hbm [shape: f32[2,32], index: 14, kind: input, shape index: {}]
  %s15 = inlined_call_operand.vmem [shape: bf16[64,32], index: 15, kind: input, shape index: {}]
  %s16 = inlined_call_operand.hbm [shape: f32[4,32], index: 16, kind: input, shape index: {}]
  %s17 = inlined_call_operand.hbm [shape: bf16[32,32], index: 17, kind: input, shape index: {}]
  %s18 = inlined_call_operand.vmem [shape: bf16[64,32], index: 18, kind: input, shape index: {}]
  %s19 = inlined_call_operand.hbm [shape: f32[1,32], index: 19, kind: input, shape index: {}]
  %s20 = inlined_call_operand.hbm [shape: f32[2,8,32], index: 20, kind: output, shape index: {0}]
  %s21 = inlined_call_operand.vmem [shape: f32[1,4,4], index: 21, kind: output, shape index: {1}]
  %s22 = inlined_call_operand.hbm [shape: f32[2,2,2], index: 22, kind: output, shape index: {2}]
  %s23 = inlined_call_operand.vmem [shape: f32[2,8,8], index: 23, kind: output, shape index: {3}]
  %24 = xla_tuple %s20, %s21, %s22, %s23
  %s25 = sld [smem:[#allocation0]]
  $region158: #{temporal_hierarchical_attention_forward.1} parent=0
    _
  %s27 = ssub.s32 1, %s25
  %s28 = scalar_select 0, %s27, %s25
  %v29 = vstv %s13
  %30 = vst [vmem:[#allocation2] sm:$0x1] %v29
  $region1: #{temporal_hierarchical_attention_forward.1} parent=0
    #allocation3 [shape = 'u8[65536]{0}', space=vmem, size = 0x10000, scoped, tag = 'input window, operand 1, single buffered']
    #allocation4 [shape = 's32[1]{0}', space=sflag, size = 0x4, scoped, tag = 'scoped memory for temporal_hierarchical_attention_forward.1']
    #allocation5 [shape = 's32[1]{0}', space=sflag, size = 0x4, scoped, tag = 'scoped memory for temporal_hierarchical_attention_forward.1']
    #allocation6 [shape = 'u8[2048]{0}', space=vmem, size = 0x800, scoped, tag = 'input window, operand 3, single buffered']
    #allocation7 [shape = 's32[1]{0}', space=sflag, size = 0x4, scoped, tag = 'scoped memory for temporal_hierarchical_attention_forward.1']
    #allocation8 [shape = 'u8[32768]{0}', space=vmem, size = 0x8000, scoped, tag = 'input window, operand 4, single buffered']
    #allocation9 [shape = 'u8[2048]{0}', space=vmem, size = 0x800, scoped, tag = 'input window, operand 5, single buffered']
    #allocation10 [shape = 's32[1]{0}', space=sflag, size = 0x4, scoped, tag = 'scoped memory for temporal_hierarchical_attention_forward.1']
    #allocation11 [shape = 'u8[32768]{0}', space=vmem, size = 0x8000, scoped, tag = 'input window, operand 6, single buffered']
    #allocation12 [shape = 'u8[512]{0}', space=vmem, size = 0x400, scoped, tag = 'input window, operand 11, single buffered']
    #allocation13 [shape = 's32[1]{0}', space=sflag, size = 0x4, scoped, tag = 'scoped memory for temporal_hierarchical_attention_forward.1']
    #allocation14 [shape = 'u8[512]{0}', space=vmem, size = 0x400, scoped, tag = 'input window, operand 12, single buffered']
    #allocation15 [shape = 'u8[1024]{0}', space=vmem, size = 0x400, scoped, tag = 'input window, operand 14, single buffered']
    #allocation16 [shape = 's32[1]{0}', space=sflag, size = 0x4, scoped, tag = 'scoped memory for temporal_hierarchical_attention_forward.1']
    #allocation17 [shape = 'u8[2048]{0}', space=vmem, size = 0x800, scoped, tag = 'input window, operand 16, single buffered']
    #allocation18 [shape = 'u8[8192]{0}', space=vmem, size = 0x2000, scoped, tag = 'input window, operand 17, single buffered']
    #allocation19 [shape = 's32[1]{0}', space=sflag, size = 0x4, scoped, tag = 'scoped memory for temporal_hierarchical_attention_forward.1']
    #allocation20 [shape = 'u8[512]{0}', space=vmem, size = 0x400, scoped, tag = 'input window, operand 19, single buffered']
    #allocation21 [shape = 'u8[8192]{0}', space=vmem, size = 0x2000, scoped, tag = 'output window, operand 0, single buffered']
    #allocation22 [shape = 'u8[2048]{0}', space=vmem, size = 0x800, scoped, tag = 'output window, operand 2, single buffered']
    #allocation23 [shape = 's32[1]{0}', space=sflag, size = 0x4, scoped, tag = 'scoped memory for temporal_hierarchical_attention_forward.1']
    %31 = vsyncpa [#allocation4], 0
    %32 = vsyncpa [#allocation7], 0
    %33 = vsyncpa [#allocation10], 0
    %34 = vsyncpa [#allocation13], 0
    %35 = vsyncpa [#allocation16], 0
    %36 = vsyncpa [#allocation19], 0
    %37 = vsyncpa [#allocation5], 0
    %38 = vsyncpa [#allocation23], 0
    // Predicated region
    $region2: #{temporal_hierarchical_attention_forward.1} parent=1 // pred_check
      _
    $region3: #{temporal_hierarchical_attention_forward.1} parent=1 // pred_check_branch
      %40 = sbr.rel (0) target = $region5
    $region4: #{temporal_hierarchical_attention_forward.1} parent=1 // pred_region
      _
    $region5: #{temporal_hierarchical_attention_forward.1} parent=1 // pred_fallthru
      _
    // Predicated region
    $region6: #{temporal_hierarchical_attention_forward.1} parent=1 // pred_check
      _
    $region7: #{temporal_hierarchical_attention_forward.1} parent=1 // pred_check_branch
      %42 = sbr.rel (0) target = $region9
    $region8: #{temporal_hierarchical_attention_forward.1} parent=1 // pred_region
      %44 = vsyncadd [#allocation4], 0
      %s45 = sshll.u32 %s1, 4
      %s46 = int_to_ptr.hbm [resolvable:$true] %s45
      %s47 = sshll.u32 [#allocation3], 4
      %s48 = int_to_ptr.vmem [resolvable:$true] %s47
      %53 = dma.hbm_to_vmem [thread:$0]  %s46, 2048, %s48, [#allocation4], 128, 128, 8
    $region9: #{temporal_hierarchical_attention_forward.1} parent=1 // pred_fallthru
      _
    // Predicated region
    $region10: #{temporal_hierarchical_attention_forward.1} parent=1 // pred_check
      _
    $region11: #{temporal_hierarchical_attention_forward.1} parent=1 // pred_check_branch
      %55 = sbr.rel (0) target = $region13
    $region12: #{temporal_hierarchical_attention_forward.1} parent=1 // pred_region
      _
    $region13: #{temporal_hierarchical_attention_forward.1} parent=1 // pred_fallthru
      _
    // Predicated region
    $region14: #{temporal_hierarchical_attention_forward.1} parent=1 // pred_check
      _
    $region15: #{temporal_hierarchical_attention_forward.1} parent=1 // pred_check_branch
      %57 = sbr.rel (0) target = $region17
    $region16: #{temporal_hierarchical_attention_forward.1} parent=1 // pred_region
      %59 = vsyncadd [#allocation7], 0
      %s61 = sshll.u32 %s3, 4
      %s62 = int_to_ptr.hbm [resolvable:$true] %s61
      %s63 = sshll.u32 [#allocation6], 4
      %s64 = int_to_ptr.vmem [resolvable:$true] %s63
      %66 = dma.hbm_to_vmem [thread:$0]  %s62, 64, %s64, [#allocation7]
    $region17: #{temporal_hierarchical_attention_forward.1} parent=1 // pred_fallthru
      _
    // Predicated region
    $region18: #{temporal_hierarchical_attention_forward.1} parent=1 // pred_check
      _
    $region19: #{temporal_hierarchical_attention_forward.1} parent=1 // pred_check_branch
      %68 = sbr.rel (0) target = $region21
    $region20: #{temporal_hierarchical_attention_forward.1} parent=1 // pred_region
      %70 = vsyncadd [#allocation7], 0
      %s71 = sshll.u32 %s4, 4
      %s72 = int_to_ptr.hbm [resolvable:$true] %s71
      %s73 = sshll.u32 [#allocation8], 4
      %s74 = int_to_ptr.vmem [resolvable:$true] %s73
      %79 = dma.hbm_to_vmem [thread:$0]  %s72, 1024, %s74, [#allocation7], 64, 64, 4
    $region21: #{temporal_hierarchical_attention_forward.1} parent=1 // pred_fallthru
      _
    // Predicated region
    $region22: #{temporal_hierarchical_attention_forward.1} parent=1 // pred_check
      _
    $region23: #{temporal_hierarchical_attention_forward.1} parent=1 // pred_check_branch
      %81 = sbr.rel (0) target = $region25
    $region24: #{temporal_hierarchical_attention_forward.1} parent=1 // pred_region
      %83 = vsyncadd [#allocation10], 0
      %s85 = sshll.u32 %s5, 4
      %s86 = int_to_ptr.hbm [resolvable:$true] %s85
      %s87 = sshll.u32 [#allocation9], 4
      %s88 = int_to_ptr.vmem [resolvable:$true] %s87
      %90 = dma.hbm_to_vmem [thread:$0]  %s86, 64, %s88, [#allocation10]
    $region25: #{temporal_hierarchical_attention_forward.1} parent=1 // pred_fallthru
      _
    // Predicated region
    $region26: #{temporal_hierarchical_attention_forward.1} parent=1 // pred_check
      _
    $region27: #{temporal_hierarchical_attention_forward.1} parent=1 // pred_check_branch
      %92 = sbr.rel (0) target = $region29
    $region28: #{temporal_hierarchical_attention_forward.1} parent=1 // pred_region
      %94 = vsyncadd [#allocation10], 0
      %s95 = sshll.u32 %s6, 4
      %s96 = int_to_ptr.hbm [resolvable:$true] %s95
      %s97 = sshll.u32 [#allocation11], 4
      %s98 = int_to_ptr.vmem [resolvable:$true] %s97
      %103 = dma.hbm_to_vmem [thread:$0]  %s96, 1024, %s98, [#allocation10], 64, 64, 4
    $region29: #{temporal_hierarchical_attention_forward.1} parent=1 // pred_fallthru
      _
    // Predicated region
    $region30: #{temporal_hierarchical_attention_forward.1} parent=1 // pred_check
      _
    $region31: #{temporal_hierarchical_attention_forward.1} parent=1 // pred_check_branch
      %105 = sbr.rel (0) target = $region33
    $region32: #{temporal_hierarchical_attention_forward.1} parent=1 // pred_region
      _
    $region33: #{temporal_hierarchical_attention_forward.1} parent=1 // pred_fallthru
      _
    // Predicated region
    $region34: #{temporal_hierarchical_attention_forward.1} parent=1 // pred_check
      _
    $region35: #{temporal_hierarchical_attention_forward.1} parent=1 // pred_check_branch
      %107 = sbr.rel (0) target = $region37
    $region36: #{temporal_hierarchical_attention_forward.1} parent=1 // pred_region
      _
    $region37: #{temporal_hierarchical_attention_forward.1} parent=1 // pred_fallthru
      _
    // Predicated region
    $region38: #{temporal_hierarchical_attention_forward.1} parent=1 // pred_check
      _
    $region39: #{temporal_hierarchical_attention_forward.1} parent=1 // pred_check_branch
      %109 = sbr.rel (0) target = $region41
    $region40: #{temporal_hierarchical_attention_forward.1} parent=1 // pred_region
      _
    $region41: #{temporal_hierarchical_attention_forward.1} parent=1 // pred_fallthru
      _
    // Predicated region
    $region42: #{temporal_hierarchical_attention_forward.1} parent=1 // pred_check
      _
    $region43: #{temporal_hierarchical_attention_forward.1} parent=1 // pred_check_branch
      %111 = sbr.rel (0) target = $region45
    $region44: #{temporal_hierarchical_attention_forward.1} parent=1 // pred_region
      _
    $region45: #{temporal_hierarchical_attention_forward.1} parent=1 // pred_fallthru
      _
    // Predicated region
    $region46: #{temporal_hierarchical_attention_forward.1} parent=1 // pred_check
      _
    $region47: #{temporal_hierarchical_attention_forward.1} parent=1 // pred_check_branch
      %113 = sbr.rel (0) target = $region49
    $region48: #{temporal_hierarchical_attention_forward.1} parent=1 // pred_region
      %115 = vsyncadd [#allocation13], 0
      %s117 = sshll.u32 %s11, 4
      %s118 = int_to_ptr.hbm [resolvable:$true] %s117
      %s119 = sshll.u32 [#allocation12], 4
      %s120 = int_to_ptr.vmem [resolvable:$true] %s119
      %122 = dma.hbm_to_vmem [thread:$0]  %s118, 16, %s120, [#allocation13]
    $region49: #{temporal_hierarchical_attention_forward.1} parent=1 // pred_fallthru
      _
    // Predicated region
    $region50: #{temporal_hierarchical_attention_forward.1} parent=1 // pred_check
      _
    $region51: #{temporal_hierarchical_attention_forward.1} parent=1 // pred_check_branch
      %124 = sbr.rel (0) target = $region53
    $region52: #{temporal_hierarchical_attention_forward.1} parent=1 // pred_region
      %126 = vsyncadd [#allocation13], 0
      %s128 = sshll.u32 %s12, 4
      %s129 = int_to_ptr.hbm [resolvable:$true] %s128
      %s130 = sshll.u32 [#allocation14], 4
      %s131 = int_to_ptr.vmem [resolvable:$true] %s130
      %133 = dma.hbm_to_vmem [thread:$0]  %s129, 16, %s131, [#allocation13]
    $region53: #{temporal_hierarchical_attention_forward.1} parent=1 // pred_fallthru
      _
    // Predicated region
    $region54: #{temporal_hierarchical_attention_forward.1} parent=1 // pred_check
      _
    $region55: #{temporal_hierarchical_attention_forward.1} parent=1 // pred_check_branch
      %135 = sbr.rel (0) target = $region57
    $region56: #{temporal_hierarchical_attention_forward.1} parent=1 // pred_region
      _
    $region57: #{temporal_hierarchical_attention_forward.1} parent=1 // pred_fallthru
      _
    // Predicated region
    $region58: #{temporal_hierarchical_attention_forward.1} parent=1 // pred_check
      _
    $region59: #{temporal_hierarchical_attention_forward.1} parent=1 // pred_check_branch
      %137 = sbr.rel (0) target = $region61
    $region60: #{temporal_hierarchical_attention_forward.1} parent=1 // pred_region
      %139 = vsyncadd [#allocation16], 0
      %s141 = sshll.u32 %s14, 4
      %s142 = int_to_ptr.hbm [resolvable:$true] %s141
      %s143 = sshll.u32 [#allocation15], 4
      %s144 = int_to_ptr.vmem [resolvable:$true] %s143
      %146 = dma.hbm_to_vmem [thread:$0]  %s142, 32, %s144, [#allocation16]
    $region61: #{temporal_hierarchical_attention_forward.1} parent=1 // pred_fallthru
      _
    // Predicated region
    $region62: #{temporal_hierarchical_attention_forward.1} parent=1 // pred_check
      _
    $region63: #{temporal_hierarchical_attention_forward.1} parent=1 // pred_check_branch
      %148 = sbr.rel (0) target = $region65
    $region64: #{temporal_hierarchical_attention_forward.1} parent=1 // pred_region
      _
    $region65: #{temporal_hierarchical_attention_forward.1} parent=1 // pred_fallthru
      _
    // Predicated region
    $region66: #{temporal_hierarchical_attention_forward.1} parent=1 // pred_check
      _
    $region67: #{temporal_hierarchical_attention_forward.1} parent=1 // pred_check_branch
      %150 = sbr.rel (0) target = $region69
    $region68: #{temporal_hierarchical_attention_forward.1} parent=1 // pred_region
      %152 = vsyncadd [#allocation16], 0
      %s154 = sshll.u32 %s16, 4
      %s155 = int_to_ptr.hbm [resolvable:$true] %s154
      %s156 = sshll.u32 [#allocation17], 4
      %s157 = int_to_ptr.vmem [resolvable:$true] %s156
      %159 = dma.hbm_to_vmem [thread:$0]  %s155, 64, %s157, [#allocation16]
    $region69: #{temporal_hierarchical_attention_forward.1} parent=1 // pred_fallthru
      _
    // Predicated region
    $region70: #{temporal_hierarchical_attention_forward.1} parent=1 // pred_check
      _
    $region71: #{temporal_hierarchical_attention_forward.1} parent=1 // pred_check_branch
      %161 = sbr.rel (0) target = $region73
    $region72: #{temporal_hierarchical_attention_forward.1} parent=1 // pred_region
      %163 = vsyncadd [#allocation19], 0
      %s164 = sshll.u32 %s17, 4
      %s165 = int_to_ptr.hbm [resolvable:$true] %s164
      %s166 = sshll.u32 [#allocation18], 4
      %s167 = int_to_ptr.vmem [resolvable:$true] %s166
      %172 = dma.hbm_to_vmem [thread:$0]  %s165, 256, %s167, [#allocation19], 64, 64, 4
    $region73: #{temporal_hierarchical_attention_forward.1} parent=1 // pred_fallthru
      _
    // Predicated region
    $region74: #{temporal_hierarchical_attention_forward.1} parent=1 // pred_check
      _
    $region75: #{temporal_hierarchical_attention_forward.1} parent=1 // pred_check_branch
      %174 = sbr.rel (0) target = $region77
    $region76: #{temporal_hierarchical_attention_forward.1} parent=1 // pred_region
      _
    $region77: #{temporal_hierarchical_attention_forward.1} parent=1 // pred_fallthru
      _
    // Predicated region
    $region78: #{temporal_hierarchical_attention_forward.1} parent=1 // pred_check
      _
    $region79: #{temporal_hierarchical_attention_forward.1} parent=1 // pred_check_branch
      %176 = sbr.rel (0) target = $region81
    $region80: #{temporal_hierarchical_attention_forward.1} parent=1 // pred_region
      %178 = vsyncadd [#allocation19], 0
      %s180 = sshll.u32 %s19, 4
      %s181 = int_to_ptr.hbm [resolvable:$true] %s180
      %s182 = sshll.u32 [#allocation20], 4
      %s183 = int_to_ptr.vmem [resolvable:$true] %s182
      %185 = dma.hbm_to_vmem [thread:$0]  %s181, 16, %s183, [#allocation19]
    $region81: #{temporal_hierarchical_attention_forward.1} parent=1 // pred_fallthru
      _
    // Predicated region
    $region82: #{temporal_hierarchical_attention_forward.1} parent=1 // pred_check
      _
    $region83: #{temporal_hierarchical_attention_forward.1} parent=1 // pred_check_branch
      %187 = sbr.rel (0) target = $region85
    $region84: #{temporal_hierarchical_attention_forward.1} parent=1 // pred_region
      %189 = dma.done [#allocation4], 2048
    $region85: #{temporal_hierarchical_attention_forward.1} parent=1 // pred_fallthru
      _
    // Predicated region
    $region86: #{temporal_hierarchical_attention_forward.1} parent=1 // pred_check
      _
    $region87: #{temporal_hierarchical_attention_forward.1} parent=1 // pred_check_branch
      %191 = sbr.rel (0) target = $region89
    $region88: #{temporal_hierarchical_attention_forward.1} parent=1 // pred_region
      %193 = dma.done [#allocation7], 64
    $region89: #{temporal_hierarchical_attention_forward.1} parent=1 // pred_fallthru
      _
    // Predicated region
    $region90: #{temporal_hierarchical_attention_forward.1} parent=1 // pred_check
      _
    $region91: #{temporal_hierarchical_attention_forward.1} parent=1 // pred_check_branch
      %195 = sbr.rel (0) target = $region93
    $region92: #{temporal_hierarchical_attention_forward.1} parent=1 // pred_region
      %197 = dma.done [#allocation7], 1024
    $region93: #{temporal_hierarchical_attention_forward.1} parent=1 // pred_fallthru
      _
    // Predicated region
    $region94: #{temporal_hierarchical_attention_forward.1} parent=1 // pred_check
      _
    $region95: #{temporal_hierarchical_attention_forward.1} parent=1 // pred_check_branch
      %199 = sbr.rel (0) target = $region97
    $region96: #{temporal_hierarchical_attention_forward.1} parent=1 // pred_region
      %201 = dma.done [#allocation10], 64
    $region97: #{temporal_hierarchical_attention_forward.1} parent=1 // pred_fallthru
      _
    // Predicated region
    $region98: #{temporal_hierarchical_attention_forward.1} parent=1 // pred_check
      _
    $region99: #{temporal_hierarchical_attention_forward.1} parent=1 // pred_check_branch
      %203 = sbr.rel (0) target = $region101
    $region100: #{temporal_hierarchical_attention_forward.1} parent=1 // pred_region
      %205 = dma.done [#allocation10], 1024
    $region101: #{temporal_hierarchical_attention_forward.1} parent=1 // pred_fallthru
      _
    // Predicated region
    $region102: #{temporal_hierarchical_attention_forward.1} parent=1 // pred_check
      _
    $region103: #{temporal_hierarchical_attention_forward.1} parent=1 // pred_check_branch
      %207 = sbr.rel (0) target = $region105
    $region104: #{temporal_hierarchical_attention_forward.1} parent=1 // pred_region
      %209 = dma.done [#allocation13], 16
    $region105: #{temporal_hierarchical_attention_forward.1} parent=1 // pred_fallthru
      _
    // Predicated region
    $region106: #{temporal_hierarchical_attention_forward.1} parent=1 // pred_check
      _
    $region107: #{temporal_hierarchical_attention_forward.1} parent=1 // pred_check_branch
      %211 = sbr.rel (0) target = $region109
    $region108: #{temporal_hierarchical_attention_forward.1} parent=1 // pred_region
      %213 = dma.done [#allocation13], 16
    $region109: #{temporal_hierarchical_attention_forward.1} parent=1 // pred_fallthru
      _
    // Predicated region
    $region110: #{temporal_hierarchical_attention_forward.1} parent=1 // pred_check
      _
    $region111: #{temporal_hierarchical_attention_forward.1} parent=1 // pred_check_branch
      %215 = sbr.rel (0) target = $region113
    $region112: #{temporal_hierarchical_attention_forward.1} parent=1 // pred_region
      %217 = dma.done [#allocation16], 32
    $region113: #{temporal_hierarchical_attention_forward.1} parent=1 // pred_fallthru
      _
    // Predicated region
    $region114: #{temporal_hierarchical_attention_forward.1} parent=1 // pred_check
      _
    $region115: #{temporal_hierarchical_attention_forward.1} parent=1 // pred_check_branch
      %219 = sbr.rel (0) target = $region117
    $region116: #{temporal_hierarchical_attention_forward.1} parent=1 // pred_region
      %221 = dma.done [#allocation16], 64
    $region117: #{temporal_hierarchical_attention_forward.1} parent=1 // pred_fallthru
      _
    // Predicated region
    $region118: #{temporal_hierarchical_attention_forward.1} parent=1 // pred_check
      _
    $region119: #{temporal_hierarchical_attention_forward.1} parent=1 // pred_check_branch
      %223 = sbr.rel (0) target = $region121
    $region120: #{temporal_hierarchical_attention_forward.1} parent=1 // pred_region
      %225 = dma.done [#allocation19], 256
    $region121: #{temporal_hierarchical_attention_forward.1} parent=1 // pred_fallthru
      _
    // Predicated region
    $region122: #{temporal_hierarchical_attention_forward.1} parent=1 // pred_check
      _
    $region123: #{temporal_hierarchical_attention_forward.1} parent=1 // pred_check_branch
      %227 = sbr.rel (0) target = $region125
    $region124: #{temporal_hierarchical_attention_forward.1} parent=1 // pred_region
      %229 = dma.done [#allocation19], 16
    $region125: #{temporal_hierarchical_attention_forward.1} parent=1 // pred_fallthru
      _
    %v231 = vld [vmem:[%s0] sm:$0xff]
    %v232 = vld [vmem:[%s0 + $0x8] sm:$0xff]
    %v233 = vld [vmem:[%s2] sm:$0xf]
    %v234 = vld [vmem:[%s2 + $0x4] sm:$0xf]
    %v235 = vld [vmem:[%s2 + $0x8] sm:$0xf]
    %v236 = vld [vmem:[%s2 + $0xc] sm:$0xf]
    %v237 = vpack.c.bf16 %v232, %v231
    %v238 = vld [vmem:[#allocation6] sm:$0x1]
    %v239 = vperm.slane %v238, 0
    %v244 = vunpack.c.l.b16 %v233
    %v245 = vunpack.c.l.b16 %v234
    %v246 = vunpack.c.l.b16 %v235
    %v247 = vunpack.c.l.b16 %v236
    %v248 = vpack.c.b16 %v245, %v244
    %v249 = vpack.c.b16 %v247, %v246
    %vm252 = vcmask 261120
    %v254 = vsel %vm252, %v237, 0
    %256 = vmatpush.bf16.msra.mxu0 0
    %257 = vmatpush.bf16.msra.mxu0 0
    %258 = vmatpush.bf16.msra.mxu0 0
    %259 = vmatpush.bf16.msra.mxu0 0
    %260 = vmatpush.bf16.msra.mxu0 0
    %261 = vmatpush.bf16.msra.mxu0 0
    %262 = vmatpush.bf16.msra.mxu0 %v249
    %263 = vmatpush.bf16.msra.mxu0 %v248
    %264 = vmatmul.bf16.gmra.mxu0 %v254
    %v265 = vpop.f32.mrf.mxu0
    %v266 = vadd.f32 %v239, %v265
    %v267 = vpop.f32.mrf.mxu0
    %v268 = vadd.f32 %v239, %v267
    %269 = vdwg.mxu0
    %s270 = scalar_lea.vmem %s2, 16
    %v271 = vld [vmem:[%s270] sm:$0xf]
    %v272 = vld [vmem:[%s270 + $0x4] sm:$0xf]
    %v273 = vld [vmem:[%s270 + $0x8] sm:$0xf]
    %v274 = vld [vmem:[%s270 + $0xc] sm:$0xf]
    %v275 = vld [vmem:[#allocation6 + $0x1] sm:$0x1]
    %v276 = vperm.slane %v275, 0
    %v281 = vunpack.c.l.b16 %v271
    %v282 = vunpack.c.l.b16 %v272
    %v283 = vunpack.c.l.b16 %v273
    %v284 = vunpack.c.l.b16 %v274
    %v285 = vpack.c.b16 %v282, %v281
    %v286 = vpack.c.b16 %v284, %v283
    %289 = vmatpush.bf16.msra.mxu0 0
    %290 = vmatpush.bf16.msra.mxu0 0
    %291 = vmatpush.bf16.msra.mxu0 0
    %292 = vmatpush.bf16.msra.mxu0 0
    %293 = vmatpush.bf16.msra.mxu0 0
    %294 = vmatpush.bf16.msra.mxu0 0
    %295 = vmatpush.bf16.msra.mxu0 %v286
    %296 = vmatpush.bf16.msra.mxu0 %v285
    %297 = vmatmul.bf16.gmra.mxu0 %v254
    %v298 = vpop.f32.mrf.mxu0
    %v299 = vadd.f32 %v276, %v298
    %v300 = vpop.f32.mrf.mxu0
    %v301 = vadd.f32 %v276, %v300
    %302 = vdwg.mxu0
    %s303 = scalar_lea.vmem %s2, 32
    %v304 = vld [vmem:[%s303] sm:$0xf]
    %v305 = vld [vmem:[%s303 + $0x4] sm:$0xf]
    %v306 = vld [vmem:[%s303 + $0x8] sm:$0xf]
    %v307 = vld [vmem:[%s303 + $0xc] sm:$0xf]
    %v308 = vld [vmem:[#allocation6 + $0x2] sm:$0x1]
    %v309 = vperm.slane %v308, 0
    %v314 = vunpack.c.l.b16 %v304
    %v315 = vunpack.c.l.b16 %v305
    %v316 = vunpack.c.l.b16 %v306
    %v317 = vunpack.c.l.b16 %v307
    %v318 = vpack.c.b16 %v315, %v314
    %v319 = vpack.c.b16 %v317, %v316
    %322 = vmatpush.bf16.msra.mxu0 0
    %323 = vmatpush.bf16.msra.mxu0 0
    %324 = vmatpush.bf16.msra.mxu0 0
    %325 = vmatpush.bf16.msra.mxu0 0
    %326 = vmatpush.bf16.msra.mxu0 0
    %327 = vmatpush.bf16.msra.mxu0 0
    %328 = vmatpush.bf16.msra.mxu0 %v319
    %329 = vmatpush.bf16.msra.mxu0 %v318
    %330 = vmatmul.bf16.gmra.mxu0 %v254
    %v331 = vpop.f32.mrf.mxu0
    %v332 = vadd.f32 %v309, %v331
    %v333 = vpop.f32.mrf.mxu0
    %v334 = vadd.f32 %v309, %v333
    %335 = vdwg.mxu0
    %v338 = vrot.slane %v266, 4
    %v339 = vrot.slane %v268, 4
    %v344 = vrot.slane %v299, 4
    %v345 = vrot.slane %v301, 4
    %v350 = vrot.slane %v332, 4
    %v351 = vrot.slane %v334, 4
    %v354 = vpack.c.bf16 %v266, %v266
    %v355 = vpack.c.bf16 %v338, %v338
    %v356 = vpack.c.bf16 %v268, %v268
    %v357 = vpack.c.bf16 %v339, %v339
    %v358 = vpack.c.bf16 %v299, %v299
    %v359 = vpack.c.bf16 %v344, %v344
    %v360 = vpack.c.bf16 %v301, %v301
    %v361 = vpack.c.bf16 %v345, %v345
    %vm362 = vcmask 130048
    %v364 = vsel %vm362, %v354, 0
    %v367 = vsel %vm362, %v358, 0
    %369 = vmatpush.bf16.xpose.msra.mxu0 0
    %370 = vmatpush.bf16.xpose.msra.mxu0 0
    %371 = vmatpush.bf16.xpose.msra.mxu0 0
    %372 = vmatpush.bf16.xpose.msra.mxu0 0
    %373 = vmatpush.bf16.xpose.msra.mxu0 0
    %374 = vmatpush.bf16.xpose.msra.mxu0 0
    %375 = vmatpush.bf16.xpose.msra.mxu0 0
    %376 = vmatpush.bf16.xpose.msra.mxu0 %v367
    %377 = vmatmul.bf16.gmra.mxu0 %v364
    %v378 = vpop.f32.mrf.mxu0
    %v379 = vadd.f32 0.0, %v378
    %v380 = vpop.f32.mrf.mxu0
    %381 = vdwg.mxu0
    %v383 = vsel %vm362, %v355, 0
    %v386 = vsel %vm362, %v359, 0
    %388 = vmatpush.bf16.xpose.msra.mxu0 0
    %389 = vmatpush.bf16.xpose.msra.mxu0 0
    %390 = vmatpush.bf16.xpose.msra.mxu0 0
    %391 = vmatpush.bf16.xpose.msra.mxu0 0
    %392 = vmatpush.bf16.xpose.msra.mxu0 0
    %393 = vmatpush.bf16.xpose.msra.mxu0 0
    %394 = vmatpush.bf16.xpose.msra.mxu0 0
    %395 = vmatpush.bf16.xpose.msra.mxu0 %v386
    %396 = vmatmul.bf16.gmra.mxu0 %v383
    %v397 = vpop.f32.mrf.mxu0
    %v398 = vadd.f32 0.0, %v397
    %v399 = vpop.f32.mrf.mxu0
    %400 = vdwg.mxu0
    %v402 = vsel %vm362, %v356, 0
    %v405 = vsel %vm362, %v360, 0
    %407 = vmatpush.bf16.xpose.msra.mxu0 0
    %408 = vmatpush.bf16.xpose.msra.mxu0 0
    %409 = vmatpush.bf16.xpose.msra.mxu0 0
    %410 = vmatpush.bf16.xpose.msra.mxu0 0
    %411 = vmatpush.bf16.xpose.msra.mxu0 0
    %412 = vmatpush.bf16.xpose.msra.mxu0 0
    %413 = vmatpush.bf16.xpose.msra.mxu0 0
    %414 = vmatpush.bf16.xpose.msra.mxu0 %v405
    %415 = vmatmul.bf16.gmra.mxu0 %v402
    %v416 = vpop.f32.mrf.mxu0
    %v417 = vadd.f32 0.0, %v416
    %v418 = vpop.f32.mrf.mxu0
    %419 = vdwg.mxu0
    %v421 = vsel %vm362, %v357, 0
    %v424 = vsel %vm362, %v361, 0
    %426 = vmatpush.bf16.xpose.msra.mxu0 0
    %427 = vmatpush.bf16.xpose.msra.mxu0 0
    %428 = vmatpush.bf16.xpose.msra.mxu0 0
    %429 = vmatpush.bf16.xpose.msra.mxu0 0
    %430 = vmatpush.bf16.xpose.msra.mxu0 0
    %431 = vmatpush.bf16.xpose.msra.mxu0 0
    %432 = vmatpush.bf16.xpose.msra.mxu0 0
    %433 = vmatpush.bf16.xpose.msra.mxu0 %v424
    %434 = vmatmul.bf16.gmra.mxu0 %v421
    %v435 = vpop.f32.mrf.mxu0
    %v436 = vadd.f32 0.0, %v435
    %v437 = vpop.f32.mrf.mxu0
    %438 = vdwg.mxu0
    %vm439 = vcmask 27648
    %v440 = vsel %vm439, %v379, -inf
    %441 = vmax.xlane.f32.xlu0 %v440
    %v442 = vpop.xlane.xlu0 %441
    %v443 = vsel %vm439, %v398, -inf
    %444 = vmax.xlane.f32.xlu0 %v443
    %v445 = vpop.xlane.xlu0 %444
    %v446 = vsel %vm439, %v417, -inf
    %447 = vmax.xlane.f32.xlu0 %v446
    %v448 = vpop.xlane.xlu0 %447
    %v449 = vsel %vm439, %v436, -inf
    %450 = vmax.xlane.f32.xlu0 %v449
    %v451 = vpop.xlane.xlu0 %450
    %v452 = vsub.f32 %v379, %v442
    %v453 = vsub.f32 %v398, %v445
    %v454 = vsub.f32 %v417, %v448
    %v455 = vsub.f32 %v436, %v451
    %v456 = vmul.f32 %v452, 1.442695
    %v457 = vpow.pop %v456
    %v458 = vmul.f32 %v453, 1.442695
    %v459 = vpow.pop %v458
    %v460 = vmul.f32 %v454, 1.442695
    %v461 = vpow.pop %v460
    %v462 = vmul.f32 %v455, 1.442695
    %v463 = vpow.pop %v462
    %v464 = vsel %vm439, %v457, 0.0
    %465 = vadd.xlane.f32.xlu0 %v464
    %v466 = vpop.xlane.xlu0 %465
    %v467 = vsel %vm439, %v459, 0.0
    %468 = vadd.xlane.f32.xlu0 %v467
    %v469 = vpop.xlane.xlu0 %468
    %v470 = vsel %vm439, %v461, 0.0
    %471 = vadd.xlane.f32.xlu0 %v470
    %v472 = vpop.xlane.xlu0 %471
    %v473 = vsel %vm439, %v463, 0.0
    %474 = vadd.xlane.f32.xlu0 %v473
    %v475 = vpop.xlane.xlu0 %474
    %v476 = vrcp.pop %v466
    %v477 = vrcp.pop %v469
    %v478 = vrcp.pop %v472
    %v479 = vrcp.pop %v475
    %v480 = vmul.f32 %v457, %v476
    %v481 = vmul.f32 %v459, %v477
    %v482 = vmul.f32 %v461, %v478
    %v483 = vmul.f32 %v463, %v479
    %v484 = vadd.f32 %v480, 0.0
    %v485 = vadd.f32 %v481, 0.0
    %v486 = vadd.f32 %v482, 0.0
    %v487 = vadd.f32 %v483, 0.0
    %v488 = vpack.c.bf16 %v480, %v480
    %v489 = vpack.c.bf16 %v481, %v481
    %v490 = vpack.c.bf16 %v482, %v482
    %v491 = vpack.c.bf16 %v483, %v483
    %v492 = vpack.c.bf16 %v332, %v332
    %v493 = vpack.c.bf16 %v350, %v350
    %v494 = vpack.c.bf16 %v334, %v334
    %v495 = vpack.c.bf16 %v351, %v351
    %vm496 = vcmask 31744
    %v498 = vsel %vm496, %v488, 0
    %vm500 = vcmask 1041408
    %v502 = vsel %vm500, %v492, 0
    %504 = vmatpush.bf16.msra.mxu0 0
    %505 = vmatpush.bf16.msra.mxu0 0
    %506 = vmatpush.bf16.msra.mxu0 0
    %507 = vmatpush.bf16.msra.mxu0 0
    %508 = vmatpush.bf16.msra.mxu0 0
    %509 = vmatpush.bf16.msra.mxu0 0
    %510 = vmatpush.bf16.msra.mxu0 0
    %511 = vmatpush.bf16.msra.mxu0 %v502
    %512 = vmatmul.bf16.gmra.mxu0 %v498
    %v513 = vpop.f32.mrf.mxu0
    %v514 = vadd.f32 0.0, %v513
    %v515 = vpop.f32.mrf.mxu0
    %516 = vdwg.mxu0
    %v518 = vsel %vm496, %v489, 0
    %v521 = vsel %vm500, %v493, 0
    %523 = vmatpush.bf16.msra.mxu0 0
    %524 = vmatpush.bf16.msra.mxu0 0
    %525 = vmatpush.bf16.msra.mxu0 0
    %526 = vmatpush.bf16.msra.mxu0 0
    %527 = vmatpush.bf16.msra.mxu0 0
    %528 = vmatpush.bf16.msra.mxu0 0
    %529 = vmatpush.bf16.msra.mxu0 0
    %530 = vmatpush.bf16.msra.mxu0 %v521
    %531 = vmatmul.bf16.gmra.mxu0 %v518
    %v532 = vpop.f32.mrf.mxu0
    %v533 = vadd.f32 0.0, %v532
    %v534 = vpop.f32.mrf.mxu0
    %535 = vdwg.mxu0
    %v537 = vsel %vm496, %v490, 0
    %v540 = vsel %vm500, %v494, 0
    %542 = vmatpush.bf16.msra.mxu0 0
    %543 = vmatpush.bf16.msra.mxu0 0
    %544 = vmatpush.bf16.msra.mxu0 0
    %545 = vmatpush.bf16.msra.mxu0 0
    %546 = vmatpush.bf16.msra.mxu0 0
    %547 = vmatpush.bf16.msra.mxu0 0
    %548 = vmatpush.bf16.msra.mxu0 0
    %549 = vmatpush.bf16.msra.mxu0 %v540
    %550 = vmatmul.bf16.gmra.mxu0 %v537
    %v551 = vpop.f32.mrf.mxu0
    %v552 = vadd.f32 0.0, %v551
    %v553 = vpop.f32.mrf.mxu0
    %554 = vdwg.mxu0
    %v556 = vsel %vm496, %v491, 0
    %v559 = vsel %vm500, %v495, 0
    %561 = vmatpush.bf16.msra.mxu0 0
    %562 = vmatpush.bf16.msra.mxu0 0
    %563 = vmatpush.bf16.msra.mxu0 0
    %564 = vmatpush.bf16.msra.mxu0 0
    %565 = vmatpush.bf16.msra.mxu0 0
    %566 = vmatpush.bf16.msra.mxu0 0
    %567 = vmatpush.bf16.msra.mxu0 0
    %568 = vmatpush.bf16.msra.mxu0 %v559
    %569 = vmatmul.bf16.gmra.mxu0 %v556
    %v570 = vpop.f32.mrf.mxu0
    %v571 = vadd.f32 0.0, %v570
    %v572 = vpop.f32.mrf.mxu0
    %573 = vdwg.mxu0
    %v575 = vunpack.c.l.b16 %v354
    %v576 = vpack.c.b16 %v575, %v575
    %577 = vrot.lane.b32.xlu0 %v576, 112
    %v578 = vpop.permute.xlu0 %577
    %v580 = vunpack.c.l.b16 %v358
    %v581 = vpack.c.b16 %v580, %v580
    %582 = vrot.lane.b32.xlu0 %v581, 112
    %v583 = vpop.permute.xlu0 %582
    %v585 = vsel %vm362, %v578, 0
    %v588 = vsel %vm362, %v583, 0
    %590 = vmatpush.bf16.xpose.msra.mxu0 0
    %591 = vmatpush.bf16.xpose.msra.mxu0 0
    %592 = vmatpush.bf16.xpose.msra.mxu0 0
    %593 = vmatpush.bf16.xpose.msra.mxu0 0
    %594 = vmatpush.bf16.xpose.msra.mxu0 0
    %595 = vmatpush.bf16.xpose.msra.mxu0 0
    %596 = vmatpush.bf16.xpose.msra.mxu0 0
    %597 = vmatpush.bf16.xpose.msra.mxu0 %v588
    %598 = vmatmul.bf16.gmra.mxu0 %v585
    %v599 = vpop.f32.mrf.mxu0
    %v600 = vadd.f32 0.0, %v599
    %v601 = vpop.f32.mrf.mxu0
    %602 = vdwg.mxu0
    %v604 = vunpack.c.l.b16 %v355
    %v605 = vpack.c.b16 %v604, %v604
    %606 = vrot.lane.b32.xlu0 %v605, 112
    %v607 = vpop.permute.xlu0 %606
    %v609 = vunpack.c.l.b16 %v359
    %v610 = vpack.c.b16 %v609, %v609
    %611 = vrot.lane.b32.xlu0 %v610, 112
    %v612 = vpop.permute.xlu0 %611
    %v614 = vsel %vm362, %v607, 0
    %v617 = vsel %vm362, %v612, 0
    %619 = vmatpush.bf16.xpose.msra.mxu0 0
    %620 = vmatpush.bf16.xpose.msra.mxu0 0
    %621 = vmatpush.bf16.xpose.msra.mxu0 0
    %622 = vmatpush.bf16.xpose.msra.mxu0 0
    %623 = vmatpush.bf16.xpose.msra.mxu0 0
    %624 = vmatpush.bf16.xpose.msra.mxu0 0
    %625 = vmatpush.bf16.xpose.msra.mxu0 0
    %626 = vmatpush.bf16.xpose.msra.mxu0 %v617
    %627 = vmatmul.bf16.gmra.mxu0 %v614
    %v628 = vpop.f32.mrf.mxu0
    %v629 = vadd.f32 0.0, %v628
    %v630 = vpop.f32.mrf.mxu0
    %631 = vdwg.mxu0
    %v633 = vunpack.c.l.b16 %v356
    %v634 = vpack.c.b16 %v633, %v633
    %635 = vrot.lane.b32.xlu0 %v634, 112
    %v636 = vpop.permute.xlu0 %635
    %v638 = vunpack.c.l.b16 %v360
    %v639 = vpack.c.b16 %v638, %v638
    %640 = vrot.lane.b32.xlu0 %v639, 112
    %v641 = vpop.permute.xlu0 %640
    %v643 = vsel %vm362, %v636, 0
    %v646 = vsel %vm362, %v641, 0
    %648 = vmatpush.bf16.xpose.msra.mxu0 0
    %649 = vmatpush.bf16.xpose.msra.mxu0 0
    %650 = vmatpush.bf16.xpose.msra.mxu0 0
    %651 = vmatpush.bf16.xpose.msra.mxu0 0
    %652 = vmatpush.bf16.xpose.msra.mxu0 0
    %653 = vmatpush.bf16.xpose.msra.mxu0 0
    %654 = vmatpush.bf16.xpose.msra.mxu0 0
    %655 = vmatpush.bf16.xpose.msra.mxu0 %v646
    %656 = vmatmul.bf16.gmra.mxu0 %v643
    %v657 = vpop.f32.mrf.mxu0
    %v658 = vadd.f32 0.0, %v657
    %v659 = vpop.f32.mrf.mxu0
    %660 = vdwg.mxu0
    %v662 = vunpack.c.l.b16 %v357
    %v663 = vpack.c.b16 %v662, %v662
    %664 = vrot.lane.b32.xlu0 %v663, 112
    %v665 = vpop.permute.xlu0 %664
    %v667 = vunpack.c.l.b16 %v361
    %v668 = vpack.c.b16 %v667, %v667
    %669 = vrot.lane.b32.xlu0 %v668, 112
    %v670 = vpop.permute.xlu0 %669
    %v672 = vsel %vm362, %v665, 0
    %v675 = vsel %vm362, %v670, 0
    %677 = vmatpush.bf16.xpose.msra.mxu0 0
    %678 = vmatpush.bf16.xpose.msra.mxu0 0
    %679 = vmatpush.bf16.xpose.msra.mxu0 0
    %680 = vmatpush.bf16.xpose.msra.mxu0 0
    %681 = vmatpush.bf16.xpose.msra.mxu0 0
    %682 = vmatpush.bf16.xpose.msra.mxu0 0
    %683 = vmatpush.bf16.xpose.msra.mxu0 0
    %684 = vmatpush.bf16.xpose.msra.mxu0 %v675
    %685 = vmatmul.bf16.gmra.mxu0 %v672
    %v686 = vpop.f32.mrf.mxu0
    %v687 = vadd.f32 0.0, %v686
    %v688 = vpop.f32.mrf.mxu0
    %689 = vdwg.mxu0
    %v690 = vsel %vm439, %v600, -inf
    %691 = vmax.xlane.f32.xlu0 %v690
    %v692 = vpop.xlane.xlu0 %691
    %v693 = vsel %vm439, %v629, -inf
    %694 = vmax.xlane.f32.xlu0 %v693
    %v695 = vpop.xlane.xlu0 %694
    %v696 = vsel %vm439, %v658, -inf
    %697 = vmax.xlane.f32.xlu0 %v696
    %v698 = vpop.xlane.xlu0 %697
    %v699 = vsel %vm439, %v687, -inf
    %700 = vmax.xlane.f32.xlu0 %v699
    %v701 = vpop.xlane.xlu0 %700
    %v702 = vsub.f32 %v600, %v692
    %v703 = vsub.f32 %v629, %v695
    %v704 = vsub.f32 %v658, %v698
    %v705 = vsub.f32 %v687, %v701
    %v706 = vmul.f32 %v702, 1.442695
    %v707 = vpow.pop %v706
    %v708 = vmul.f32 %v703, 1.442695
    %v709 = vpow.pop %v708
    %v710 = vmul.f32 %v704, 1.442695
    %v711 = vpow.pop %v710
    %v712 = vmul.f32 %v705, 1.442695
    %v713 = vpow.pop %v712
    %v714 = vsel %vm439, %v707, 0.0
    %715 = vadd.xlane.f32.xlu0 %v714
    %v716 = vpop.xlane.xlu0 %715
    %v717 = vsel %vm439, %v709, 0.0
    %718 = vadd.xlane.f32.xlu0 %v717
    %v719 = vpop.xlane.xlu0 %718
    %v720 = vsel %vm439, %v711, 0.0
    %721 = vadd.xlane.f32.xlu0 %v720
    %v722 = vpop.xlane.xlu0 %721
    %v723 = vsel %vm439, %v713, 0.0
    %724 = vadd.xlane.f32.xlu0 %v723
    %v725 = vpop.xlane.xlu0 %724
    %v726 = vrcp.pop %v716
    %v727 = vrcp.pop %v719
    %v728 = vrcp.pop %v722
    %v729 = vrcp.pop %v725
    %v730 = vmul.f32 %v707, %v726
    %v731 = vmul.f32 %v709, %v727
    %v732 = vmul.f32 %v711, %v728
    %v733 = vmul.f32 %v713, %v729
    %v734 = vadd.f32 %v484, %v730
    %v735 = vadd.f32 %v485, %v731
    %v736 = vadd.f32 %v486, %v732
    %v737 = vadd.f32 %v487, %v733
    %v738 = vpack.c.bf16 %v730, %v730
    %v739 = vpack.c.bf16 %v731, %v731
    %v740 = vpack.c.bf16 %v732, %v732
    %v741 = vpack.c.bf16 %v733, %v733
    %v743 = vunpack.c.l.b16 %v492
    %v744 = vpack.c.b16 %v743, %v743
    %745 = vrot.lane.b32.xlu0 %v744, 112
    %v746 = vpop.permute.xlu0 %745
    %v748 = vsel %vm496, %v738, 0
    %v751 = vsel %vm500, %v746, 0
    %753 = vmatpush.bf16.msra.mxu0 0
    %754 = vmatpush.bf16.msra.mxu0 0
    %755 = vmatpush.bf16.msra.mxu0 0
    %756 = vmatpush.bf16.msra.mxu0 0
    %757 = vmatpush.bf16.msra.mxu0 0
    %758 = vmatpush.bf16.msra.mxu0 0
    %759 = vmatpush.bf16.msra.mxu0 0
    %760 = vmatpush.bf16.msra.mxu0 %v751
    %761 = vmatmul.bf16.gmra.mxu0 %v748
    %v762 = vpop.f32.mrf.mxu0
    %v763 = vadd.f32 0.0, %v762
    %v764 = vpop.f32.mrf.mxu0
    %765 = vdwg.mxu0
    %v767 = vunpack.c.l.b16 %v493
    %v768 = vpack.c.b16 %v767, %v767
    %769 = vrot.lane.b32.xlu0 %v768, 112
    %v770 = vpop.permute.xlu0 %769
    %v772 = vsel %vm496, %v739, 0
    %v775 = vsel %vm500, %v770, 0
    %777 = vmatpush.bf16.msra.mxu0 0
    %778 = vmatpush.bf16.msra.mxu0 0
    %779 = vmatpush.bf16.msra.mxu0 0
    %780 = vmatpush.bf16.msra.mxu0 0
    %781 = vmatpush.bf16.msra.mxu0 0
    %782 = vmatpush.bf16.msra.mxu0 0
    %783 = vmatpush.bf16.msra.mxu0 0
    %784 = vmatpush.bf16.msra.mxu0 %v775
    %785 = vmatmul.bf16.gmra.mxu0 %v772
    %v786 = vpop.f32.mrf.mxu0
    %v787 = vadd.f32 0.0, %v786
    %v788 = vpop.f32.mrf.mxu0
    %789 = vdwg.mxu0
    %v791 = vunpack.c.l.b16 %v494
    %v792 = vpack.c.b16 %v791, %v791
    %793 = vrot.lane.b32.xlu0 %v792, 112
    %v794 = vpop.permute.xlu0 %793
    %v796 = vsel %vm496, %v740, 0
    %v799 = vsel %vm500, %v794, 0
    %801 = vmatpush.bf16.msra.mxu0 0
    %802 = vmatpush.bf16.msra.mxu0 0
    %803 = vmatpush.bf16.msra.mxu0 0
    %804 = vmatpush.bf16.msra.mxu0 0
    %805 = vmatpush.bf16.msra.mxu0 0
    %806 = vmatpush.bf16.msra.mxu0 0
    %807 = vmatpush.bf16.msra.mxu0 0
    %808 = vmatpush.bf16.msra.mxu0 %v799
    %809 = vmatmul.bf16.gmra.mxu0 %v796
    %v810 = vpop.f32.mrf.mxu0
    %v811 = vadd.f32 0.0, %v810
    %v812 = vpop.f32.mrf.mxu0
    %813 = vdwg.mxu0
    %v815 = vunpack.c.l.b16 %v495
    %v816 = vpack.c.b16 %v815, %v815
    %817 = vrot.lane.b32.xlu0 %v816, 112
    %v818 = vpop.permute.xlu0 %817
    %v820 = vsel %vm496, %v741, 0
    %v823 = vsel %vm500, %v818, 0
    %825 = vmatpush.bf16.msra.mxu0 0
    %826 = vmatpush.bf16.msra.mxu0 0
    %827 = vmatpush.bf16.msra.mxu0 0
    %828 = vmatpush.bf16.msra.mxu0 0
    %829 = vmatpush.bf16.msra.mxu0 0
    %830 = vmatpush.bf16.msra.mxu0 0
    %831 = vmatpush.bf16.msra.mxu0 0
    %832 = vmatpush.bf16.msra.mxu0 %v823
    %833 = vmatmul.bf16.gmra.mxu0 %v820
    %v834 = vpop.f32.mrf.mxu0
    %v835 = vadd.f32 0.0, %v834
    %v836 = vpop.f32.mrf.mxu0
    %837 = vdwg.mxu0
    %842 = vrot.lane.b32.xlu0 %v763, 16
    %v843 = vpop.permute.xlu0 %842
    %844 = vrot.lane.b32.xlu0 %v787, 16
    %v845 = vpop.permute.xlu0 %844
    %846 = vrot.lane.b32.xlu0 %v811, 16
    %v847 = vpop.permute.xlu0 %846
    %848 = vrot.lane.b32.xlu0 %v835, 16
    %v849 = vpop.permute.xlu0 %848
    %v854 = vsel %vm362, %v514, %v843
    %v855 = vsel %vm362, %v533, %v845
    %v856 = vsel %vm362, %v552, %v847
    %v857 = vsel %vm362, %v571, %v849
    %s858 = scalar_lea.vmem %s2, 48
    %v859 = vld [vmem:[%s858] sm:$0xf]
    %v860 = vld [vmem:[%s858 + $0x4] sm:$0xf]
    %v861 = vld [vmem:[%s858 + $0x8] sm:$0xf]
    %v862 = vld [vmem:[%s858 + $0xc] sm:$0xf]
    %867 = vst [vmem:[#allocation1] ss:$2 sm:$0xff] %v854
    %s868 = scalar_lea.vmem [#allocation1], 1
    %869 = vst [vmem:[%s868] ss:$2 sm:$0xff] %v855
    %s870 = scalar_lea.vmem [#allocation1], 16
    %871 = vst [vmem:[%s870] ss:$2 sm:$0xff] %v856
    %s872 = scalar_lea.vmem [#allocation1], 17
    %873 = vst [vmem:[%s872] ss:$2 sm:$0xff] %v857
    %v874 = vld.sshfl [vmem:[#allocation1] sm:$0xff pattern:$0x75316420]
    %v875 = vld.sshfl [vmem:[#allocation1 + $0x10] sm:$0xff pattern:$0x75316420]
    %v878 = vpack.c.bf16 %v875, %v874
    %v879 = vld [vmem:[#allocation6 + $0x3] sm:$0x1]
    %v880 = vperm.slane %v879, 0
    %v885 = vunpack.c.l.b16 %v859
    %v886 = vunpack.c.l.b16 %v860
    %v887 = vunpack.c.l.b16 %v861
    %v888 = vunpack.c.l.b16 %v862
    %v889 = vpack.c.b16 %v886, %v885
    %v890 = vpack.c.b16 %v888, %v887
    %v894 = vsel %vm252, %v878, 0
    %896 = vmatpush.bf16.msra.mxu0 0
    %897 = vmatpush.bf16.msra.mxu0 0
    %898 = vmatpush.bf16.msra.mxu0 0
    %899 = vmatpush.bf16.msra.mxu0 0
    %900 = vmatpush.bf16.msra.mxu0 0
    %901 = vmatpush.bf16.msra.mxu0 0
    %902 = vmatpush.bf16.msra.mxu0 %v890
    %903 = vmatpush.bf16.msra.mxu0 %v889
    %904 = vmatmul.bf16.gmra.mxu0 %v894
    %v905 = vpop.f32.mrf.mxu0
    %v906 = vadd.f32 %v880, %v905
    %v907 = vpop.f32.mrf.mxu0
    %v908 = vadd.f32 %v880, %v907
    %909 = vdwg.mxu0
    %v910 = vmul.f32 %v734, 0.5
    %v911 = vmul.f32 %v735, 0.5
    %v912 = vmul.f32 %v736, 0.5
    %v913 = vmul.f32 %v737, 0.5
    %v914 = vsel %vm439, %v910, 0.0
    %v915 = vsel %vm439, %v911, 0.0
    %v916 = vadd.f32 %v914, %v915
    %v917 = vsel %vm439, %v912, 0.0
    %v918 = vadd.f32 %v916, %v917
    %v919 = vsel %vm439, %v913, 0.0
    %v920 = vadd.f32 %v918, %v919
    %921 = vst.msk [vmem:[%s21] sm:$0xf] %vm439, %v920
    %v922 = vld [vmem:[%s10] sm:$0xf]
    %v923 = vld [vmem:[%s10 + $0x4] sm:$0xf]
    %v924 = vld [vmem:[%s10 + $0x8] sm:$0xf]
    %v925 = vld [vmem:[%s10 + $0xc] sm:$0xf]
    %v926 = vpack.c.bf16 %v908, %v906
    %v927 = vld [vmem:[#allocation12] sm:$0x1]
    %v929 = vperm.slane %v927, 0
    %v935 = vunpack.c.l.b16 %v922
    %v936 = vunpack.c.l.b16 %v923
    %v937 = vunpack.c.l.b16 %v924
    %v938 = vunpack.c.l.b16 %v925
    %v939 = vpack.c.b16 %v936, %v935
    %v940 = vpack.c.b16 %v938, %v937
    %v944 = vsel %vm252, %v926, 0
    %946 = vmatpush.bf16.msra.mxu0 0
    %947 = vmatpush.bf16.msra.mxu0 0
    %948 = vmatpush.bf16.msra.mxu0 0
    %949 = vmatpush.bf16.msra.mxu0 0
    %950 = vmatpush.bf16.msra.mxu0 0
    %951 = vmatpush.bf16.msra.mxu0 0
    %952 = vmatpush.bf16.msra.mxu0 %v940
    %953 = vmatpush.bf16.msra.mxu0 %v939
    %954 = vmatmul.bf16.gmra.mxu0 %v944
    %v955 = vpop.f32.mrf.mxu0
    %v956 = vadd.f32 %v929, %v955
    %v957 = vpop.f32.mrf.mxu0
    %v958 = vadd.f32 %v929, %v957
    %959 = vdwg.mxu0
    %v960 = vmax.f32 %v956, 0.0
    %v961 = vmax.f32 %v958, 0.0
    %v962 = vld [vmem:[#allocation14] sm:$0x1]
    %v964 = vperm.slane %v962, 0
    %v966 = vmul.f32 %v960, %v964
    %v967 = vmul.f32 %v961, %v964
    %v968 = vsel %vm362, %v966, 0.0
    %969 = vadd.xlane.f32.xlu0 %v968
    %v970 = vpop.xlane.xlu0 %969
    %v971 = vsel %vm362, %v967, 0.0
    %972 = vadd.xlane.f32.xlu0 %v971
    %v973 = vpop.xlane.xlu0 %972
    %v974 = vld [vmem:[#allocation2] sm:$0x1]
    %v976 = vperm.slane %v974, 0
    %v978 = vadd.f32 %v970, %v976
    %v979 = vadd.f32 %v973, %v976
    %v980 = vxor.u32 %v978, 2147483648
    %v981 = vxor.u32 %v979, 2147483648
    %v982 = vmul.f32 %v980, 1.442695
    %v983 = vpow.pop %v982
    %v984 = vmul.f32 %v981, 1.442695
    %v985 = vpow.pop %v984
    %v986 = vadd.f32 %v983, 1.0
    %v987 = vadd.f32 %v985, 1.0
    %v988 = vrcp.pop %v986
    %v989 = vmul.f32 %v986, %v988
    %v990 = vsub.f32 1.0, %v989
    %v991 = vmul.f32 %v988, %v990
    %v992 = vadd.f32 %v988, %v991
    %vm993 = vweird.f32 %v986
    %vm994 = vweird.f32 %v988
    %vm995 = vmor %vm993, %vm994
    %v996 = vsel %vm995, %v988, %v992
    %v997 = vand.u32 2147483647, %v986
    %vm998 = vcmp.eq.f32.partialorder %v997, 8.507059e+37
    %v999 = vand.u32 %v986, 2147483648
    %v1000 = vor.u32 1.1754944e-38, %v999
    %v1001 = vsel %vm998, %v1000, %v996
    %v1002 = vmul.f32 1.0, %v1001
    %v1003 = vrcp.pop %v987
    %v1004 = vmul.f32 %v987, %v1003
    %v1005 = vsub.f32 1.0, %v1004
    %v1006 = vmul.f32 %v1003, %v1005
    %v1007 = vadd.f32 %v1003, %v1006
    %vm1008 = vweird.f32 %v987
    %vm1009 = vweird.f32 %v1003
    %vm1010 = vmor %vm1008, %vm1009
    %v1011 = vsel %vm1010, %v1003, %v1007
    %v1012 = vand.u32 2147483647, %v987
    %vm1013 = vcmp.eq.f32.partialorder %v1012, 8.507059e+37
    %v1014 = vand.u32 %v987, 2147483648
    %v1015 = vor.u32 1.1754944e-38, %v1014
    %v1016 = vsel %vm1013, %v1015, %v1011
    %v1017 = vmul.f32 1.0, %v1016
    %v1018 = vmul.f32 %v1002, 1.442695
    %v1019 = vpow.pop %v1018
    %v1020 = vmul.f32 %v1017, 1.442695
    %v1021 = vpow.pop %v1020
    %1023 = vset.pattern.permute.xlu0 0
    %1024 = vperm.xlu0 %1023, %v1019
    %v1025 = vpop.permute.xlu0 %1024
    %1028 = vset.pattern.permute.xlu0 0
    %1029 = vperm.xlu0 %1028, %v1021
    %v1030 = vpop.permute.xlu0 %1029
    %v1032 = vmul.f32 %v906, %v1025
    %v1033 = vmul.f32 %v908, %v1030
    %v1036 = vrot.slane %v1032, 4
    %v1037 = vrot.slane %v1033, 4
    %vm1040 = vcmask 257024
    %v1041 = vsel %vm1040, %v1032, 0.0
    %v1042 = vrot.slane %v1041, 4
    %v1043 = vadd.f32 %v1041, %v1042
    %v1044 = vrot.slane %v1043, 2
    %v1045 = vadd.f32 %v1043, %v1044
    %v1046 = vrot.slane %v1045, 1
    %v1047 = vadd.f32 %v1045, %v1046
    %v1048 = vsel %vm1040, %v1036, 0.0
    %v1049 = vrot.slane %v1048, 4
    %v1050 = vadd.f32 %v1048, %v1049
    %v1051 = vrot.slane %v1050, 2
    %v1052 = vadd.f32 %v1050, %v1051
    %v1053 = vrot.slane %v1052, 1
    %v1054 = vadd.f32 %v1052, %v1053
    %v1055 = vsel %vm1040, %v1033, 0.0
    %v1056 = vrot.slane %v1055, 4
    %v1057 = vadd.f32 %v1055, %v1056
    %v1058 = vrot.slane %v1057, 2
    %v1059 = vadd.f32 %v1057, %v1058
    %v1060 = vrot.slane %v1059, 1
    %v1061 = vadd.f32 %v1059, %v1060
    %v1062 = vsel %vm1040, %v1037, 0.0
    %v1063 = vrot.slane %v1062, 4
    %v1064 = vadd.f32 %v1062, %v1063
    %v1065 = vrot.slane %v1064, 2
    %v1066 = vadd.f32 %v1064, %v1065
    %v1067 = vrot.slane %v1066, 1
    %v1068 = vadd.f32 %v1066, %v1067
    %v1069 = vrot.slane %v1019, 4
    %v1070 = vrot.slane %v1021, 4
    %vm1073 = vcmask 3072
    %v1074 = vsel %vm1073, %v1019, 0.0
    %v1075 = vrot.slane %v1074, 4
    %v1076 = vadd.f32 %v1074, %v1075
    %v1077 = vrot.slane %v1076, 2
    %v1078 = vadd.f32 %v1076, %v1077
    %v1079 = vrot.slane %v1078, 1
    %v1080 = vadd.f32 %v1078, %v1079
    %v1081 = vsel %vm1073, %v1069, 0.0
    %v1082 = vrot.slane %v1081, 4
    %v1083 = vadd.f32 %v1081, %v1082
    %v1084 = vrot.slane %v1083, 2
    %v1085 = vadd.f32 %v1083, %v1084
    %v1086 = vrot.slane %v1085, 1
    %v1087 = vadd.f32 %v1085, %v1086
    %v1088 = vsel %vm1073, %v1021, 0.0
    %v1089 = vrot.slane %v1088, 4
    %v1090 = vadd.f32 %v1088, %v1089
    %v1091 = vrot.slane %v1090, 2
    %v1092 = vadd.f32 %v1090, %v1091
    %v1093 = vrot.slane %v1092, 1
    %v1094 = vadd.f32 %v1092, %v1093
    %v1095 = vsel %vm1073, %v1070, 0.0
    %v1096 = vrot.slane %v1095, 4
    %v1097 = vadd.f32 %v1095, %v1096
    %v1098 = vrot.slane %v1097, 2
    %v1099 = vadd.f32 %v1097, %v1098
    %v1100 = vrot.slane %v1099, 1
    %v1101 = vadd.f32 %v1099, %v1100
    %v1102 = vrcp.pop %v1080
    %v1103 = vrcp.pop %v1087
    %v1104 = vrcp.pop %v1094
    %v1105 = vrcp.pop %v1101
    %1107 = vset.pattern.permute.xlu0 0
    %1108 = vperm.xlu0 %1107, %v1102
    %v1109 = vpop.permute.xlu0 %1108
    %1112 = vset.pattern.permute.xlu0 0
    %1113 = vperm.xlu0 %1112, %v1103
    %v1114 = vpop.permute.xlu0 %1113
    %1117 = vset.pattern.permute.xlu0 0
    %1118 = vperm.xlu0 %1117, %v1104
    %v1119 = vpop.permute.xlu0 %1118
    %1122 = vset.pattern.permute.xlu0 0
    %1123 = vperm.xlu0 %1122, %v1105
    %v1124 = vpop.permute.xlu0 %1123
    %v1126 = vmul.f32 %v1047, %v1109
    %v1127 = vmul.f32 %v1054, %v1114
    %v1128 = vmul.f32 %v1061, %v1119
    %v1129 = vmul.f32 %v1068, %v1124
    %v1130 = vld [vmem:[#allocation15] sm:$0x3]
    %v1132 = vrot.slane %v1130, 1
    %v1135 = vadd.f32 %v1126, %v1130
    %v1136 = vadd.f32 %v1127, %v1132
    %v1137 = vadd.f32 %v1128, %v1130
    %v1138 = vadd.f32 %v1129, %v1132
    %v1139 = vld [vmem:[#allocation8] sm:$0xf]
    %v1140 = vld [vmem:[#allocation8 + $0x4] sm:$0xf]
    %v1141 = vld [vmem:[#allocation8 + $0x8] sm:$0xf]
    %v1142 = vld [vmem:[#allocation8 + $0xc] sm:$0xf]
    %v1143 = vpack.c.bf16 %v1135, %v1135
    %v1144 = vpack.c.bf16 %v1136, %v1136
    %v1145 = vpack.c.bf16 %v1137, %v1137
    %v1146 = vpack.c.bf16 %v1138, %v1138
    %v1147 = vld [vmem:[#allocation9] sm:$0x1]
    %v1148 = vperm.slane %v1147, 0
    %v1153 = vunpack.c.l.b16 %v1143
    %v1154 = vunpack.c.l.b16 %v1144
    %v1155 = vunpack.c.l.b16 %v1145
    %v1156 = vunpack.c.l.b16 %v1146
    %v1157 = vrot.slane %v1154, 7
    %vm1158 = vcmask 1041409
    %v1159 = vsel %vm1158, %v1157, %v1153
    %v1160 = vrot.slane %v1155, 6
    %vm1161 = vcmask 1042434
    %v1162 = vsel %vm1161, %v1160, %v1159
    %v1163 = vrot.slane %v1156, 5
    %vm1164 = vcmask 1043459
    %v1165 = vsel %vm1164, %v1163, %v1162
    %v1166 = vpack.c.b16 %v1165, %v1165
    %v1171 = vunpack.c.l.b16 %v1139
    %v1172 = vunpack.c.l.b16 %v1140
    %v1173 = vunpack.c.l.b16 %v1141
    %v1174 = vunpack.c.l.b16 %v1142
    %v1175 = vpack.c.b16 %v1172, %v1171
    %v1176 = vpack.c.b16 %v1174, %v1173
    %v1180 = vsel %vm252, %v1166, 0
    %1182 = vmatpush.bf16.msra.mxu0 0
    %1183 = vmatpush.bf16.msra.mxu0 0
    %1184 = vmatpush.bf16.msra.mxu0 0
    %1185 = vmatpush.bf16.msra.mxu0 0
    %1186 = vmatpush.bf16.msra.mxu0 0
    %1187 = vmatpush.bf16.msra.mxu0 0
    %1188 = vmatpush.bf16.msra.mxu0 %v1176
    %1189 = vmatpush.bf16.msra.mxu0 %v1175
    %1190 = vmatmul.bf16.gmra.mxu0 %v1180
    %v1191 = vpop.f32.mrf.mxu0
    %v1192 = vadd.f32 %v1148, %v1191
    %v1193 = vpop.f32.mrf.mxu0
    %1194 = vdwg.mxu0
    %s1195 = scalar_lea.vmem [#allocation8], 16
    %v1196 = vld [vmem:[%s1195] sm:$0xf]
    %v1197 = vld [vmem:[%s1195 + $0x4] sm:$0xf]
    %v1198 = vld [vmem:[%s1195 + $0x8] sm:$0xf]
    %v1199 = vld [vmem:[%s1195 + $0xc] sm:$0xf]
    %v1200 = vld [vmem:[#allocation9 + $0x1] sm:$0x1]
    %v1201 = vperm.slane %v1200, 0
    %v1206 = vunpack.c.l.b16 %v1196
    %v1207 = vunpack.c.l.b16 %v1197
    %v1208 = vunpack.c.l.b16 %v1198
    %v1209 = vunpack.c.l.b16 %v1199
    %v1210 = vpack.c.b16 %v1207, %v1206
    %v1211 = vpack.c.b16 %v1209, %v1208
    %1214 = vmatpush.bf16.msra.mxu0 0
    %1215 = vmatpush.bf16.msra.mxu0 0
    %1216 = vmatpush.bf16.msra.mxu0 0
    %1217 = vmatpush.bf16.msra.mxu0 0
    %1218 = vmatpush.bf16.msra.mxu0 0
    %1219 = vmatpush.bf16.msra.mxu0 0
    %1220 = vmatpush.bf16.msra.mxu0 %v1211
    %1221 = vmatpush.bf16.msra.mxu0 %v1210
    %1222 = vmatmul.bf16.gmra.mxu0 %v1180
    %v1223 = vpop.f32.mrf.mxu0
    %v1224 = vadd.f32 %v1201, %v1223
    %v1225 = vpop.f32.mrf.mxu0
    %1226 = vdwg.mxu0
    %s1227 = scalar_lea.vmem [#allocation8], 32
    %v1228 = vld [vmem:[%s1227] sm:$0xf]
    %v1229 = vld [vmem:[%s1227 + $0x4] sm:$0xf]
    %v1230 = vld [vmem:[%s1227 + $0x8] sm:$0xf]
    %v1231 = vld [vmem:[%s1227 + $0xc] sm:$0xf]
    %v1232 = vld [vmem:[#allocation9 + $0x2] sm:$0x1]
    %v1233 = vperm.slane %v1232, 0
    %v1238 = vunpack.c.l.b16 %v1228
    %v1239 = vunpack.c.l.b16 %v1229
    %v1240 = vunpack.c.l.b16 %v1230
    %v1241 = vunpack.c.l.b16 %v1231
    %v1242 = vpack.c.b16 %v1239, %v1238
    %v1243 = vpack.c.b16 %v1241, %v1240
    %1246 = vmatpush.bf16.msra.mxu0 0
    %1247 = vmatpush.bf16.msra.mxu0 0
    %1248 = vmatpush.bf16.msra.mxu0 0
    %1249 = vmatpush.bf16.msra.mxu0 0
    %1250 = vmatpush.bf16.msra.mxu0 0
    %1251 = vmatpush.bf16.msra.mxu0 0
    %1252 = vmatpush.bf16.msra.mxu0 %v1243
    %1253 = vmatpush.bf16.msra.mxu0 %v1242
    %1254 = vmatmul.bf16.gmra.mxu0 %v1180
    %v1255 = vpop.f32.mrf.mxu0
    %v1256 = vadd.f32 %v1233, %v1255
    %v1257 = vpop.f32.mrf.mxu0
    %1258 = vdwg.mxu0
    %v1260 = vrot.slane %v1192, 2
    %v1263 = vrot.slane %v1224, 2
    %v1266 = vrot.slane %v1256, 2
    %v1268 = vpack.c.bf16 %v1192, %v1192
    %v1269 = vpack.c.bf16 %v1260, %v1260
    %v1270 = vpack.c.bf16 %v1224, %v1224
    %v1271 = vpack.c.bf16 %v1263, %v1263
    %v1273 = vsel %vm362, %v1268, 0
    %v1276 = vsel %vm362, %v1270, 0
    %1278 = vmatpush.bf16.xpose.msra.mxu0 0
    %1279 = vmatpush.bf16.xpose.msra.mxu0 0
    %1280 = vmatpush.bf16.xpose.msra.mxu0 0
    %1281 = vmatpush.bf16.xpose.msra.mxu0 0
    %1282 = vmatpush.bf16.xpose.msra.mxu0 0
    %1283 = vmatpush.bf16.xpose.msra.mxu0 0
    %1284 = vmatpush.bf16.xpose.msra.mxu0 0
    %1285 = vmatpush.bf16.xpose.msra.mxu0 %v1276
    %1286 = vmatmul.bf16.gmra.mxu0 %v1273
    %v1287 = vpop.f32.mrf.mxu0
    %v1288 = vadd.f32 0.0, %v1287
    %v1289 = vpop.f32.mrf.mxu0
    %1290 = vdwg.mxu0
    %v1292 = vsel %vm362, %v1269, 0
    %v1295 = vsel %vm362, %v1271, 0
    %1297 = vmatpush.bf16.xpose.msra.mxu0 0
    %1298 = vmatpush.bf16.xpose.msra.mxu0 0
    %1299 = vmatpush.bf16.xpose.msra.mxu0 0
    %1300 = vmatpush.bf16.xpose.msra.mxu0 0
    %1301 = vmatpush.bf16.xpose.msra.mxu0 0
    %1302 = vmatpush.bf16.xpose.msra.mxu0 0
    %1303 = vmatpush.bf16.xpose.msra.mxu0 0
    %1304 = vmatpush.bf16.xpose.msra.mxu0 %v1295
    %1305 = vmatmul.bf16.gmra.mxu0 %v1292
    %v1306 = vpop.f32.mrf.mxu0
    %v1307 = vadd.f32 0.0, %v1306
    %v1308 = vpop.f32.mrf.mxu0
    %1309 = vdwg.mxu0
    %vm1310 = vcmask 9216
    %v1311 = vsel %vm1310, %v1288, -inf
    %1312 = vmax.xlane.f32.xlu0 %v1311
    %v1313 = vpop.xlane.xlu0 %1312
    %v1314 = vsel %vm1310, %v1307, -inf
    %1315 = vmax.xlane.f32.xlu0 %v1314
    %v1316 = vpop.xlane.xlu0 %1315
    %v1317 = vsub.f32 %v1288, %v1313
    %v1318 = vsub.f32 %v1307, %v1316
    %v1319 = vmul.f32 %v1317, 1.442695
    %v1320 = vpow.pop %v1319
    %v1321 = vmul.f32 %v1318, 1.442695
    %v1322 = vpow.pop %v1321
    %v1323 = vsel %vm1310, %v1320, 0.0
    %1324 = vadd.xlane.f32.xlu0 %v1323
    %v1325 = vpop.xlane.xlu0 %1324
    %v1326 = vsel %vm1310, %v1322, 0.0
    %1327 = vadd.xlane.f32.xlu0 %v1326
    %v1328 = vpop.xlane.xlu0 %1327
    %v1329 = vrcp.pop %v1325
    %v1330 = vrcp.pop %v1328
    %v1331 = vmul.f32 %v1320, %v1329
    %v1332 = vmul.f32 %v1322, %v1330
    %v1333 = vadd.f32 %v1331, 0.0
    %v1334 = vadd.f32 %v1332, 0.0
    %v1335 = vpack.c.bf16 %v1331, %v1331
    %v1336 = vpack.c.bf16 %v1332, %v1332
    %v1337 = vpack.c.bf16 %v1256, %v1256
    %v1338 = vpack.c.bf16 %v1266, %v1266
    %vm1339 = vcmask 15360
    %v1341 = vsel %vm1339, %v1335, 0
    %vm1343 = vcmask 1040384
    %v1345 = vsel %vm1343, %v1337, 0
    %1347 = vmatpush.bf16.msra.mxu0 0
    %1348 = vmatpush.bf16.msra.mxu0 0
    %1349 = vmatpush.bf16.msra.mxu0 0
    %1350 = vmatpush.bf16.msra.mxu0 0
    %1351 = vmatpush.bf16.msra.mxu0 0
    %1352 = vmatpush.bf16.msra.mxu0 0
    %1353 = vmatpush.bf16.msra.mxu0 0
    %1354 = vmatpush.bf16.msra.mxu0 %v1345
    %1355 = vmatmul.bf16.gmra.mxu0 %v1341
    %v1356 = vpop.f32.mrf.mxu0
    %v1357 = vadd.f32 0.0, %v1356
    %v1358 = vpop.f32.mrf.mxu0
    %1359 = vdwg.mxu0
    %v1361 = vsel %vm1339, %v1336, 0
    %v1364 = vsel %vm1343, %v1338, 0
    %1366 = vmatpush.bf16.msra.mxu0 0
    %1367 = vmatpush.bf16.msra.mxu0 0
    %1368 = vmatpush.bf16.msra.mxu0 0
    %1369 = vmatpush.bf16.msra.mxu0 0
    %1370 = vmatpush.bf16.msra.mxu0 0
    %1371 = vmatpush.bf16.msra.mxu0 0
    %1372 = vmatpush.bf16.msra.mxu0 0
    %1373 = vmatpush.bf16.msra.mxu0 %v1364
    %1374 = vmatmul.bf16.gmra.mxu0 %v1361
    %v1375 = vpop.f32.mrf.mxu0
    %v1376 = vadd.f32 0.0, %v1375
    %v1377 = vpop.f32.mrf.mxu0
    %1378 = vdwg.mxu0
    %v1380 = vunpack.c.l.b16 %v1268
    %v1381 = vpack.c.b16 %v1380, %v1380
    %1382 = vrot.lane.b32.xlu0 %v1381, 112
    %v1383 = vpop.permute.xlu0 %1382
    %v1385 = vunpack.c.l.b16 %v1270
    %v1386 = vpack.c.b16 %v1385, %v1385
    %1387 = vrot.lane.b32.xlu0 %v1386, 112
    %v1388 = vpop.permute.xlu0 %1387
    %v1390 = vsel %vm362, %v1383, 0
    %v1393 = vsel %vm362, %v1388, 0
    %1395 = vmatpush.bf16.xpose.msra.mxu0 0
    %1396 = vmatpush.bf16.xpose.msra.mxu0 0
    %1397 = vmatpush.bf16.xpose.msra.mxu0 0
    %1398 = vmatpush.bf16.xpose.msra.mxu0 0
    %1399 = vmatpush.bf16.xpose.msra.mxu0 0
    %1400 = vmatpush.bf16.xpose.msra.mxu0 0
    %1401 = vmatpush.bf16.xpose.msra.mxu0 0
    %1402 = vmatpush.bf16.xpose.msra.mxu0 %v1393
    %1403 = vmatmul.bf16.gmra.mxu0 %v1390
    %v1404 = vpop.f32.mrf.mxu0
    %v1405 = vadd.f32 0.0, %v1404
    %v1406 = vpop.f32.mrf.mxu0
    %1407 = vdwg.mxu0
    %v1409 = vunpack.c.l.b16 %v1269
    %v1410 = vpack.c.b16 %v1409, %v1409
    %1411 = vrot.lane.b32.xlu0 %v1410, 112
    %v1412 = vpop.permute.xlu0 %1411
    %v1414 = vunpack.c.l.b16 %v1271
    %v1415 = vpack.c.b16 %v1414, %v1414
    %1416 = vrot.lane.b32.xlu0 %v1415, 112
    %v1417 = vpop.permute.xlu0 %1416
    %v1419 = vsel %vm362, %v1412, 0
    %v1422 = vsel %vm362, %v1417, 0
    %1424 = vmatpush.bf16.xpose.msra.mxu0 0
    %1425 = vmatpush.bf16.xpose.msra.mxu0 0
    %1426 = vmatpush.bf16.xpose.msra.mxu0 0
    %1427 = vmatpush.bf16.xpose.msra.mxu0 0
    %1428 = vmatpush.bf16.xpose.msra.mxu0 0
    %1429 = vmatpush.bf16.xpose.msra.mxu0 0
    %1430 = vmatpush.bf16.xpose.msra.mxu0 0
    %1431 = vmatpush.bf16.xpose.msra.mxu0 %v1422
    %1432 = vmatmul.bf16.gmra.mxu0 %v1419
    %v1433 = vpop.f32.mrf.mxu0
    %v1434 = vadd.f32 0.0, %v1433
    %v1435 = vpop.f32.mrf.mxu0
    %1436 = vdwg.mxu0
    %v1437 = vsel %vm1310, %v1405, -inf
    %1438 = vmax.xlane.f32.xlu0 %v1437
    %v1439 = vpop.xlane.xlu0 %1438
    %v1440 = vsel %vm1310, %v1434, -inf
    %1441 = vmax.xlane.f32.xlu0 %v1440
    %v1442 = vpop.xlane.xlu0 %1441
    %v1443 = vsub.f32 %v1405, %v1439
    %v1444 = vsub.f32 %v1434, %v1442
    %v1445 = vmul.f32 %v1443, 1.442695
    %v1446 = vpow.pop %v1445
    %v1447 = vmul.f32 %v1444, 1.442695
    %v1448 = vpow.pop %v1447
    %v1449 = vsel %vm1310, %v1446, 0.0
    %1450 = vadd.xlane.f32.xlu0 %v1449
    %v1451 = vpop.xlane.xlu0 %1450
    %v1452 = vsel %vm1310, %v1448, 0.0
    %1453 = vadd.xlane.f32.xlu0 %v1452
    %v1454 = vpop.xlane.xlu0 %1453
    %v1455 = vrcp.pop %v1451
    %v1456 = vrcp.pop %v1454
    %v1457 = vmul.f32 %v1446, %v1455
    %v1458 = vmul.f32 %v1448, %v1456
    %v1459 = vadd.f32 %v1333, %v1457
    %v1460 = vadd.f32 %v1334, %v1458
    %v1461 = vpack.c.bf16 %v1457, %v1457
    %v1462 = vpack.c.bf16 %v1458, %v1458
    %v1464 = vunpack.c.l.b16 %v1337
    %v1465 = vpack.c.b16 %v1464, %v1464
    %1466 = vrot.lane.b32.xlu0 %v1465, 112
    %v1467 = vpop.permute.xlu0 %1466
    %v1469 = vsel %vm1339, %v1461, 0
    %v1472 = vsel %vm1343, %v1467, 0
    %1474 = vmatpush.bf16.msra.mxu0 0
    %1475 = vmatpush.bf16.msra.mxu0 0
    %1476 = vmatpush.bf16.msra.mxu0 0
    %1477 = vmatpush.bf16.msra.mxu0 0
    %1478 = vmatpush.bf16.msra.mxu0 0
    %1479 = vmatpush.bf16.msra.mxu0 0
    %1480 = vmatpush.bf16.msra.mxu0 0
    %1481 = vmatpush.bf16.msra.mxu0 %v1472
    %1482 = vmatmul.bf16.gmra.mxu0 %v1469
    %v1483 = vpop.f32.mrf.mxu0
    %v1484 = vadd.f32 0.0, %v1483
    %v1485 = vpop.f32.mrf.mxu0
    %1486 = vdwg.mxu0
    %v1488 = vunpack.c.l.b16 %v1338
    %v1489 = vpack.c.b16 %v1488, %v1488
    %1490 = vrot.lane.b32.xlu0 %v1489, 112
    %v1491 = vpop.permute.xlu0 %1490
    %v1493 = vsel %vm1339, %v1462, 0
    %v1496 = vsel %vm1343, %v1491, 0
    %1498 = vmatpush.bf16.msra.mxu0 0
    %1499 = vmatpush.bf16.msra.mxu0 0
    %1500 = vmatpush.bf16.msra.mxu0 0
    %1501 = vmatpush.bf16.msra.mxu0 0
    %1502 = vmatpush.bf16.msra.mxu0 0
    %1503 = vmatpush.bf16.msra.mxu0 0
    %1504 = vmatpush.bf16.msra.mxu0 0
    %1505 = vmatpush.bf16.msra.mxu0 %v1496
    %1506 = vmatmul.bf16.gmra.mxu0 %v1493
    %v1507 = vpop.f32.mrf.mxu0
    %v1508 = vadd.f32 0.0, %v1507
    %v1509 = vpop.f32.mrf.mxu0
    %1510 = vdwg.mxu0
    %1513 = vrot.lane.b32.xlu0 %v1484, 16
    %v1514 = vpop.permute.xlu0 %1513
    %1515 = vrot.lane.b32.xlu0 %v1508, 16
    %v1516 = vpop.permute.xlu0 %1515
    %v1519 = vsel %vm362, %v1357, %v1514
    %v1520 = vsel %vm362, %v1376, %v1516
    %s1521 = scalar_lea.vmem [#allocation8], 48
    %v1522 = vld [vmem:[%s1521] sm:$0xf]
    %v1523 = vld [vmem:[%s1521 + $0x4] sm:$0xf]
    %v1524 = vld [vmem:[%s1521 + $0x8] sm:$0xf]
    %v1525 = vld [vmem:[%s1521 + $0xc] sm:$0xf]
    %1528 = vst [vmem:[#allocation1] ss:$4 sm:$0xff] %v1519
    %s1529 = scalar_lea.vmem [#allocation1], 1
    %1530 = vst [vmem:[%s1529] ss:$4 sm:$0xff] %v1520
    %v1531 = vld.sshfl [vmem:[#allocation1] sm:$0xff pattern:$0x73625140]
    %v1533 = vpack.c.bf16 %v1531, %v1531
    %v1534 = vld [vmem:[#allocation9 + $0x3] sm:$0x1]
    %v1535 = vperm.slane %v1534, 0
    %v1540 = vunpack.c.l.b16 %v1522
    %v1541 = vunpack.c.l.b16 %v1523
    %v1542 = vunpack.c.l.b16 %v1524
    %v1543 = vunpack.c.l.b16 %v1525
    %v1544 = vpack.c.b16 %v1541, %v1540
    %v1545 = vpack.c.b16 %v1543, %v1542
    %v1549 = vsel %vm252, %v1533, 0
    %1551 = vmatpush.bf16.msra.mxu0 0
    %1552 = vmatpush.bf16.msra.mxu0 0
    %1553 = vmatpush.bf16.msra.mxu0 0
    %1554 = vmatpush.bf16.msra.mxu0 0
    %1555 = vmatpush.bf16.msra.mxu0 0
    %1556 = vmatpush.bf16.msra.mxu0 0
    %1557 = vmatpush.bf16.msra.mxu0 %v1545
    %1558 = vmatpush.bf16.msra.mxu0 %v1544
    %1559 = vmatmul.bf16.gmra.mxu0 %v1549
    %v1560 = vpop.f32.mrf.mxu0
    %v1561 = vadd.f32 %v1535, %v1560
    %v1562 = vpop.f32.mrf.mxu0
    %1563 = vdwg.mxu0
    %v1564 = vmul.f32 %v1459, 0.5
    %v1565 = vmul.f32 %v1460, 0.5
    %1566 = vst.msk [vmem:[#allocation22] sm:$0x3] %vm1310, %v1564
    %1567 = vst.msk [vmem:[#allocation22 + $0x2] sm:$0x3] %vm1310, %v1565
    %v1569 = vrot.slane %v1561, 1
    %v1570 = vrot.slane %v1561, 2
    %v1571 = vrot.slane %v1561, 3
    %v1572 = vperm.slane %v1561, 0
    %v1573 = vperm.slane %v1569, 0
    %v1574 = vperm.slane %v1570, 0
    %v1575 = vperm.slane %v1571, 0
    %v1576 = vld [vmem:[%s15] sm:$0xf]
    %v1577 = vld [vmem:[%s15 + $0x4] sm:$0xf]
    %v1578 = vld [vmem:[%s15 + $0x8] sm:$0xf]
    %v1579 = vld [vmem:[%s15 + $0xc] sm:$0xf]
    %v1580 = vld [vmem:[%s15 + $0x10] sm:$0xf]
    %v1581 = vld [vmem:[%s15 + $0x14] sm:$0xf]
    %v1582 = vld [vmem:[%s15 + $0x18] sm:$0xf]
    %v1583 = vld [vmem:[%s15 + $0x1c] sm:$0xf]
    %1584 = vst [vmem:[#allocation1] ss:$2 sm:$0xff] %v1572
    %s1585 = scalar_lea.vmem [#allocation1], 1
    %1586 = vst [vmem:[%s1585] ss:$2 sm:$0xff] %v1573
    %s1587 = scalar_lea.vmem [#allocation1], 16
    %1588 = vst [vmem:[%s1587] ss:$2 sm:$0xff] %v1574
    %s1589 = scalar_lea.vmem [#allocation1], 17
    %1590 = vst [vmem:[%s1589] ss:$2 sm:$0xff] %v1575
    %v1591 = vld.sshfl [vmem:[#allocation1] sm:$0xff pattern:$0x75316420]
    %v1592 = vld.sshfl [vmem:[#allocation1 + $0x10] sm:$0xff pattern:$0x75316420]
    %v1595 = vpack.c.bf16 %v1592, %v1591
    %v1600 = vunpack.c.l.b16 %v1580
    %v1601 = vunpack.c.l.b16 %v1581
    %v1602 = vunpack.c.l.b16 %v1582
    %v1603 = vunpack.c.l.b16 %v1583
    %v1604 = vpack.c.b16 %v1601, %v1600
    %v1605 = vpack.c.b16 %v1603, %v1602
    %v1609 = vsel %vm252, %v1595, 0
    %1611 = vmatpush.bf16.msra.mxu0 0
    %1612 = vmatpush.bf16.msra.mxu0 0
    %1613 = vmatpush.bf16.msra.mxu0 0
    %1614 = vmatpush.bf16.msra.mxu0 0
    %1615 = vmatpush.bf16.msra.mxu0 0
    %1616 = vmatpush.bf16.msra.mxu0 0
    %1617 = vmatpush.bf16.msra.mxu0 %v1605
    %1618 = vmatpush.bf16.msra.mxu0 %v1604
    %1619 = vmatmul.bf16.gmra.mxu0 %v1609
    %v1620 = vpop.f32.mrf.mxu0
    %v1621 = vadd.f32 0.0, %v1620
    %v1622 = vpop.f32.mrf.mxu0
    %v1623 = vadd.f32 0.0, %v1622
    %1624 = vdwg.mxu0
    %v1629 = vunpack.c.l.b16 %v1576
    %v1630 = vunpack.c.l.b16 %v1577
    %v1631 = vunpack.c.l.b16 %v1578
    %v1632 = vunpack.c.l.b16 %v1579
    %v1633 = vpack.c.b16 %v1630, %v1629
    %v1634 = vpack.c.b16 %v1632, %v1631
    %1637 = vmatpush.bf16.msra.mxu0 0
    %1638 = vmatpush.bf16.msra.mxu0 0
    %1639 = vmatpush.bf16.msra.mxu0 0
    %1640 = vmatpush.bf16.msra.mxu0 0
    %1641 = vmatpush.bf16.msra.mxu0 0
    %1642 = vmatpush.bf16.msra.mxu0 0
    %1643 = vmatpush.bf16.msra.mxu0 %v1634
    %1644 = vmatpush.bf16.msra.mxu0 %v1633
    %1645 = vmatmul.bf16.gmra.mxu0 %v944
    %v1646 = vpop.f32.mrf.mxu0
    %v1647 = vadd.f32 %v1621, %v1646
    %v1648 = vpop.f32.mrf.mxu0
    %v1649 = vadd.f32 %v1623, %v1648
    %1650 = vdwg.mxu0
    %v1651 = vld [vmem:[#allocation17] sm:$0x1]
    %v1652 = vperm.slane %v1651, 0
    %v1653 = vadd.f32 %v1647, %v1652
    %v1654 = vadd.f32 %v1649, %v1652
    %v1655 = vmax.f32 %v1653, 0.0
    %v1656 = vmax.f32 %v1654, 0.0
    %v1657 = vsel %vm252, %v1655, 0.0
    %1658 = vadd.xlane.f32.xlu0 %v1657
    %v1659 = vpop.xlane.xlu0 %1658
    %v1660 = vsel %vm252, %v1656, 0.0
    %1661 = vadd.xlane.f32.xlu0 %v1660
    %v1662 = vpop.xlane.xlu0 %1661
    %v1663 = vrcp.pop 32.0
    %v1664 = vmul.f32 32.0, %v1663
    %v1665 = vsub.f32 1.0, %v1664
    %v1666 = vmul.f32 %v1663, %v1665
    %v1667 = vadd.f32 %v1663, %v1666
    %vm1668 = vweird.f32 %v1663
    %v1669 = vsel %vm1668, %v1663, %v1667
    %v1670 = vmul.f32 %v1659, %v1669
    %v1671 = vmul.f32 %v1662, %v1669
    %v1672 = vsub.f32 %v1655, %v1670
    %v1673 = vsub.f32 %v1656, %v1671
    %v1674 = vmul.f32 %v1672, %v1672
    %v1675 = vmul.f32 %v1673, %v1673
    %v1676 = vsel %vm252, %v1674, 0.0
    %1677 = vadd.xlane.f32.xlu0 %v1676
    %v1678 = vpop.xlane.xlu0 %1677
    %v1679 = vsel %vm252, %v1675, 0.0
    %1680 = vadd.xlane.f32.xlu0 %v1679
    %v1681 = vpop.xlane.xlu0 %1680
    %v1682 = vmul.f32 %v1678, %v1669
    %v1683 = vmul.f32 %v1681, %v1669
    %v1684 = vadd.f32 %v1682, 1e-05
    %v1685 = vadd.f32 %v1683, 1e-05
    %v1686 = vrsqrt.pop %v1684
    %v1687 = vmul.f32 %v1686, %v1684
    %v1688 = vmul.f32 %v1687, %v1686
    %v1689 = vmul.f32 0.5, %v1688
    %v1690 = vsub.f32 1.5, %v1689
    %v1691 = vmul.f32 %v1686, %v1690
    %vm1692 = vweird.f32 %v1684
    %vm1693 = vweird.f32 %v1686
    %vm1694 = vmor %vm1692, %vm1693
    %v1695 = vsel %vm1694, %v1686, %v1691
    %v1696 = vrsqrt.pop %v1685
    %v1697 = vmul.f32 %v1696, %v1685
    %v1698 = vmul.f32 %v1697, %v1696
    %v1699 = vmul.f32 0.5, %v1698
    %v1700 = vsub.f32 1.5, %v1699
    %v1701 = vmul.f32 %v1696, %v1700
    %vm1702 = vweird.f32 %v1685
    %vm1703 = vweird.f32 %v1696
    %vm1704 = vmor %vm1702, %vm1703
    %v1705 = vsel %vm1704, %v1696, %v1701
    %v1706 = vmul.f32 %v1672, %v1695
    %v1707 = vmul.f32 %v1673, %v1705
    %v1708 = vld [vmem:[#allocation17 + $0x1] sm:$0x1]
    %v1709 = vperm.slane %v1708, 0
    %v1710 = vmul.f32 %v1706, %v1709
    %v1711 = vmul.f32 %v1707, %v1709
    %v1712 = vld [vmem:[#allocation17 + $0x2] sm:$0x1]
    %v1713 = vperm.slane %v1712, 0
    %v1714 = vadd.f32 %v1710, %v1713
    %v1715 = vadd.f32 %v1711, %v1713
    %v1716 = vld [vmem:[#allocation18] sm:$0xf]
    %v1717 = vld [vmem:[#allocation18 + $0x4] sm:$0xf]
    %v1718 = vld [vmem:[#allocation18 + $0x8] sm:$0xf]
    %v1719 = vld [vmem:[#allocation18 + $0xc] sm:$0xf]
    %v1720 = vpack.c.bf16 %v1715, %v1714
    %v1721 = vld [vmem:[#allocation17 + $0x3] sm:$0x1]
    %v1722 = vperm.slane %v1721, 0
    %v1727 = vunpack.c.l.b16 %v1716
    %v1728 = vunpack.c.l.b16 %v1717
    %v1729 = vunpack.c.l.b16 %v1718
    %v1730 = vunpack.c.l.b16 %v1719
    %v1731 = vpack.c.b16 %v1728, %v1727
    %v1732 = vpack.c.b16 %v1730, %v1729
    %v1736 = vsel %vm252, %v1720, 0
    %1738 = vmatpush.bf16.msra.mxu0 0
    %1739 = vmatpush.bf16.msra.mxu0 0
    %1740 = vmatpush.bf16.msra.mxu0 0
    %1741 = vmatpush.bf16.msra.mxu0 0
    %1742 = vmatpush.bf16.msra.mxu0 0
    %1743 = vmatpush.bf16.msra.mxu0 0
    %1744 = vmatpush.bf16.msra.mxu0 %v1732
    %1745 = vmatpush.bf16.msra.mxu0 %v1731
    %1746 = vmatmul.bf16.gmra.mxu0 %v1736
    %v1747 = vpop.f32.mrf.mxu0
    %v1748 = vadd.f32 %v1722, %v1747
    %v1749 = vpop.f32.mrf.mxu0
    %v1750 = vadd.f32 %v1722, %v1749
    %1751 = vdwg.mxu0
    %v1752 = vld [vmem:[#allocation3] sm:$0xff]
    %v1753 = vld [vmem:[#allocation3 + $0x8] sm:$0xff]
    %v1754 = vld [vmem:[#allocation3 + $0x10] sm:$0xff]
    %v1755 = vld [vmem:[#allocation3 + $0x18] sm:$0xff]
    %v1756 = vld [vmem:[#allocation3 + $0x20] sm:$0xff]
    %v1757 = vld [vmem:[#allocation3 + $0x28] sm:$0xff]
    %v1758 = vld [vmem:[#allocation3 + $0x30] sm:$0xff]
    %v1759 = vld [vmem:[#allocation3 + $0x38] sm:$0xff]
    %v1760 = vld [vmem:[#allocation3 + $0x40] sm:$0xff]
    %v1761 = vld [vmem:[#allocation3 + $0x48] sm:$0xff]
    %v1762 = vld [vmem:[#allocation3 + $0x50] sm:$0xff]
    %v1763 = vld [vmem:[#allocation3 + $0x58] sm:$0xff]
    %v1764 = vld [vmem:[#allocation3 + $0x60] sm:$0xff]
    %v1765 = vld [vmem:[#allocation3 + $0x68] sm:$0xff]
    %v1766 = vld [vmem:[#allocation3 + $0x70] sm:$0xff]
    %v1767 = vld [vmem:[#allocation3 + $0x78] sm:$0xff]
    %s1768 = scalar_lea.vmem [#allocation11], 16
    %v1769 = vld [vmem:[%s1768] sm:$0xf]
    %v1770 = vld [vmem:[%s1768 + $0x4] sm:$0xf]
    %v1771 = vld [vmem:[%s1768 + $0x8] sm:$0xf]
    %v1772 = vld [vmem:[%s1768 + $0xc] sm:$0xf]
    %v1773 = vpack.c.bf16 %v1753, %v1752
    %v1774 = vpack.c.bf16 %v1755, %v1754
    %v1775 = vpack.c.bf16 %v1757, %v1756
    %v1776 = vpack.c.bf16 %v1759, %v1758
    %v1777 = vpack.c.bf16 %v1761, %v1760
    %v1778 = vpack.c.bf16 %v1763, %v1762
    %v1779 = vpack.c.bf16 %v1765, %v1764
    %v1780 = vpack.c.bf16 %v1767, %v1766
    %v1785 = vunpack.c.l.b16 %v1769
    %v1786 = vunpack.c.l.b16 %v1770
    %v1787 = vunpack.c.l.b16 %v1771
    %v1788 = vunpack.c.l.b16 %v1772
    %v1789 = vpack.c.b16 %v1786, %v1785
    %v1790 = vpack.c.b16 %v1788, %v1787
    %v1794 = vsel %vm252, %v1773, 0
    %v1797 = vsel %vm252, %v1774, 0
    %v1800 = vsel %vm252, %v1775, 0
    %v1803 = vsel %vm252, %v1776, 0
    %v1806 = vsel %vm252, %v1777, 0
    %v1809 = vsel %vm252, %v1778, 0
    %v1812 = vsel %vm252, %v1779, 0
    %v1815 = vsel %vm252, %v1780, 0
    %1817 = vmatpush.bf16.msra.mxu0 0
    %1818 = vmatpush.bf16.msra.mxu0 0
    %1819 = vmatpush.bf16.msra.mxu0 0
    %1820 = vmatpush.bf16.msra.mxu0 0
    %1821 = vmatpush.bf16.msra.mxu0 0
    %1822 = vmatpush.bf16.msra.mxu0 0
    %1823 = vmatpush.bf16.msra.mxu0 %v1790
    %1824 = vmatpush.bf16.msra.mxu0 %v1789
    %1825 = vmatmul.bf16.gmra.mxu0 %v1794
    %v1826 = vpop.f32.mrf.mxu0
    %v1827 = vadd.f32 0.0, %v1826
    %v1828 = vpop.f32.mrf.mxu0
    %v1829 = vadd.f32 0.0, %v1828
    %1830 = vmatmul.bf16.gmra.mxu0 %v1797
    %v1831 = vpop.f32.mrf.mxu0
    %v1832 = vadd.f32 0.0, %v1831
    %v1833 = vpop.f32.mrf.mxu0
    %v1834 = vadd.f32 0.0, %v1833
    %1835 = vmatmul.bf16.gmra.mxu0 %v1800
    %v1836 = vpop.f32.mrf.mxu0
    %v1837 = vadd.f32 0.0, %v1836
    %v1838 = vpop.f32.mrf.mxu0
    %v1839 = vadd.f32 0.0, %v1838
    %1840 = vmatmul.bf16.gmra.mxu0 %v1803
    %v1841 = vpop.f32.mrf.mxu0
    %v1842 = vadd.f32 0.0, %v1841
    %v1843 = vpop.f32.mrf.mxu0
    %v1844 = vadd.f32 0.0, %v1843
    %1845 = vmatmul.bf16.gmra.mxu0 %v1806
    %v1846 = vpop.f32.mrf.mxu0
    %v1847 = vadd.f32 0.0, %v1846
    %v1848 = vpop.f32.mrf.mxu0
    %v1849 = vadd.f32 0.0, %v1848
    %1850 = vmatmul.bf16.gmra.mxu0 %v1809
    %v1851 = vpop.f32.mrf.mxu0
    %v1852 = vadd.f32 0.0, %v1851
    %v1853 = vpop.f32.mrf.mxu0
    %v1854 = vadd.f32 0.0, %v1853
    %1855 = vmatmul.bf16.gmra.mxu0 %v1812
    %v1856 = vpop.f32.mrf.mxu0
    %v1857 = vadd.f32 0.0, %v1856
    %v1858 = vpop.f32.mrf.mxu0
    %v1859 = vadd.f32 0.0, %v1858
    %1860 = vmatmul.bf16.gmra.mxu0 %v1815
    %v1861 = vpop.f32.mrf.mxu0
    %v1862 = vadd.f32 0.0, %v1861
    %v1863 = vpop.f32.mrf.mxu0
    %v1864 = vadd.f32 0.0, %v1863
    %1865 = vdwg.mxu0
    %v1866 = vld [vmem:[%s8] sm:$0xff]
    %v1867 = vadd.f32 %v1827, %v1866
    %v1868 = vadd.f32 %v1829, %v1866
    %v1869 = vadd.f32 %v1832, %v1866
    %v1870 = vadd.f32 %v1834, %v1866
    %v1871 = vadd.f32 %v1837, %v1866
    %v1872 = vadd.f32 %v1839, %v1866
    %v1873 = vadd.f32 %v1842, %v1866
    %v1874 = vadd.f32 %v1844, %v1866
    %v1875 = vadd.f32 %v1847, %v1866
    %v1876 = vadd.f32 %v1849, %v1866
    %v1877 = vadd.f32 %v1852, %v1866
    %v1878 = vadd.f32 %v1854, %v1866
    %v1879 = vadd.f32 %v1857, %v1866
    %v1880 = vadd.f32 %v1859, %v1866
    %v1881 = vadd.f32 %v1862, %v1866
    %v1882 = vadd.f32 %v1864, %v1866
    %s1883 = scalar_lea.vmem [#allocation11], 32
    %v1884 = vld [vmem:[%s1883] sm:$0xf]
    %v1885 = vld [vmem:[%s1883 + $0x4] sm:$0xf]
    %v1886 = vld [vmem:[%s1883 + $0x8] sm:$0xf]
    %v1887 = vld [vmem:[%s1883 + $0xc] sm:$0xf]
    %v1892 = vunpack.c.l.b16 %v1884
    %v1893 = vunpack.c.l.b16 %v1885
    %v1894 = vunpack.c.l.b16 %v1886
    %v1895 = vunpack.c.l.b16 %v1887
    %v1896 = vpack.c.b16 %v1893, %v1892
    %v1897 = vpack.c.b16 %v1895, %v1894
    %1900 = vmatpush.bf16.msra.mxu0 0
    %1901 = vmatpush.bf16.msra.mxu0 0
    %1902 = vmatpush.bf16.msra.mxu0 0
    %1903 = vmatpush.bf16.msra.mxu0 0
    %1904 = vmatpush.bf16.msra.mxu0 0
    %1905 = vmatpush.bf16.msra.mxu0 0
    %1906 = vmatpush.bf16.msra.mxu0 %v1897
    %1907 = vmatpush.bf16.msra.mxu0 %v1896
    %1908 = vmatmul.bf16.gmra.mxu0 %v1794
    %v1909 = vpop.f32.mrf.mxu0
    %v1910 = vadd.f32 0.0, %v1909
    %v1911 = vpop.f32.mrf.mxu0
    %v1912 = vadd.f32 0.0, %v1911
    %1913 = vmatmul.bf16.gmra.mxu0 %v1797
    %v1914 = vpop.f32.mrf.mxu0
    %v1915 = vadd.f32 0.0, %v1914
    %v1916 = vpop.f32.mrf.mxu0
    %v1917 = vadd.f32 0.0, %v1916
    %1918 = vmatmul.bf16.gmra.mxu0 %v1800
    %v1919 = vpop.f32.mrf.mxu0
    %v1920 = vadd.f32 0.0, %v1919
    %v1921 = vpop.f32.mrf.mxu0
    %v1922 = vadd.f32 0.0, %v1921
    %1923 = vmatmul.bf16.gmra.mxu0 %v1803
    %v1924 = vpop.f32.mrf.mxu0
    %v1925 = vadd.f32 0.0, %v1924
    %v1926 = vpop.f32.mrf.mxu0
    %v1927 = vadd.f32 0.0, %v1926
    %1928 = vmatmul.bf16.gmra.mxu0 %v1806
    %v1929 = vpop.f32.mrf.mxu0
    %v1930 = vadd.f32 0.0, %v1929
    %v1931 = vpop.f32.mrf.mxu0
    %v1932 = vadd.f32 0.0, %v1931
    %1933 = vmatmul.bf16.gmra.mxu0 %v1809
    %v1934 = vpop.f32.mrf.mxu0
    %v1935 = vadd.f32 0.0, %v1934
    %v1936 = vpop.f32.mrf.mxu0
    %v1937 = vadd.f32 0.0, %v1936
    %1938 = vmatmul.bf16.gmra.mxu0 %v1812
    %v1939 = vpop.f32.mrf.mxu0
    %v1940 = vadd.f32 0.0, %v1939
    %v1941 = vpop.f32.mrf.mxu0
    %v1942 = vadd.f32 0.0, %v1941
    %1943 = vmatmul.bf16.gmra.mxu0 %v1815
    %v1944 = vpop.f32.mrf.mxu0
    %v1945 = vadd.f32 0.0, %v1944
    %v1946 = vpop.f32.mrf.mxu0
    %v1947 = vadd.f32 0.0, %v1946
    %1948 = vdwg.mxu0
    %s1949 = scalar_lea.vmem %s8, 8
    %v1950 = vld [vmem:[%s1949] sm:$0xff]
    %v1951 = vadd.f32 %v1910, %v1950
    %v1952 = vadd.f32 %v1912, %v1950
    %v1953 = vadd.f32 %v1915, %v1950
    %v1954 = vadd.f32 %v1917, %v1950
    %v1955 = vadd.f32 %v1920, %v1950
    %v1956 = vadd.f32 %v1922, %v1950
    %v1957 = vadd.f32 %v1925, %v1950
    %v1958 = vadd.f32 %v1927, %v1950
    %v1959 = vadd.f32 %v1930, %v1950
    %v1960 = vadd.f32 %v1932, %v1950
    %v1961 = vadd.f32 %v1935, %v1950
    %v1962 = vadd.f32 %v1937, %v1950
    %v1963 = vadd.f32 %v1940, %v1950
    %v1964 = vadd.f32 %v1942, %v1950
    %v1965 = vadd.f32 %v1945, %v1950
    %v1966 = vadd.f32 %v1947, %v1950
    %v1967 = vld [vmem:[#allocation11] sm:$0xf]
    %v1968 = vld [vmem:[#allocation11 + $0x4] sm:$0xf]
    %v1969 = vld [vmem:[#allocation11 + $0x8] sm:$0xf]
    %v1970 = vld [vmem:[#allocation11 + $0xc] sm:$0xf]
    %v1971 = vld [vmem:[%s7] sm:$0x1]
    %v1973 = vperm.slane %v1971, 0
    %v1979 = vunpack.c.l.b16 %v1967
    %v1980 = vunpack.c.l.b16 %v1968
    %v1981 = vunpack.c.l.b16 %v1969
    %v1982 = vunpack.c.l.b16 %v1970
    %v1983 = vpack.c.b16 %v1980, %v1979
    %v1984 = vpack.c.b16 %v1982, %v1981
    %1987 = vmatpush.bf16.msra.mxu0 0
    %1988 = vmatpush.bf16.msra.mxu0 0
    %1989 = vmatpush.bf16.msra.mxu0 0
    %1990 = vmatpush.bf16.msra.mxu0 0
    %1991 = vmatpush.bf16.msra.mxu0 0
    %1992 = vmatpush.bf16.msra.mxu0 0
    %1993 = vmatpush.bf16.msra.mxu0 %v1984
    %1994 = vmatpush.bf16.msra.mxu0 %v1983
    %1995 = vmatmul.bf16.gmra.mxu0 %v254
    %v1996 = vpop.f32.mrf.mxu0
    %v1997 = vadd.f32 %v1973, %v1996
    %v1998 = vpop.f32.mrf.mxu0
    %v1999 = vadd.f32 %v1973, %v1998
    %2000 = vdwg.mxu0
    %v2003 = vrot.slane %v1997, 1
    %v2004 = vrot.slane %v1997, 2
    %v2005 = vrot.slane %v1997, 3
    %v2006 = vrot.slane %v1997, 4
    %v2007 = vrot.slane %v1997, 5
    %v2008 = vrot.slane %v1997, 6
    %v2009 = vrot.slane %v1997, 7
    %v2010 = vrot.slane %v1999, 1
    %v2011 = vrot.slane %v1999, 2
    %v2012 = vrot.slane %v1999, 3
    %v2013 = vrot.slane %v1999, 4
    %v2014 = vrot.slane %v1999, 5
    %v2015 = vrot.slane %v1999, 6
    %v2016 = vrot.slane %v1999, 7
    %v2017 = vperm.slane %v1997, 0
    %v2018 = vperm.slane %v2003, 0
    %v2019 = vperm.slane %v2004, 0
    %v2020 = vperm.slane %v2005, 0
    %v2021 = vperm.slane %v2006, 0
    %v2022 = vperm.slane %v2007, 0
    %v2023 = vperm.slane %v2008, 0
    %v2024 = vperm.slane %v2009, 0
    %v2025 = vperm.slane %v1999, 0
    %v2026 = vperm.slane %v2010, 0
    %v2027 = vperm.slane %v2011, 0
    %v2028 = vperm.slane %v2012, 0
    %v2029 = vperm.slane %v2013, 0
    %v2030 = vperm.slane %v2014, 0
    %v2031 = vperm.slane %v2015, 0
    %v2032 = vperm.slane %v2016, 0
    %v2049 = vmul.f32 %v1867, %v2017
    %v2050 = vmul.f32 %v1868, %v2018
    %v2051 = vmul.f32 %v1869, %v2019
    %v2052 = vmul.f32 %v1870, %v2020
    %v2053 = vmul.f32 %v1871, %v2021
    %v2054 = vmul.f32 %v1872, %v2022
    %v2055 = vmul.f32 %v1873, %v2023
    %v2056 = vmul.f32 %v1874, %v2024
    %v2057 = vmul.f32 %v1875, %v2025
    %v2058 = vmul.f32 %v1876, %v2026
    %v2059 = vmul.f32 %v1877, %v2027
    %v2060 = vmul.f32 %v1878, %v2028
    %v2061 = vmul.f32 %v1879, %v2029
    %v2062 = vmul.f32 %v1880, %v2030
    %v2063 = vmul.f32 %v1881, %v2031
    %v2064 = vmul.f32 %v1882, %v2032
    %v2065 = vsel %vm362, %v2049, 0.0
    %2066 = vadd.xlane.f32.xlu0 %v2065
    %v2067 = vpop.xlane.xlu0 %2066
    %v2068 = vsel %vm362, %v2050, 0.0
    %2069 = vadd.xlane.f32.xlu0 %v2068
    %v2070 = vpop.xlane.xlu0 %2069
    %v2071 = vsel %vm362, %v2051, 0.0
    %2072 = vadd.xlane.f32.xlu0 %v2071
    %v2073 = vpop.xlane.xlu0 %2072
    %v2074 = vsel %vm362, %v2052, 0.0
    %2075 = vadd.xlane.f32.xlu0 %v2074
    %v2076 = vpop.xlane.xlu0 %2075
    %v2077 = vsel %vm362, %v2053, 0.0
    %2078 = vadd.xlane.f32.xlu0 %v2077
    %v2079 = vpop.xlane.xlu0 %2078
    %v2080 = vsel %vm362, %v2054, 0.0
    %2081 = vadd.xlane.f32.xlu0 %v2080
    %v2082 = vpop.xlane.xlu0 %2081
    %v2083 = vsel %vm362, %v2055, 0.0
    %2084 = vadd.xlane.f32.xlu0 %v2083
    %v2085 = vpop.xlane.xlu0 %2084
    %v2086 = vsel %vm362, %v2056, 0.0
    %2087 = vadd.xlane.f32.xlu0 %v2086
    %v2088 = vpop.xlane.xlu0 %2087
    %v2089 = vsel %vm362, %v2057, 0.0
    %2090 = vadd.xlane.f32.xlu0 %v2089
    %v2091 = vpop.xlane.xlu0 %2090
    %v2092 = vsel %vm362, %v2058, 0.0
    %2093 = vadd.xlane.f32.xlu0 %v2092
    %v2094 = vpop.xlane.xlu0 %2093
    %v2095 = vsel %vm362, %v2059, 0.0
    %2096 = vadd.xlane.f32.xlu0 %v2095
    %v2097 = vpop.xlane.xlu0 %2096
    %v2098 = vsel %vm362, %v2060, 0.0
    %2099 = vadd.xlane.f32.xlu0 %v2098
    %v2100 = vpop.xlane.xlu0 %2099
    %v2101 = vsel %vm362, %v2061, 0.0
    %2102 = vadd.xlane.f32.xlu0 %v2101
    %v2103 = vpop.xlane.xlu0 %2102
    %v2104 = vsel %vm362, %v2062, 0.0
    %2105 = vadd.xlane.f32.xlu0 %v2104
    %v2106 = vpop.xlane.xlu0 %2105
    %v2107 = vsel %vm362, %v2063, 0.0
    %2108 = vadd.xlane.f32.xlu0 %v2107
    %v2109 = vpop.xlane.xlu0 %2108
    %v2110 = vsel %vm362, %v2064, 0.0
    %2111 = vadd.xlane.f32.xlu0 %v2110
    %v2112 = vpop.xlane.xlu0 %2111
    %v2129 = vlaneseq
    %v2130 = vand.u32 %v2129, 127
    %v2131 = vperm.slane %v2067, %v2130
    %v2132 = vperm.slane %v2070, %v2130
    %v2133 = vperm.slane %v2073, %v2130
    %v2134 = vperm.slane %v2076, %v2130
    %v2135 = vperm.slane %v2079, %v2130
    %v2136 = vperm.slane %v2082, %v2130
    %v2137 = vperm.slane %v2085, %v2130
    %v2138 = vperm.slane %v2088, %v2130
    %v2139 = vperm.slane %v2091, %v2130
    %v2140 = vperm.slane %v2094, %v2130
    %v2141 = vperm.slane %v2097, %v2130
    %v2142 = vperm.slane %v2100, %v2130
    %v2143 = vperm.slane %v2103, %v2130
    %v2144 = vperm.slane %v2106, %v2130
    %v2145 = vperm.slane %v2109, %v2130
    %v2146 = vperm.slane %v2112, %v2130
    %v2147 = vsel %vm1158, %v2132, %v2131
    %v2148 = vsel %vm1161, %v2133, %v2147
    %v2149 = vsel %vm1164, %v2134, %v2148
    %vm2150 = vcmask 1044484
    %v2151 = vsel %vm2150, %v2135, %v2149
    %vm2152 = vcmask 1045509
    %v2153 = vsel %vm2152, %v2136, %v2151
    %vm2154 = vcmask 1046534
    %v2155 = vsel %vm2154, %v2137, %v2153
    %vm2156 = vcmask 1047559
    %v2157 = vsel %vm2156, %v2138, %v2155
    %v2158 = vsel %vm1158, %v2140, %v2139
    %v2159 = vsel %vm1161, %v2141, %v2158
    %v2160 = vsel %vm1164, %v2142, %v2159
    %v2161 = vsel %vm2150, %v2143, %v2160
    %v2162 = vsel %vm2152, %v2144, %v2161
    %v2163 = vsel %vm2154, %v2145, %v2162
    %v2164 = vsel %vm2156, %v2146, %v2163
    %vm2167 = vcmask 64512
    %v2168 = vsel %vm2167, %v2157, -inf
    %2169 = vmax.xlane.f32.xlu0 %v2168
    %v2170 = vpop.xlane.xlu0 %2169
    %v2171 = vsel %vm2167, %v2164, -inf
    %2172 = vmax.xlane.f32.xlu0 %v2171
    %v2173 = vpop.xlane.xlu0 %2172
    %v2176 = vperm.slane %v2170, 0
    %v2177 = vperm.slane %v2170, 1
    %v2178 = vperm.slane %v2170, 2
    %v2179 = vperm.slane %v2170, 3
    %v2180 = vperm.slane %v2170, 4
    %v2181 = vperm.slane %v2170, 5
    %v2182 = vperm.slane %v2170, 6
    %v2183 = vperm.slane %v2170, 7
    %v2184 = vperm.slane %v2173, 0
    %v2185 = vperm.slane %v2173, 1
    %v2186 = vperm.slane %v2173, 2
    %v2187 = vperm.slane %v2173, 3
    %v2188 = vperm.slane %v2173, 4
    %v2189 = vperm.slane %v2173, 5
    %v2190 = vperm.slane %v2173, 6
    %v2191 = vperm.slane %v2173, 7
    %v2208 = vsub.f32 %v2067, %v2176
    %v2209 = vsub.f32 %v2070, %v2177
    %v2210 = vsub.f32 %v2073, %v2178
    %v2211 = vsub.f32 %v2076, %v2179
    %v2212 = vsub.f32 %v2079, %v2180
    %v2213 = vsub.f32 %v2082, %v2181
    %v2214 = vsub.f32 %v2085, %v2182
    %v2215 = vsub.f32 %v2088, %v2183
    %v2216 = vsub.f32 %v2091, %v2184
    %v2217 = vsub.f32 %v2094, %v2185
    %v2218 = vsub.f32 %v2097, %v2186
    %v2219 = vsub.f32 %v2100, %v2187
    %v2220 = vsub.f32 %v2103, %v2188
    %v2221 = vsub.f32 %v2106, %v2189
    %v2222 = vsub.f32 %v2109, %v2190
    %v2223 = vsub.f32 %v2112, %v2191
    %v2224 = vmul.f32 %v2208, 1.442695
    %v2225 = vpow.pop %v2224
    %v2226 = vmul.f32 %v2209, 1.442695
    %v2227 = vpow.pop %v2226
    %v2228 = vmul.f32 %v2210, 1.442695
    %v2229 = vpow.pop %v2228
    %v2230 = vmul.f32 %v2211, 1.442695
    %v2231 = vpow.pop %v2230
    %v2232 = vmul.f32 %v2212, 1.442695
    %v2233 = vpow.pop %v2232
    %v2234 = vmul.f32 %v2213, 1.442695
    %v2235 = vpow.pop %v2234
    %v2236 = vmul.f32 %v2214, 1.442695
    %v2237 = vpow.pop %v2236
    %v2238 = vmul.f32 %v2215, 1.442695
    %v2239 = vpow.pop %v2238
    %v2240 = vmul.f32 %v2216, 1.442695
    %v2241 = vpow.pop %v2240
    %v2242 = vmul.f32 %v2217, 1.442695
    %v2243 = vpow.pop %v2242
    %v2244 = vmul.f32 %v2218, 1.442695
    %v2245 = vpow.pop %v2244
    %v2246 = vmul.f32 %v2219, 1.442695
    %v2247 = vpow.pop %v2246
    %v2248 = vmul.f32 %v2220, 1.442695
    %v2249 = vpow.pop %v2248
    %v2250 = vmul.f32 %v2221, 1.442695
    %v2251 = vpow.pop %v2250
    %v2252 = vmul.f32 %v2222, 1.442695
    %v2253 = vpow.pop %v2252
    %v2254 = vmul.f32 %v2223, 1.442695
    %v2255 = vpow.pop %v2254
    %2272 = vset.pattern.permute.xlu0 0
    %2273 = vperm.xlu0 %2272, %v2225
    %v2274 = vpop.permute.xlu0 %2273
    %2275 = vset.pattern.permute.xlu0 0
    %2276 = vperm.xlu0 %2275, %v2227
    %v2277 = vpop.permute.xlu0 %2276
    %2278 = vset.pattern.permute.xlu0 0
    %2279 = vperm.xlu0 %2278, %v2229
    %v2280 = vpop.permute.xlu0 %2279
    %2281 = vset.pattern.permute.xlu0 0
    %2282 = vperm.xlu0 %2281, %v2231
    %v2283 = vpop.permute.xlu0 %2282
    %2284 = vset.pattern.permute.xlu0 0
    %2285 = vperm.xlu0 %2284, %v2233
    %v2286 = vpop.permute.xlu0 %2285
    %2287 = vset.pattern.permute.xlu0 0
    %2288 = vperm.xlu0 %2287, %v2235
    %v2289 = vpop.permute.xlu0 %2288
    %2290 = vset.pattern.permute.xlu0 0
    %2291 = vperm.xlu0 %2290, %v2237
    %v2292 = vpop.permute.xlu0 %2291
    %2293 = vset.pattern.permute.xlu0 0
    %2294 = vperm.xlu0 %2293, %v2239
    %v2295 = vpop.permute.xlu0 %2294
    %2296 = vset.pattern.permute.xlu0 0
    %2297 = vperm.xlu0 %2296, %v2241
    %v2298 = vpop.permute.xlu0 %2297
    %2299 = vset.pattern.permute.xlu0 0
    %2300 = vperm.xlu0 %2299, %v2243
    %v2301 = vpop.permute.xlu0 %2300
    %2302 = vset.pattern.permute.xlu0 0
    %2303 = vperm.xlu0 %2302, %v2245
    %v2304 = vpop.permute.xlu0 %2303
    %2305 = vset.pattern.permute.xlu0 0
    %2306 = vperm.xlu0 %2305, %v2247
    %v2307 = vpop.permute.xlu0 %2306
    %2308 = vset.pattern.permute.xlu0 0
    %2309 = vperm.xlu0 %2308, %v2249
    %v2310 = vpop.permute.xlu0 %2309
    %2311 = vset.pattern.permute.xlu0 0
    %2312 = vperm.xlu0 %2311, %v2251
    %v2313 = vpop.permute.xlu0 %2312
    %2314 = vset.pattern.permute.xlu0 0
    %2315 = vperm.xlu0 %2314, %v2253
    %v2316 = vpop.permute.xlu0 %2315
    %2317 = vset.pattern.permute.xlu0 0
    %2318 = vperm.xlu0 %2317, %v2255
    %v2319 = vpop.permute.xlu0 %2318
    %v2320 = vperm.slane %v2274, %v2130
    %v2321 = vperm.slane %v2277, %v2130
    %v2322 = vperm.slane %v2280, %v2130
    %v2323 = vperm.slane %v2283, %v2130
    %v2324 = vperm.slane %v2286, %v2130
    %v2325 = vperm.slane %v2289, %v2130
    %v2326 = vperm.slane %v2292, %v2130
    %v2327 = vperm.slane %v2295, %v2130
    %v2328 = vperm.slane %v2298, %v2130
    %v2329 = vperm.slane %v2301, %v2130
    %v2330 = vperm.slane %v2304, %v2130
    %v2331 = vperm.slane %v2307, %v2130
    %v2332 = vperm.slane %v2310, %v2130
    %v2333 = vperm.slane %v2313, %v2130
    %v2334 = vperm.slane %v2316, %v2130
    %v2335 = vperm.slane %v2319, %v2130
    %v2336 = vsel %vm1158, %v2321, %v2320
    %v2337 = vsel %vm1161, %v2322, %v2336
    %v2338 = vsel %vm1164, %v2323, %v2337
    %v2339 = vsel %vm2150, %v2324, %v2338
    %v2340 = vsel %vm2152, %v2325, %v2339
    %v2341 = vsel %vm2154, %v2326, %v2340
    %v2342 = vsel %vm2156, %v2327, %v2341
    %v2343 = vsel %vm1158, %v2329, %v2328
    %v2344 = vsel %vm1161, %v2330, %v2343
    %v2345 = vsel %vm1164, %v2331, %v2344
    %v2346 = vsel %vm2150, %v2332, %v2345
    %v2347 = vsel %vm2152, %v2333, %v2346
    %v2348 = vsel %vm2154, %v2334, %v2347
    %v2349 = vsel %vm2156, %v2335, %v2348
    %v2352 = vsel %vm2167, %v2342, 0.0
    %2353 = vadd.xlane.f32.xlu0 %v2352
    %v2354 = vpop.xlane.xlu0 %2353
    %v2355 = vsel %vm2167, %v2349, 0.0
    %2356 = vadd.xlane.f32.xlu0 %v2355
    %v2357 = vpop.xlane.xlu0 %2356
    %v2358 = vrcp.pop %v2354
    %v2359 = vrcp.pop %v2357
    %v2362 = vperm.slane %v2358, 0
    %v2363 = vperm.slane %v2358, 1
    %v2364 = vperm.slane %v2358, 2
    %v2365 = vperm.slane %v2358, 3
    %v2366 = vperm.slane %v2358, 4
    %v2367 = vperm.slane %v2358, 5
    %v2368 = vperm.slane %v2358, 6
    %v2369 = vperm.slane %v2358, 7
    %v2370 = vperm.slane %v2359, 0
    %v2371 = vperm.slane %v2359, 1
    %v2372 = vperm.slane %v2359, 2
    %v2373 = vperm.slane %v2359, 3
    %v2374 = vperm.slane %v2359, 4
    %v2375 = vperm.slane %v2359, 5
    %v2376 = vperm.slane %v2359, 6
    %v2377 = vperm.slane %v2359, 7
    %v2394 = vmul.f32 %v2225, %v2362
    %v2395 = vmul.f32 %v2227, %v2363
    %v2396 = vmul.f32 %v2229, %v2364
    %v2397 = vmul.f32 %v2231, %v2365
    %v2398 = vmul.f32 %v2233, %v2366
    %v2399 = vmul.f32 %v2235, %v2367
    %v2400 = vmul.f32 %v2237, %v2368
    %v2401 = vmul.f32 %v2239, %v2369
    %v2402 = vmul.f32 %v2241, %v2370
    %v2403 = vmul.f32 %v2243, %v2371
    %v2404 = vmul.f32 %v2245, %v2372
    %v2405 = vmul.f32 %v2247, %v2373
    %v2406 = vmul.f32 %v2249, %v2374
    %v2407 = vmul.f32 %v2251, %v2375
    %v2408 = vmul.f32 %v2253, %v2376
    %v2409 = vmul.f32 %v2255, %v2377
    %v2410 = vadd.f32 %v2394, 0.0
    %v2411 = vadd.f32 %v2395, 0.0
    %v2412 = vadd.f32 %v2396, 0.0
    %v2413 = vadd.f32 %v2397, 0.0
    %v2414 = vadd.f32 %v2398, 0.0
    %v2415 = vadd.f32 %v2399, 0.0
    %v2416 = vadd.f32 %v2400, 0.0
    %v2417 = vadd.f32 %v2401, 0.0
    %v2418 = vadd.f32 %v2402, 0.0
    %v2419 = vadd.f32 %v2403, 0.0
    %v2420 = vadd.f32 %v2404, 0.0
    %v2421 = vadd.f32 %v2405, 0.0
    %v2422 = vadd.f32 %v2406, 0.0
    %v2423 = vadd.f32 %v2407, 0.0
    %v2424 = vadd.f32 %v2408, 0.0
    %v2425 = vadd.f32 %v2409, 0.0
    %2427 = vset.pattern.permute.xlu0 0
    %2428 = vperm.xlu0 %2427, %v2394
    %v2429 = vpop.permute.xlu0 %2428
    %2432 = vset.pattern.permute.xlu0 0
    %2433 = vperm.xlu0 %2432, %v2395
    %v2434 = vpop.permute.xlu0 %2433
    %2437 = vset.pattern.permute.xlu0 0
    %2438 = vperm.xlu0 %2437, %v2396
    %v2439 = vpop.permute.xlu0 %2438
    %2442 = vset.pattern.permute.xlu0 0
    %2443 = vperm.xlu0 %2442, %v2397
    %v2444 = vpop.permute.xlu0 %2443
    %2447 = vset.pattern.permute.xlu0 0
    %2448 = vperm.xlu0 %2447, %v2398
    %v2449 = vpop.permute.xlu0 %2448
    %2452 = vset.pattern.permute.xlu0 0
    %2453 = vperm.xlu0 %2452, %v2399
    %v2454 = vpop.permute.xlu0 %2453
    %2457 = vset.pattern.permute.xlu0 0
    %2458 = vperm.xlu0 %2457, %v2400
    %v2459 = vpop.permute.xlu0 %2458
    %2462 = vset.pattern.permute.xlu0 0
    %2463 = vperm.xlu0 %2462, %v2401
    %v2464 = vpop.permute.xlu0 %2463
    %2467 = vset.pattern.permute.xlu0 0
    %2468 = vperm.xlu0 %2467, %v2402
    %v2469 = vpop.permute.xlu0 %2468
    %2472 = vset.pattern.permute.xlu0 0
    %2473 = vperm.xlu0 %2472, %v2403
    %v2474 = vpop.permute.xlu0 %2473
    %2477 = vset.pattern.permute.xlu0 0
    %2478 = vperm.xlu0 %2477, %v2404
    %v2479 = vpop.permute.xlu0 %2478
    %2482 = vset.pattern.permute.xlu0 0
    %2483 = vperm.xlu0 %2482, %v2405
    %v2484 = vpop.permute.xlu0 %2483
    %2487 = vset.pattern.permute.xlu0 0
    %2488 = vperm.xlu0 %2487, %v2406
    %v2489 = vpop.permute.xlu0 %2488
    %2492 = vset.pattern.permute.xlu0 0
    %2493 = vperm.xlu0 %2492, %v2407
    %v2494 = vpop.permute.xlu0 %2493
    %2497 = vset.pattern.permute.xlu0 0
    %2498 = vperm.xlu0 %2497, %v2408
    %v2499 = vpop.permute.xlu0 %2498
    %2502 = vset.pattern.permute.xlu0 0
    %2503 = vperm.xlu0 %2502, %v2409
    %v2504 = vpop.permute.xlu0 %2503
    %v2506 = vmul.f32 %v2429, %v1951
    %v2507 = vmul.f32 %v2434, %v1952
    %v2508 = vmul.f32 %v2439, %v1953
    %v2509 = vmul.f32 %v2444, %v1954
    %v2510 = vmul.f32 %v2449, %v1955
    %v2511 = vmul.f32 %v2454, %v1956
    %v2512 = vmul.f32 %v2459, %v1957
    %v2513 = vmul.f32 %v2464, %v1958
    %v2514 = vmul.f32 %v2469, %v1959
    %v2515 = vmul.f32 %v2474, %v1960
    %v2516 = vmul.f32 %v2479, %v1961
    %v2517 = vmul.f32 %v2484, %v1962
    %v2518 = vmul.f32 %v2489, %v1963
    %v2519 = vmul.f32 %v2494, %v1964
    %v2520 = vmul.f32 %v2499, %v1965
    %v2521 = vmul.f32 %v2504, %v1966
    %v2522 = vsel %vm362, %v2506, 0.0
    %v2523 = vrot.slane %v2522, 4
    %v2524 = vadd.f32 %v2522, %v2523
    %v2525 = vrot.slane %v2524, 2
    %v2526 = vadd.f32 %v2524, %v2525
    %v2527 = vrot.slane %v2526, 1
    %v2528 = vadd.f32 %v2526, %v2527
    %v2529 = vsel %vm362, %v2507, 0.0
    %v2530 = vrot.slane %v2529, 4
    %v2531 = vadd.f32 %v2529, %v2530
    %v2532 = vrot.slane %v2531, 2
    %v2533 = vadd.f32 %v2531, %v2532
    %v2534 = vrot.slane %v2533, 1
    %v2535 = vadd.f32 %v2533, %v2534
    %v2536 = vsel %vm362, %v2508, 0.0
    %v2537 = vrot.slane %v2536, 4
    %v2538 = vadd.f32 %v2536, %v2537
    %v2539 = vrot.slane %v2538, 2
    %v2540 = vadd.f32 %v2538, %v2539
    %v2541 = vrot.slane %v2540, 1
    %v2542 = vadd.f32 %v2540, %v2541
    %v2543 = vsel %vm362, %v2509, 0.0
    %v2544 = vrot.slane %v2543, 4
    %v2545 = vadd.f32 %v2543, %v2544
    %v2546 = vrot.slane %v2545, 2
    %v2547 = vadd.f32 %v2545, %v2546
    %v2548 = vrot.slane %v2547, 1
    %v2549 = vadd.f32 %v2547, %v2548
    %v2550 = vsel %vm362, %v2510, 0.0
    %v2551 = vrot.slane %v2550, 4
    %v2552 = vadd.f32 %v2550, %v2551
    %v2553 = vrot.slane %v2552, 2
    %v2554 = vadd.f32 %v2552, %v2553
    %v2555 = vrot.slane %v2554, 1
    %v2556 = vadd.f32 %v2554, %v2555
    %v2557 = vsel %vm362, %v2511, 0.0
    %v2558 = vrot.slane %v2557, 4
    %v2559 = vadd.f32 %v2557, %v2558
    %v2560 = vrot.slane %v2559, 2
    %v2561 = vadd.f32 %v2559, %v2560
    %v2562 = vrot.slane %v2561, 1
    %v2563 = vadd.f32 %v2561, %v2562
    %v2564 = vsel %vm362, %v2512, 0.0
    %v2565 = vrot.slane %v2564, 4
    %v2566 = vadd.f32 %v2564, %v2565
    %v2567 = vrot.slane %v2566, 2
    %v2568 = vadd.f32 %v2566, %v2567
    %v2569 = vrot.slane %v2568, 1
    %v2570 = vadd.f32 %v2568, %v2569
    %v2571 = vsel %vm362, %v2513, 0.0
    %v2572 = vrot.slane %v2571, 4
    %v2573 = vadd.f32 %v2571, %v2572
    %v2574 = vrot.slane %v2573, 2
    %v2575 = vadd.f32 %v2573, %v2574
    %v2576 = vrot.slane %v2575, 1
    %v2577 = vadd.f32 %v2575, %v2576
    %v2578 = vsel %vm362, %v2514, 0.0
    %v2579 = vrot.slane %v2578, 4
    %v2580 = vadd.f32 %v2578, %v2579
    %v2581 = vrot.slane %v2580, 2
    %v2582 = vadd.f32 %v2580, %v2581
    %v2583 = vrot.slane %v2582, 1
    %v2584 = vadd.f32 %v2582, %v2583
    %v2585 = vsel %vm362, %v2515, 0.0
    %v2586 = vrot.slane %v2585, 4
    %v2587 = vadd.f32 %v2585, %v2586
    %v2588 = vrot.slane %v2587, 2
    %v2589 = vadd.f32 %v2587, %v2588
    %v2590 = vrot.slane %v2589, 1
    %v2591 = vadd.f32 %v2589, %v2590
    %v2592 = vsel %vm362, %v2516, 0.0
    %v2593 = vrot.slane %v2592, 4
    %v2594 = vadd.f32 %v2592, %v2593
    %v2595 = vrot.slane %v2594, 2
    %v2596 = vadd.f32 %v2594, %v2595
    %v2597 = vrot.slane %v2596, 1
    %v2598 = vadd.f32 %v2596, %v2597
    %v2599 = vsel %vm362, %v2517, 0.0
    %v2600 = vrot.slane %v2599, 4
    %v2601 = vadd.f32 %v2599, %v2600
    %v2602 = vrot.slane %v2601, 2
    %v2603 = vadd.f32 %v2601, %v2602
    %v2604 = vrot.slane %v2603, 1
    %v2605 = vadd.f32 %v2603, %v2604
    %v2606 = vsel %vm362, %v2518, 0.0
    %v2607 = vrot.slane %v2606, 4
    %v2608 = vadd.f32 %v2606, %v2607
    %v2609 = vrot.slane %v2608, 2
    %v2610 = vadd.f32 %v2608, %v2609
    %v2611 = vrot.slane %v2610, 1
    %v2612 = vadd.f32 %v2610, %v2611
    %v2613 = vsel %vm362, %v2519, 0.0
    %v2614 = vrot.slane %v2613, 4
    %v2615 = vadd.f32 %v2613, %v2614
    %v2616 = vrot.slane %v2615, 2
    %v2617 = vadd.f32 %v2615, %v2616
    %v2618 = vrot.slane %v2617, 1
    %v2619 = vadd.f32 %v2617, %v2618
    %v2620 = vsel %vm362, %v2520, 0.0
    %v2621 = vrot.slane %v2620, 4
    %v2622 = vadd.f32 %v2620, %v2621
    %v2623 = vrot.slane %v2622, 2
    %v2624 = vadd.f32 %v2622, %v2623
    %v2625 = vrot.slane %v2624, 1
    %v2626 = vadd.f32 %v2624, %v2625
    %v2627 = vsel %vm362, %v2521, 0.0
    %v2628 = vrot.slane %v2627, 4
    %v2629 = vadd.f32 %v2627, %v2628
    %v2630 = vrot.slane %v2629, 2
    %v2631 = vadd.f32 %v2629, %v2630
    %v2632 = vrot.slane %v2631, 1
    %v2633 = vadd.f32 %v2631, %v2632
    %2650 = vrot.lane.b32.xlu0 %v2049, 112
    %v2651 = vpop.permute.xlu0 %2650
    %2652 = vrot.lane.b32.xlu0 %v2050, 112
    %v2653 = vpop.permute.xlu0 %2652
    %2654 = vrot.lane.b32.xlu0 %v2051, 112
    %v2655 = vpop.permute.xlu0 %2654
    %2656 = vrot.lane.b32.xlu0 %v2052, 112
    %v2657 = vpop.permute.xlu0 %2656
    %2658 = vrot.lane.b32.xlu0 %v2053, 112
    %v2659 = vpop.permute.xlu0 %2658
    %2660 = vrot.lane.b32.xlu0 %v2054, 112
    %v2661 = vpop.permute.xlu0 %2660
    %2662 = vrot.lane.b32.xlu0 %v2055, 112
    %v2663 = vpop.permute.xlu0 %2662
    %2664 = vrot.lane.b32.xlu0 %v2056, 112
    %v2665 = vpop.permute.xlu0 %2664
    %2666 = vrot.lane.b32.xlu0 %v2057, 112
    %v2667 = vpop.permute.xlu0 %2666
    %2668 = vrot.lane.b32.xlu0 %v2058, 112
    %v2669 = vpop.permute.xlu0 %2668
    %2670 = vrot.lane.b32.xlu0 %v2059, 112
    %v2671 = vpop.permute.xlu0 %2670
    %2672 = vrot.lane.b32.xlu0 %v2060, 112
    %v2673 = vpop.permute.xlu0 %2672
    %2674 = vrot.lane.b32.xlu0 %v2061, 112
    %v2675 = vpop.permute.xlu0 %2674
    %2676 = vrot.lane.b32.xlu0 %v2062, 112
    %v2677 = vpop.permute.xlu0 %2676
    %2678 = vrot.lane.b32.xlu0 %v2063, 112
    %v2679 = vpop.permute.xlu0 %2678
    %2680 = vrot.lane.b32.xlu0 %v2064, 112
    %v2681 = vpop.permute.xlu0 %2680
    %v2698 = vsel %vm362, %v2651, 0.0
    %2699 = vadd.xlane.f32.xlu0 %v2698
    %v2700 = vpop.xlane.xlu0 %2699
    %v2701 = vsel %vm362, %v2653, 0.0
    %2702 = vadd.xlane.f32.xlu0 %v2701
    %v2703 = vpop.xlane.xlu0 %2702
    %v2704 = vsel %vm362, %v2655, 0.0
    %2705 = vadd.xlane.f32.xlu0 %v2704
    %v2706 = vpop.xlane.xlu0 %2705
    %v2707 = vsel %vm362, %v2657, 0.0
    %2708 = vadd.xlane.f32.xlu0 %v2707
    %v2709 = vpop.xlane.xlu0 %2708
    %v2710 = vsel %vm362, %v2659, 0.0
    %2711 = vadd.xlane.f32.xlu0 %v2710
    %v2712 = vpop.xlane.xlu0 %2711
    %v2713 = vsel %vm362, %v2661, 0.0
    %2714 = vadd.xlane.f32.xlu0 %v2713
    %v2715 = vpop.xlane.xlu0 %2714
    %v2716 = vsel %vm362, %v2663, 0.0
    %2717 = vadd.xlane.f32.xlu0 %v2716
    %v2718 = vpop.xlane.xlu0 %2717
    %v2719 = vsel %vm362, %v2665, 0.0
    %2720 = vadd.xlane.f32.xlu0 %v2719
    %v2721 = vpop.xlane.xlu0 %2720
    %v2722 = vsel %vm362, %v2667, 0.0
    %2723 = vadd.xlane.f32.xlu0 %v2722
    %v2724 = vpop.xlane.xlu0 %2723
    %v2725 = vsel %vm362, %v2669, 0.0
    %2726 = vadd.xlane.f32.xlu0 %v2725
    %v2727 = vpop.xlane.xlu0 %2726
    %v2728 = vsel %vm362, %v2671, 0.0
    %2729 = vadd.xlane.f32.xlu0 %v2728
    %v2730 = vpop.xlane.xlu0 %2729
    %v2731 = vsel %vm362, %v2673, 0.0
    %2732 = vadd.xlane.f32.xlu0 %v2731
    %v2733 = vpop.xlane.xlu0 %2732
    %v2734 = vsel %vm362, %v2675, 0.0
    %2735 = vadd.xlane.f32.xlu0 %v2734
    %v2736 = vpop.xlane.xlu0 %2735
    %v2737 = vsel %vm362, %v2677, 0.0
    %2738 = vadd.xlane.f32.xlu0 %v2737
    %v2739 = vpop.xlane.xlu0 %2738
    %v2740 = vsel %vm362, %v2679, 0.0
    %2741 = vadd.xlane.f32.xlu0 %v2740
    %v2742 = vpop.xlane.xlu0 %2741
    %v2743 = vsel %vm362, %v2681, 0.0
    %2744 = vadd.xlane.f32.xlu0 %v2743
    %v2745 = vpop.xlane.xlu0 %2744
    %v2762 = vperm.slane %v2700, %v2130
    %v2763 = vperm.slane %v2703, %v2130
    %v2764 = vperm.slane %v2706, %v2130
    %v2765 = vperm.slane %v2709, %v2130
    %v2766 = vperm.slane %v2712, %v2130
    %v2767 = vperm.slane %v2715, %v2130
    %v2768 = vperm.slane %v2718, %v2130
    %v2769 = vperm.slane %v2721, %v2130
    %v2770 = vperm.slane %v2724, %v2130
    %v2771 = vperm.slane %v2727, %v2130
    %v2772 = vperm.slane %v2730, %v2130
    %v2773 = vperm.slane %v2733, %v2130
    %v2774 = vperm.slane %v2736, %v2130
    %v2775 = vperm.slane %v2739, %v2130
    %v2776 = vperm.slane %v2742, %v2130
    %v2777 = vperm.slane %v2745, %v2130
    %v2778 = vsel %vm1158, %v2763, %v2762
    %v2779 = vsel %vm1161, %v2764, %v2778
    %v2780 = vsel %vm1164, %v2765, %v2779
    %v2781 = vsel %vm2150, %v2766, %v2780
    %v2782 = vsel %vm2152, %v2767, %v2781
    %v2783 = vsel %vm2154, %v2768, %v2782
    %v2784 = vsel %vm2156, %v2769, %v2783
    %v2785 = vsel %vm1158, %v2771, %v2770
    %v2786 = vsel %vm1161, %v2772, %v2785
    %v2787 = vsel %vm1164, %v2773, %v2786
    %v2788 = vsel %vm2150, %v2774, %v2787
    %v2789 = vsel %vm2152, %v2775, %v2788
    %v2790 = vsel %vm2154, %v2776, %v2789
    %v2791 = vsel %vm2156, %v2777, %v2790
    %v2794 = vsel %vm2167, %v2784, -inf
    %2795 = vmax.xlane.f32.xlu0 %v2794
    %v2796 = vpop.xlane.xlu0 %2795
    %v2797 = vsel %vm2167, %v2791, -inf
    %2798 = vmax.xlane.f32.xlu0 %v2797
    %v2799 = vpop.xlane.xlu0 %2798
    %v2802 = vperm.slane %v2796, 0
    %v2803 = vperm.slane %v2796, 1
    %v2804 = vperm.slane %v2796, 2
    %v2805 = vperm.slane %v2796, 3
    %v2806 = vperm.slane %v2796, 4
    %v2807 = vperm.slane %v2796, 5
    %v2808 = vperm.slane %v2796, 6
    %v2809 = vperm.slane %v2796, 7
    %v2810 = vperm.slane %v2799, 0
    %v2811 = vperm.slane %v2799, 1
    %v2812 = vperm.slane %v2799, 2
    %v2813 = vperm.slane %v2799, 3
    %v2814 = vperm.slane %v2799, 4
    %v2815 = vperm.slane %v2799, 5
    %v2816 = vperm.slane %v2799, 6
    %v2817 = vperm.slane %v2799, 7
    %v2834 = vsub.f32 %v2700, %v2802
    %v2835 = vsub.f32 %v2703, %v2803
    %v2836 = vsub.f32 %v2706, %v2804
    %v2837 = vsub.f32 %v2709, %v2805
    %v2838 = vsub.f32 %v2712, %v2806
    %v2839 = vsub.f32 %v2715, %v2807
    %v2840 = vsub.f32 %v2718, %v2808
    %v2841 = vsub.f32 %v2721, %v2809
    %v2842 = vsub.f32 %v2724, %v2810
    %v2843 = vsub.f32 %v2727, %v2811
    %v2844 = vsub.f32 %v2730, %v2812
    %v2845 = vsub.f32 %v2733, %v2813
    %v2846 = vsub.f32 %v2736, %v2814
    %v2847 = vsub.f32 %v2739, %v2815
    %v2848 = vsub.f32 %v2742, %v2816
    %v2849 = vsub.f32 %v2745, %v2817
    %v2850 = vmul.f32 %v2834, 1.442695
    %v2851 = vpow.pop %v2850
    %v2852 = vmul.f32 %v2835, 1.442695
    %v2853 = vpow.pop %v2852
    %v2854 = vmul.f32 %v2836, 1.442695
    %v2855 = vpow.pop %v2854
    %v2856 = vmul.f32 %v2837, 1.442695
    %v2857 = vpow.pop %v2856
    %v2858 = vmul.f32 %v2838, 1.442695
    %v2859 = vpow.pop %v2858
    %v2860 = vmul.f32 %v2839, 1.442695
    %v2861 = vpow.pop %v2860
    %v2862 = vmul.f32 %v2840, 1.442695
    %v2863 = vpow.pop %v2862
    %v2864 = vmul.f32 %v2841, 1.442695
    %v2865 = vpow.pop %v2864
    %v2866 = vmul.f32 %v2842, 1.442695
    %v2867 = vpow.pop %v2866
    %v2868 = vmul.f32 %v2843, 1.442695
    %v2869 = vpow.pop %v2868
    %v2870 = vmul.f32 %v2844, 1.442695
    %v2871 = vpow.pop %v2870
    %v2872 = vmul.f32 %v2845, 1.442695
    %v2873 = vpow.pop %v2872
    %v2874 = vmul.f32 %v2846, 1.442695
    %v2875 = vpow.pop %v2874
    %v2876 = vmul.f32 %v2847, 1.442695
    %v2877 = vpow.pop %v2876
    %v2878 = vmul.f32 %v2848, 1.442695
    %v2879 = vpow.pop %v2878
    %v2880 = vmul.f32 %v2849, 1.442695
    %v2881 = vpow.pop %v2880
    %2898 = vset.pattern.permute.xlu0 0
    %2899 = vperm.xlu0 %2898, %v2851
    %v2900 = vpop.permute.xlu0 %2899
    %2901 = vset.pattern.permute.xlu0 0
    %2902 = vperm.xlu0 %2901, %v2853
    %v2903 = vpop.permute.xlu0 %2902
    %2904 = vset.pattern.permute.xlu0 0
    %2905 = vperm.xlu0 %2904, %v2855
    %v2906 = vpop.permute.xlu0 %2905
    %2907 = vset.pattern.permute.xlu0 0
    %2908 = vperm.xlu0 %2907, %v2857
    %v2909 = vpop.permute.xlu0 %2908
    %2910 = vset.pattern.permute.xlu0 0
    %2911 = vperm.xlu0 %2910, %v2859
    %v2912 = vpop.permute.xlu0 %2911
    %2913 = vset.pattern.permute.xlu0 0
    %2914 = vperm.xlu0 %2913, %v2861
    %v2915 = vpop.permute.xlu0 %2914
    %2916 = vset.pattern.permute.xlu0 0
    %2917 = vperm.xlu0 %2916, %v2863
    %v2918 = vpop.permute.xlu0 %2917
    %2919 = vset.pattern.permute.xlu0 0
    %2920 = vperm.xlu0 %2919, %v2865
    %v2921 = vpop.permute.xlu0 %2920
    %2922 = vset.pattern.permute.xlu0 0
    %2923 = vperm.xlu0 %2922, %v2867
    %v2924 = vpop.permute.xlu0 %2923
    %2925 = vset.pattern.permute.xlu0 0
    %2926 = vperm.xlu0 %2925, %v2869
    %v2927 = vpop.permute.xlu0 %2926
    %2928 = vset.pattern.permute.xlu0 0
    %2929 = vperm.xlu0 %2928, %v2871
    %v2930 = vpop.permute.xlu0 %2929
    %2931 = vset.pattern.permute.xlu0 0
    %2932 = vperm.xlu0 %2931, %v2873
    %v2933 = vpop.permute.xlu0 %2932
    %2934 = vset.pattern.permute.xlu0 0
    %2935 = vperm.xlu0 %2934, %v2875
    %v2936 = vpop.permute.xlu0 %2935
    %2937 = vset.pattern.permute.xlu0 0
    %2938 = vperm.xlu0 %2937, %v2877
    %v2939 = vpop.permute.xlu0 %2938
    %2940 = vset.pattern.permute.xlu0 0
    %2941 = vperm.xlu0 %2940, %v2879
    %v2942 = vpop.permute.xlu0 %2941
    %2943 = vset.pattern.permute.xlu0 0
    %2944 = vperm.xlu0 %2943, %v2881
    %v2945 = vpop.permute.xlu0 %2944
    %v2946 = vperm.slane %v2900, %v2130
    %v2947 = vperm.slane %v2903, %v2130
    %v2948 = vperm.slane %v2906, %v2130
    %v2949 = vperm.slane %v2909, %v2130
    %v2950 = vperm.slane %v2912, %v2130
    %v2951 = vperm.slane %v2915, %v2130
    %v2952 = vperm.slane %v2918, %v2130
    %v2953 = vperm.slane %v2921, %v2130
    %v2954 = vperm.slane %v2924, %v2130
    %v2955 = vperm.slane %v2927, %v2130
    %v2956 = vperm.slane %v2930, %v2130
    %v2957 = vperm.slane %v2933, %v2130
    %v2958 = vperm.slane %v2936, %v2130
    %v2959 = vperm.slane %v2939, %v2130
    %v2960 = vperm.slane %v2942, %v2130
    %v2961 = vperm.slane %v2945, %v2130
    %v2962 = vsel %vm1158, %v2947, %v2946
    %v2963 = vsel %vm1161, %v2948, %v2962
    %v2964 = vsel %vm1164, %v2949, %v2963
    %v2965 = vsel %vm2150, %v2950, %v2964
    %v2966 = vsel %vm2152, %v2951, %v2965
    %v2967 = vsel %vm2154, %v2952, %v2966
    %v2968 = vsel %vm2156, %v2953, %v2967
    %v2969 = vsel %vm1158, %v2955, %v2954
    %v2970 = vsel %vm1161, %v2956, %v2969
    %v2971 = vsel %vm1164, %v2957, %v2970
    %v2972 = vsel %vm2150, %v2958, %v2971
    %v2973 = vsel %vm2152, %v2959, %v2972
    %v2974 = vsel %vm2154, %v2960, %v2973
    %v2975 = vsel %vm2156, %v2961, %v2974
    %v2978 = vsel %vm2167, %v2968, 0.0
    %2979 = vadd.xlane.f32.xlu0 %v2978
    %v2980 = vpop.xlane.xlu0 %2979
    %v2981 = vsel %vm2167, %v2975, 0.0
    %2982 = vadd.xlane.f32.xlu0 %v2981
    %v2983 = vpop.xlane.xlu0 %2982
    %v2984 = vrcp.pop %v2980
    %v2985 = vrcp.pop %v2983
    %v2988 = vperm.slane %v2984, 0
    %v2989 = vperm.slane %v2984, 1
    %v2990 = vperm.slane %v2984, 2
    %v2991 = vperm.slane %v2984, 3
    %v2992 = vperm.slane %v2984, 4
    %v2993 = vperm.slane %v2984, 5
    %v2994 = vperm.slane %v2984, 6
    %v2995 = vperm.slane %v2984, 7
    %v2996 = vperm.slane %v2985, 0
    %v2997 = vperm.slane %v2985, 1
    %v2998 = vperm.slane %v2985, 2
    %v2999 = vperm.slane %v2985, 3
    %v3000 = vperm.slane %v2985, 4
    %v3001 = vperm.slane %v2985, 5
    %v3002 = vperm.slane %v2985, 6
    %v3003 = vperm.slane %v2985, 7
    %v3020 = vmul.f32 %v2851, %v2988
    %v3021 = vmul.f32 %v2853, %v2989
    %v3022 = vmul.f32 %v2855, %v2990
    %v3023 = vmul.f32 %v2857, %v2991
    %v3024 = vmul.f32 %v2859, %v2992
    %v3025 = vmul.f32 %v2861, %v2993
    %v3026 = vmul.f32 %v2863, %v2994
    %v3027 = vmul.f32 %v2865, %v2995
    %v3028 = vmul.f32 %v2867, %v2996
    %v3029 = vmul.f32 %v2869, %v2997
    %v3030 = vmul.f32 %v2871, %v2998
    %v3031 = vmul.f32 %v2873, %v2999
    %v3032 = vmul.f32 %v2875, %v3000
    %v3033 = vmul.f32 %v2877, %v3001
    %v3034 = vmul.f32 %v2879, %v3002
    %v3035 = vmul.f32 %v2881, %v3003
    %v3036 = vadd.f32 %v2410, %v3020
    %v3037 = vadd.f32 %v2411, %v3021
    %v3038 = vadd.f32 %v2412, %v3022
    %v3039 = vadd.f32 %v2413, %v3023
    %v3040 = vadd.f32 %v2414, %v3024
    %v3041 = vadd.f32 %v2415, %v3025
    %v3042 = vadd.f32 %v2416, %v3026
    %v3043 = vadd.f32 %v2417, %v3027
    %v3044 = vadd.f32 %v2418, %v3028
    %v3045 = vadd.f32 %v2419, %v3029
    %v3046 = vadd.f32 %v2420, %v3030
    %v3047 = vadd.f32 %v2421, %v3031
    %v3048 = vadd.f32 %v2422, %v3032
    %v3049 = vadd.f32 %v2423, %v3033
    %v3050 = vadd.f32 %v2424, %v3034
    %v3051 = vadd.f32 %v2425, %v3035
    %3053 = vset.pattern.permute.xlu0 0
    %3054 = vperm.xlu0 %3053, %v3020
    %v3055 = vpop.permute.xlu0 %3054
    %3058 = vset.pattern.permute.xlu0 0
    %3059 = vperm.xlu0 %3058, %v3021
    %v3060 = vpop.permute.xlu0 %3059
    %3063 = vset.pattern.permute.xlu0 0
    %3064 = vperm.xlu0 %3063, %v3022
    %v3065 = vpop.permute.xlu0 %3064
    %3068 = vset.pattern.permute.xlu0 0
    %3069 = vperm.xlu0 %3068, %v3023
    %v3070 = vpop.permute.xlu0 %3069
    %3073 = vset.pattern.permute.xlu0 0
    %3074 = vperm.xlu0 %3073, %v3024
    %v3075 = vpop.permute.xlu0 %3074
    %3078 = vset.pattern.permute.xlu0 0
    %3079 = vperm.xlu0 %3078, %v3025
    %v3080 = vpop.permute.xlu0 %3079
    %3083 = vset.pattern.permute.xlu0 0
    %3084 = vperm.xlu0 %3083, %v3026
    %v3085 = vpop.permute.xlu0 %3084
    %3088 = vset.pattern.permute.xlu0 0
    %3089 = vperm.xlu0 %3088, %v3027
    %v3090 = vpop.permute.xlu0 %3089
    %3093 = vset.pattern.permute.xlu0 0
    %3094 = vperm.xlu0 %3093, %v3028
    %v3095 = vpop.permute.xlu0 %3094
    %3098 = vset.pattern.permute.xlu0 0
    %3099 = vperm.xlu0 %3098, %v3029
    %v3100 = vpop.permute.xlu0 %3099
    %3103 = vset.pattern.permute.xlu0 0
    %3104 = vperm.xlu0 %3103, %v3030
    %v3105 = vpop.permute.xlu0 %3104
    %3108 = vset.pattern.permute.xlu0 0
    %3109 = vperm.xlu0 %3108, %v3031
    %v3110 = vpop.permute.xlu0 %3109
    %3113 = vset.pattern.permute.xlu0 0
    %3114 = vperm.xlu0 %3113, %v3032
    %v3115 = vpop.permute.xlu0 %3114
    %3118 = vset.pattern.permute.xlu0 0
    %3119 = vperm.xlu0 %3118, %v3033
    %v3120 = vpop.permute.xlu0 %3119
    %3123 = vset.pattern.permute.xlu0 0
    %3124 = vperm.xlu0 %3123, %v3034
    %v3125 = vpop.permute.xlu0 %3124
    %3128 = vset.pattern.permute.xlu0 0
    %3129 = vperm.xlu0 %3128, %v3035
    %v3130 = vpop.permute.xlu0 %3129
    %v3132 = vmul.f32 %v3055, %v1951
    %v3133 = vmul.f32 %v3060, %v1952
    %v3134 = vmul.f32 %v3065, %v1953
    %v3135 = vmul.f32 %v3070, %v1954
    %v3136 = vmul.f32 %v3075, %v1955
    %v3137 = vmul.f32 %v3080, %v1956
    %v3138 = vmul.f32 %v3085, %v1957
    %v3139 = vmul.f32 %v3090, %v1958
    %v3140 = vmul.f32 %v3095, %v1959
    %v3141 = vmul.f32 %v3100, %v1960
    %v3142 = vmul.f32 %v3105, %v1961
    %v3143 = vmul.f32 %v3110, %v1962
    %v3144 = vmul.f32 %v3115, %v1963
    %v3145 = vmul.f32 %v3120, %v1964
    %v3146 = vmul.f32 %v3125, %v1965
    %v3147 = vmul.f32 %v3130, %v1966
    %vm3148 = vcmask 261248
    %v3149 = vsel %vm3148, %v3132, 0.0
    %v3150 = vrot.slane %v3149, 4
    %v3151 = vadd.f32 %v3149, %v3150
    %v3152 = vrot.slane %v3151, 2
    %v3153 = vadd.f32 %v3151, %v3152
    %v3154 = vrot.slane %v3153, 1
    %v3155 = vadd.f32 %v3153, %v3154
    %v3156 = vsel %vm3148, %v3133, 0.0
    %v3157 = vrot.slane %v3156, 4
    %v3158 = vadd.f32 %v3156, %v3157
    %v3159 = vrot.slane %v3158, 2
    %v3160 = vadd.f32 %v3158, %v3159
    %v3161 = vrot.slane %v3160, 1
    %v3162 = vadd.f32 %v3160, %v3161
    %v3163 = vsel %vm3148, %v3134, 0.0
    %v3164 = vrot.slane %v3163, 4
    %v3165 = vadd.f32 %v3163, %v3164
    %v3166 = vrot.slane %v3165, 2
    %v3167 = vadd.f32 %v3165, %v3166
    %v3168 = vrot.slane %v3167, 1
    %v3169 = vadd.f32 %v3167, %v3168
    %v3170 = vsel %vm3148, %v3135, 0.0
    %v3171 = vrot.slane %v3170, 4
    %v3172 = vadd.f32 %v3170, %v3171
    %v3173 = vrot.slane %v3172, 2
    %v3174 = vadd.f32 %v3172, %v3173
    %v3175 = vrot.slane %v3174, 1
    %v3176 = vadd.f32 %v3174, %v3175
    %v3177 = vsel %vm3148, %v3136, 0.0
    %v3178 = vrot.slane %v3177, 4
    %v3179 = vadd.f32 %v3177, %v3178
    %v3180 = vrot.slane %v3179, 2
    %v3181 = vadd.f32 %v3179, %v3180
    %v3182 = vrot.slane %v3181, 1
    %v3183 = vadd.f32 %v3181, %v3182
    %v3184 = vsel %vm3148, %v3137, 0.0
    %v3185 = vrot.slane %v3184, 4
    %v3186 = vadd.f32 %v3184, %v3185
    %v3187 = vrot.slane %v3186, 2
    %v3188 = vadd.f32 %v3186, %v3187
    %v3189 = vrot.slane %v3188, 1
    %v3190 = vadd.f32 %v3188, %v3189
    %v3191 = vsel %vm3148, %v3138, 0.0
    %v3192 = vrot.slane %v3191, 4
    %v3193 = vadd.f32 %v3191, %v3192
    %v3194 = vrot.slane %v3193, 2
    %v3195 = vadd.f32 %v3193, %v3194
    %v3196 = vrot.slane %v3195, 1
    %v3197 = vadd.f32 %v3195, %v3196
    %v3198 = vsel %vm3148, %v3139, 0.0
    %v3199 = vrot.slane %v3198, 4
    %v3200 = vadd.f32 %v3198, %v3199
    %v3201 = vrot.slane %v3200, 2
    %v3202 = vadd.f32 %v3200, %v3201
    %v3203 = vrot.slane %v3202, 1
    %v3204 = vadd.f32 %v3202, %v3203
    %v3205 = vsel %vm3148, %v3140, 0.0
    %v3206 = vrot.slane %v3205, 4
    %v3207 = vadd.f32 %v3205, %v3206
    %v3208 = vrot.slane %v3207, 2
    %v3209 = vadd.f32 %v3207, %v3208
    %v3210 = vrot.slane %v3209, 1
    %v3211 = vadd.f32 %v3209, %v3210
    %v3212 = vsel %vm3148, %v3141, 0.0
    %v3213 = vrot.slane %v3212, 4
    %v3214 = vadd.f32 %v3212, %v3213
    %v3215 = vrot.slane %v3214, 2
    %v3216 = vadd.f32 %v3214, %v3215
    %v3217 = vrot.slane %v3216, 1
    %v3218 = vadd.f32 %v3216, %v3217
    %v3219 = vsel %vm3148, %v3142, 0.0
    %v3220 = vrot.slane %v3219, 4
    %v3221 = vadd.f32 %v3219, %v3220
    %v3222 = vrot.slane %v3221, 2
    %v3223 = vadd.f32 %v3221, %v3222
    %v3224 = vrot.slane %v3223, 1
    %v3225 = vadd.f32 %v3223, %v3224
    %v3226 = vsel %vm3148, %v3143, 0.0
    %v3227 = vrot.slane %v3226, 4
    %v3228 = vadd.f32 %v3226, %v3227
    %v3229 = vrot.slane %v3228, 2
    %v3230 = vadd.f32 %v3228, %v3229
    %v3231 = vrot.slane %v3230, 1
    %v3232 = vadd.f32 %v3230, %v3231
    %v3233 = vsel %vm3148, %v3144, 0.0
    %v3234 = vrot.slane %v3233, 4
    %v3235 = vadd.f32 %v3233, %v3234
    %v3236 = vrot.slane %v3235, 2
    %v3237 = vadd.f32 %v3235, %v3236
    %v3238 = vrot.slane %v3237, 1
    %v3239 = vadd.f32 %v3237, %v3238
    %v3240 = vsel %vm3148, %v3145, 0.0
    %v3241 = vrot.slane %v3240, 4
    %v3242 = vadd.f32 %v3240, %v3241
    %v3243 = vrot.slane %v3242, 2
    %v3244 = vadd.f32 %v3242, %v3243
    %v3245 = vrot.slane %v3244, 1
    %v3246 = vadd.f32 %v3244, %v3245
    %v3247 = vsel %vm3148, %v3146, 0.0
    %v3248 = vrot.slane %v3247, 4
    %v3249 = vadd.f32 %v3247, %v3248
    %v3250 = vrot.slane %v3249, 2
    %v3251 = vadd.f32 %v3249, %v3250
    %v3252 = vrot.slane %v3251, 1
    %v3253 = vadd.f32 %v3251, %v3252
    %v3254 = vsel %vm3148, %v3147, 0.0
    %v3255 = vrot.slane %v3254, 4
    %v3256 = vadd.f32 %v3254, %v3255
    %v3257 = vrot.slane %v3256, 2
    %v3258 = vadd.f32 %v3256, %v3257
    %v3259 = vrot.slane %v3258, 1
    %v3260 = vadd.f32 %v3258, %v3259
    %v3277 = vsel %vm1158, %v2535, %v2528
    %v3278 = vsel %vm1161, %v2542, %v3277
    %v3279 = vsel %vm1164, %v2549, %v3278
    %v3280 = vsel %vm2150, %v2556, %v3279
    %v3281 = vsel %vm2152, %v2563, %v3280
    %v3282 = vsel %vm2154, %v2570, %v3281
    %v3283 = vsel %vm2156, %v2577, %v3282
    %v3284 = vsel %vm1158, %v2591, %v2584
    %v3285 = vsel %vm1161, %v2598, %v3284
    %v3286 = vsel %vm1164, %v2605, %v3285
    %v3287 = vsel %vm2150, %v2612, %v3286
    %v3288 = vsel %vm2152, %v2619, %v3287
    %v3289 = vsel %vm2154, %v2626, %v3288
    %v3290 = vsel %vm2156, %v2633, %v3289
    %v3309 = vsel %vm1158, %v3162, %v3155
    %v3310 = vsel %vm1161, %v3169, %v3309
    %v3311 = vsel %vm1164, %v3176, %v3310
    %v3312 = vsel %vm2150, %v3183, %v3311
    %v3313 = vsel %vm2152, %v3190, %v3312
    %v3314 = vsel %vm2154, %v3197, %v3313
    %v3315 = vsel %vm2156, %v3204, %v3314
    %v3316 = vsel %vm1158, %v3218, %v3211
    %v3317 = vsel %vm1161, %v3225, %v3316
    %v3318 = vsel %vm1164, %v3232, %v3317
    %v3319 = vsel %vm2150, %v3239, %v3318
    %v3320 = vsel %vm2152, %v3246, %v3319
    %v3321 = vsel %vm2154, %v3253, %v3320
    %v3322 = vsel %vm2156, %v3260, %v3321
    %v3325 = vsel %vm362, %v3283, %v3315
    %v3326 = vsel %vm362, %v3290, %v3322
    %s3327 = scalar_lea.vmem [#allocation11], 48
    %v3328 = vld [vmem:[%s3327] sm:$0xf]
    %v3329 = vld [vmem:[%s3327 + $0x4] sm:$0xf]
    %v3330 = vld [vmem:[%s3327 + $0x8] sm:$0xf]
    %v3331 = vld [vmem:[%s3327 + $0xc] sm:$0xf]
    %v3332 = vpack.c.bf16 %v3326, %v3325
    %v3333 = vld [vmem:[%s9] sm:$0x1]
    %v3335 = vperm.slane %v3333, 0
    %v3341 = vunpack.c.l.b16 %v3328
    %v3342 = vunpack.c.l.b16 %v3329
    %v3343 = vunpack.c.l.b16 %v3330
    %v3344 = vunpack.c.l.b16 %v3331
    %v3345 = vpack.c.b16 %v3342, %v3341
    %v3346 = vpack.c.b16 %v3344, %v3343
    %v3350 = vsel %vm252, %v3332, 0
    %3352 = vmatpush.bf16.msra.mxu0 0
    %3353 = vmatpush.bf16.msra.mxu0 0
    %3354 = vmatpush.bf16.msra.mxu0 0
    %3355 = vmatpush.bf16.msra.mxu0 0
    %3356 = vmatpush.bf16.msra.mxu0 0
    %3357 = vmatpush.bf16.msra.mxu0 0
    %3358 = vmatpush.bf16.msra.mxu0 %v3346
    %3359 = vmatpush.bf16.msra.mxu0 %v3345
    %3360 = vmatmul.bf16.gmra.mxu0 %v3350
    %v3361 = vpop.f32.mrf.mxu0
    %v3362 = vadd.f32 %v3335, %v3361
    %v3363 = vpop.f32.mrf.mxu0
    %v3364 = vadd.f32 %v3335, %v3363
    %3365 = vdwg.mxu0
    %v3366 = vmul.f32 %v3036, 0.5
    %v3367 = vmul.f32 %v3037, 0.5
    %v3368 = vmul.f32 %v3038, 0.5
    %v3369 = vmul.f32 %v3039, 0.5
    %v3370 = vmul.f32 %v3040, 0.5
    %v3371 = vmul.f32 %v3041, 0.5
    %v3372 = vmul.f32 %v3042, 0.5
    %v3373 = vmul.f32 %v3043, 0.5
    %v3374 = vmul.f32 %v3044, 0.5
    %v3375 = vmul.f32 %v3045, 0.5
    %v3376 = vmul.f32 %v3046, 0.5
    %v3377 = vmul.f32 %v3047, 0.5
    %v3378 = vmul.f32 %v3048, 0.5
    %v3379 = vmul.f32 %v3049, 0.5
    %v3380 = vmul.f32 %v3050, 0.5
    %v3381 = vmul.f32 %v3051, 0.5
    %3398 = vset.pattern.permute.xlu0 0
    %3399 = vperm.xlu0 %3398, %v3366
    %v3400 = vpop.permute.xlu0 %3399
    %3401 = vset.pattern.permute.xlu0 0
    %3402 = vperm.xlu0 %3401, %v3367
    %v3403 = vpop.permute.xlu0 %3402
    %3404 = vset.pattern.permute.xlu0 0
    %3405 = vperm.xlu0 %3404, %v3368
    %v3406 = vpop.permute.xlu0 %3405
    %3407 = vset.pattern.permute.xlu0 0
    %3408 = vperm.xlu0 %3407, %v3369
    %v3409 = vpop.permute.xlu0 %3408
    %3410 = vset.pattern.permute.xlu0 0
    %3411 = vperm.xlu0 %3410, %v3370
    %v3412 = vpop.permute.xlu0 %3411
    %3413 = vset.pattern.permute.xlu0 0
    %3414 = vperm.xlu0 %3413, %v3371
    %v3415 = vpop.permute.xlu0 %3414
    %3416 = vset.pattern.permute.xlu0 0
    %3417 = vperm.xlu0 %3416, %v3372
    %v3418 = vpop.permute.xlu0 %3417
    %3419 = vset.pattern.permute.xlu0 0
    %3420 = vperm.xlu0 %3419, %v3373
    %v3421 = vpop.permute.xlu0 %3420
    %3422 = vset.pattern.permute.xlu0 0
    %3423 = vperm.xlu0 %3422, %v3374
    %v3424 = vpop.permute.xlu0 %3423
    %3425 = vset.pattern.permute.xlu0 0
    %3426 = vperm.xlu0 %3425, %v3375
    %v3427 = vpop.permute.xlu0 %3426
    %3428 = vset.pattern.permute.xlu0 0
    %3429 = vperm.xlu0 %3428, %v3376
    %v3430 = vpop.permute.xlu0 %3429
    %3431 = vset.pattern.permute.xlu0 0
    %3432 = vperm.xlu0 %3431, %v3377
    %v3433 = vpop.permute.xlu0 %3432
    %3434 = vset.pattern.permute.xlu0 0
    %3435 = vperm.xlu0 %3434, %v3378
    %v3436 = vpop.permute.xlu0 %3435
    %3437 = vset.pattern.permute.xlu0 0
    %3438 = vperm.xlu0 %3437, %v3379
    %v3439 = vpop.permute.xlu0 %3438
    %3440 = vset.pattern.permute.xlu0 0
    %3441 = vperm.xlu0 %3440, %v3380
    %v3442 = vpop.permute.xlu0 %3441
    %3443 = vset.pattern.permute.xlu0 0
    %3444 = vperm.xlu0 %3443, %v3381
    %v3445 = vpop.permute.xlu0 %3444
    %v3446 = vperm.slane %v3400, %v2130
    %v3447 = vperm.slane %v3403, %v2130
    %v3448 = vperm.slane %v3406, %v2130
    %v3449 = vperm.slane %v3409, %v2130
    %v3450 = vperm.slane %v3412, %v2130
    %v3451 = vperm.slane %v3415, %v2130
    %v3452 = vperm.slane %v3418, %v2130
    %v3453 = vperm.slane %v3421, %v2130
    %v3454 = vperm.slane %v3424, %v2130
    %v3455 = vperm.slane %v3427, %v2130
    %v3456 = vperm.slane %v3430, %v2130
    %v3457 = vperm.slane %v3433, %v2130
    %v3458 = vperm.slane %v3436, %v2130
    %v3459 = vperm.slane %v3439, %v2130
    %v3460 = vperm.slane %v3442, %v2130
    %v3461 = vperm.slane %v3445, %v2130
    %v3462 = vsel %vm1158, %v3447, %v3446
    %v3463 = vsel %vm1161, %v3448, %v3462
    %v3464 = vsel %vm1164, %v3449, %v3463
    %v3465 = vsel %vm2150, %v3450, %v3464
    %v3466 = vsel %vm2152, %v3451, %v3465
    %v3467 = vsel %vm2154, %v3452, %v3466
    %v3468 = vsel %vm2156, %v3453, %v3467
    %v3469 = vsel %vm1158, %v3455, %v3454
    %v3470 = vsel %vm1161, %v3456, %v3469
    %v3471 = vsel %vm1164, %v3457, %v3470
    %v3472 = vsel %vm2150, %v3458, %v3471
    %v3473 = vsel %vm2152, %v3459, %v3472
    %v3474 = vsel %vm2154, %v3460, %v3473
    %v3475 = vsel %vm2156, %v3461, %v3474
    %3478 = vst.msk [vmem:[%s23] sm:$0xff] %vm2167, %v3468
    %3479 = vst.msk [vmem:[%s23 + $0x8] sm:$0xff] %vm2167, %v3475
    %v3480 = vld [vmem:[%s18] sm:$0xf]
    %v3481 = vld [vmem:[%s18 + $0x4] sm:$0xf]
    %v3482 = vld [vmem:[%s18 + $0x8] sm:$0xf]
    %v3483 = vld [vmem:[%s18 + $0xc] sm:$0xf]
    %v3484 = vpack.c.bf16 %v1750, %v1748
    %v3485 = vld [vmem:[%s18 + $0x10] sm:$0xf]
    %v3486 = vld [vmem:[%s18 + $0x14] sm:$0xf]
    %v3487 = vld [vmem:[%s18 + $0x18] sm:$0xf]
    %v3488 = vld [vmem:[%s18 + $0x1c] sm:$0xf]
    %v3489 = vpack.c.bf16 %v3364, %v3362
    %v3494 = vunpack.c.l.b16 %v3485
    %v3495 = vunpack.c.l.b16 %v3486
    %v3496 = vunpack.c.l.b16 %v3487
    %v3497 = vunpack.c.l.b16 %v3488
    %v3498 = vpack.c.b16 %v3495, %v3494
    %v3499 = vpack.c.b16 %v3497, %v3496
    %v3503 = vsel %vm252, %v3489, 0
    %3505 = vmatpush.bf16.msra.mxu0 0
    %3506 = vmatpush.bf16.msra.mxu0 0
    %3507 = vmatpush.bf16.msra.mxu0 0
    %3508 = vmatpush.bf16.msra.mxu0 0
    %3509 = vmatpush.bf16.msra.mxu0 0
    %3510 = vmatpush.bf16.msra.mxu0 0
    %3511 = vmatpush.bf16.msra.mxu0 %v3499
    %3512 = vmatpush.bf16.msra.mxu0 %v3498
    %3513 = vmatmul.bf16.gmra.mxu0 %v3503
    %v3514 = vpop.f32.mrf.mxu0
    %v3515 = vadd.f32 0.0, %v3514
    %v3516 = vpop.f32.mrf.mxu0
    %v3517 = vadd.f32 0.0, %v3516
    %3518 = vdwg.mxu0
    %v3523 = vunpack.c.l.b16 %v3480
    %v3524 = vunpack.c.l.b16 %v3481
    %v3525 = vunpack.c.l.b16 %v3482
    %v3526 = vunpack.c.l.b16 %v3483
    %v3527 = vpack.c.b16 %v3524, %v3523
    %v3528 = vpack.c.b16 %v3526, %v3525
    %v3532 = vsel %vm252, %v3484, 0
    %3534 = vmatpush.bf16.msra.mxu0 0
    %3535 = vmatpush.bf16.msra.mxu0 0
    %3536 = vmatpush.bf16.msra.mxu0 0
    %3537 = vmatpush.bf16.msra.mxu0 0
    %3538 = vmatpush.bf16.msra.mxu0 0
    %3539 = vmatpush.bf16.msra.mxu0 0
    %3540 = vmatpush.bf16.msra.mxu0 %v3528
    %3541 = vmatpush.bf16.msra.mxu0 %v3527
    %3542 = vmatmul.bf16.gmra.mxu0 %v3532
    %v3543 = vpop.f32.mrf.mxu0
    %v3544 = vadd.f32 %v3515, %v3543
    %v3545 = vpop.f32.mrf.mxu0
    %v3546 = vadd.f32 %v3517, %v3545
    %3547 = vdwg.mxu0
    %v3548 = vld [vmem:[#allocation20] sm:$0x1]
    %v3550 = vperm.slane %v3548, 0
    %v3552 = vadd.f32 %v3544, %v3550
    %v3553 = vadd.f32 %v3546, %v3550
    %3554 = vst.msk [vmem:[#allocation21] sm:$0xff] %vm252, %v3552
    %3555 = vst.msk [vmem:[#allocation21 + $0x8] sm:$0xff] %vm252, %v3553
    // Predicated region
    $region126: #{temporal_hierarchical_attention_forward.1} parent=1 // pred_check
      _
    $region127: #{temporal_hierarchical_attention_forward.1} parent=1 // pred_check_branch
      %3557 = sbr.rel (0) target = $region129
    $region128: #{temporal_hierarchical_attention_forward.1} parent=1 // pred_region
      %3559 = vsyncadd [#allocation5], 0
      %s3560 = sshll.u32 [#allocation21], 4
      %s3561 = int_to_ptr.vmem [resolvable:$true] %s3560
      %s3562 = sshll.u32 %s20, 4
      %s3563 = int_to_ptr.hbm [resolvable:$true] %s3562
      %3568 = dma.vmem_to_hbm [thread:$0]  %s3561, 256, %s3563, [#allocation5], 128, 128, 8
    $region129: #{temporal_hierarchical_attention_forward.1} parent=1 // pred_fallthru
      _
    // Predicated region
    $region130: #{temporal_hierarchical_attention_forward.1} parent=1 // pred_check
      _
    $region131: #{temporal_hierarchical_attention_forward.1} parent=1 // pred_check_branch
      %3570 = sbr.rel (0) target = $region133
    $region132: #{temporal_hierarchical_attention_forward.1} parent=1 // pred_region
      _
    $region133: #{temporal_hierarchical_attention_forward.1} parent=1 // pred_fallthru
      _
    // Predicated region
    $region134: #{temporal_hierarchical_attention_forward.1} parent=1 // pred_check
      _
    $region135: #{temporal_hierarchical_attention_forward.1} parent=1 // pred_check_branch
      %3572 = sbr.rel (0) target = $region137
    $region136: #{temporal_hierarchical_attention_forward.1} parent=1 // pred_region
      %3574 = vsyncadd [#allocation23], 0
      %s3575 = sshll.u32 [#allocation22], 4
      %s3576 = int_to_ptr.vmem [resolvable:$true] %s3575
      %s3577 = sshll.u32 %s22, 4
      %s3578 = int_to_ptr.hbm [resolvable:$true] %s3577
      %3583 = dma.vmem_to_hbm [thread:$0]  %s3576, 64, %s3578, [#allocation23], 32, 32, 2
    $region137: #{temporal_hierarchical_attention_forward.1} parent=1 // pred_fallthru
      _
    // Predicated region
    $region138: #{temporal_hierarchical_attention_forward.1} parent=1 // pred_check
      _
    $region139: #{temporal_hierarchical_attention_forward.1} parent=1 // pred_check_branch
      %3585 = sbr.rel (0) target = $region141
    $region140: #{temporal_hierarchical_attention_forward.1} parent=1 // pred_region
      _
    $region141: #{temporal_hierarchical_attention_forward.1} parent=1 // pred_fallthru
      _
    // Predicated region
    $region142: #{temporal_hierarchical_attention_forward.1} parent=1 // pred_check
      _
    $region143: #{temporal_hierarchical_attention_forward.1} parent=1 // pred_check_branch
      %3587 = sbr.rel (0) target = $region145
    $region144: #{temporal_hierarchical_attention_forward.1} parent=1 // pred_region
      %3589 = dma.done [#allocation5], 256
    $region145: #{temporal_hierarchical_attention_forward.1} parent=1 // pred_fallthru
      _
    // Predicated region
    $region146: #{temporal_hierarchical_attention_forward.1} parent=1 // pred_check
      _
    $region147: #{temporal_hierarchical_attention_forward.1} parent=1 // pred_check_branch
      %3591 = sbr.rel (0) target = $region149
    $region148: #{temporal_hierarchical_attention_forward.1} parent=1 // pred_region
      _
    $region149: #{temporal_hierarchical_attention_forward.1} parent=1 // pred_fallthru
      _
    // Predicated region
    $region150: #{temporal_hierarchical_attention_forward.1} parent=1 // pred_check
      _
    $region151: #{temporal_hierarchical_attention_forward.1} parent=1 // pred_check_branch
      %3593 = sbr.rel (0) target = $region153
    $region152: #{temporal_hierarchical_attention_forward.1} parent=1 // pred_region
      %3595 = dma.done [#allocation23], 64
    $region153: #{temporal_hierarchical_attention_forward.1} parent=1 // pred_fallthru
      _
    // Predicated region
    $region154: #{temporal_hierarchical_attention_forward.1} parent=1 // pred_check
      _
    $region155: #{temporal_hierarchical_attention_forward.1} parent=1 // pred_check_branch
      %3597 = sbr.rel (0) target = $region157
    $region156: #{temporal_hierarchical_attention_forward.1} parent=1 // pred_region
      _
    $region157: #{temporal_hierarchical_attention_forward.1} parent=1 // pred_fallthru
      _
    %3598 = vsyncpa [#allocation4], 1
    %3599 = vsyncpa [#allocation7], 1
    %3600 = vsyncpa [#allocation10], 1
    %3601 = vsyncpa [#allocation13], 1
    %3602 = vsyncpa [#allocation16], 1
    %3603 = vsyncpa [#allocation19], 1
    %3604 = vsyncpa [#allocation5], 1
    %3605 = vsyncpa [#allocation23], 1

</llo_original>
